<compile_context>
chip_gen: v7x
topology: tpu7x:2x2x1
jax: 0.10.0
libtpu: 0.0.40
codegen_flags: <defaults>
</compile_context>

<pallas_src>
import jax
import jax.numpy as jnp
from jax.experimental import pallas as pl
from jax.experimental.pallas import tpu as pltpu

NEG_SLOPE = 0.01   # nn.LeakyReLU default
BN_EPS = 1e-5      # nn.BatchNorm2d default


# ----------------------------- Pallas kernels ------------------------------ #
def conv_stats_kernel(x_ref, w_ref, conv_ref, stats_ref):
    # x_ref:     [TOH, 6*(OW+1), C]  bf16; middle axis ordered (kh, col-parity, w//2)
    # w_ref:     [9, C, C_pad]       bf16 conv weight (kh*3+kw, ci, co); VMEM resident
    # conv_ref:  [TOH*OW, C_pad]     bf16 conv output tile
    # stats_ref: [1, 2, C_pad]       f32 (sum, sum_sq); resident accumulator across the
    #                                "arbitrary" axis, one slot per megacore split
    @pl.when(pl.program_id(1) == 0)
    def _init():
        stats_ref[...] = jnp.zeros_like(stats_ref)

    toh = x_ref.shape[0]
    owp1 = x_ref.shape[1] // 6
    ow = owp1 - 1
    c_in = x_ref.shape[2]
    tm = toh * ow

    x = x_ref[...]
    acc = jnp.zeros((tm, conv_ref.shape[1]), jnp.float32)
    # in-VMEM im2col: 9 shifted *contiguous* slices, one small MXU matmul each
    for kh in range(3):
        for kw in range(3):
            par, off = kw % 2, kw // 2
            base = (kh * 2 + par) * owp1 + off
            tap = x[:, base:base + ow, :].reshape(tm, c_in)
            acc = acc + jnp.dot(tap, w_ref[kh * 3 + kw],
                                preferred_element_type=jnp.float32)

    conv_ref[...] = acc.astype(conv_ref.dtype)        # bf16 intermediate
    # one-pass BN statistics from the f32 accumulator (before the bf16 downcast);
    # two slice-accumulates instead of a concatenate.
    stats_ref[0:1, 0:1, :] += jnp.sum(acc, axis=0, keepdims=True)[None]
    stats_ref[0:1, 1:2, :] += jnp.sum(acc * acc, axis=0, keepdims=True)[None]


def bn_act_kernel(conv_ref, scale_ref, shift_ref, o_ref):
    # conv_ref: [THW, C_pad] bf16; scale/shift: [1, C_pad] f32 (BN folded in XLA)
    # o_ref:    [1, C, THW]  f32 -- NHWC->NCHW transpose fused into the store,
    #                        channel padding never written to HBM.
    y = conv_ref[...].astype(jnp.float32) * scale_ref[...] + shift_ref[...]
    y = jnp.where(y >= 0.0, y, NEG_SLOPE * y)          # LeakyReLU
    c_out = o_ref.shape[1]
    o_ref[...] = jnp.transpose(y)[:c_out, :][None]


# ------------------------------- host glue --------------------------------- #
def _round_up(x, m):
    return ((x + m - 1) // m) * m


def _chip_budgets():
    # v7x has only 64 MiB of VMEM; v5e/v6e have 128 MiB and can take bigger tiles.
    vmem_cap = 64 * 1024 * 1024
    try:
        vmem_cap = int(pltpu.get_tpu_info().vmem_capacity_bytes)
    except Exception:
        pass
    if vmem_cap >= 100 * 1024 * 1024:                  # v5e / v6e (128 MiB VMEM)
        return 24 * 1024 * 1024, 96 * 1024 * 1024, 1024
    return 12 * 1024 * 1024, 40 * 1024 * 1024, 512     # v7x or unknown: conservative


def _choose_toh(m_outer, ow, c_in, c_pad, tile_budget, target_rows):
    # Per-step VMEM: double-buffered input & conv tiles + f32 accumulator +
    # the VMEM-resident weight / stats (counted explicitly).
    def vmem_bytes(toh):
        return (2 * toh * 6 * (ow + 1) * c_in * 2      # xg tile (bf16), 2 buffers
                + 2 * toh * ow * c_pad * 2             # conv tile (bf16), 2 buffers
                + toh * ow * c_pad * 4                 # f32 accumulator
                + 2 * 9 * c_in * c_pad * 2             # resident weight
                + 4 * 2 * c_pad * 4)                   # stats
    toh = max(8, (max(1, target_rows // ow) // 8) * 8)
    toh = min(toh, _round_up(m_outer, 8))
    while toh > 8 and vmem_bytes(toh) > tile_budget:
        toh = max(8, ((toh // 2) // 8) * 8)
    return toh


def _choose_thw(ohw):
    # Lane-dense flattened-spatial tile for phase 2; must divide OH*OW.
    k = min(ohw, 1024) // 128
    while k >= 1:
        if ohw % (k * 128) == 0:
            return k * 128
        k -= 1
    # TODO(synk): add an un-fused-transpose fallback for spatial sizes where
    # OH*OW is not a multiple of 8 (block-shape constraint) or is huge and odd.
    return ohw


def downsample(x_nchw, w_pt, gamma, beta):
    """x_nchw: [N, C, H, W] f32; w_pt: PyTorch layout [C_out=C, C_in=C, 3, 3]."""
    n, c, h, w = x_nchw.shape
    oh = (h - 1) // 2 + 1
    ow = (w - 1) // 2 + 1
    ohw = oh * ow
    m_true = n * ohw
    c_pad = _round_up(c, 128)
    tile_budget, vmem_limit, target_rows = _chip_budgets()

    # --- XLA-side prep: reflect pad + compact (kh, col-parity) input layout ---
    # ~1.5x the raw input instead of the 9x im2col expansion; taps are rebuilt
    # in VMEM inside the kernel.
    # TODO(synk): fold this re-layout (reflect pad / NCHW->NHWC / parity split)
    # into the kernel with manual overlapping-row DMAs to drop the last host pass.
    xp = jnp.pad(x_nchw, ((0, 0), (0, 0), (1, 1), (1, 1)), mode="reflect")
    xp = jnp.transpose(xp, (0, 2, 3, 1))                       # [N, H+2, W+2, C]
    hp, wp = h + 2, w + 2
    if wp % 2:
        xp = jnp.pad(xp, ((0, 0), (0, 0), (0, 1), (0, 0)))
        wp += 1
    whalf = wp // 2                                            # == OW + 1
    xq = jnp.transpose(xp.reshape(n, hp, whalf, 2, c), (0, 1, 3, 2, 4))
    xg = jnp.stack([xq[:, 0:2 * oh:2], xq[:, 1:2 * oh:2], xq[:, 2:2 * oh + 1:2]],
                   axis=2)                                     # [N, OH, 3, 2, OW+1, C]
    xg = xg.reshape(n * oh, 6 * whalf, c).astype(jnp.bfloat16)

    # conv weight -> (kh*3+kw, ci, co), channel-padded to a 128-lane multiple
    w_mat = jnp.transpose(w_pt, (2, 3, 1, 0)).reshape(9, c, c)
    w_mat = jnp.pad(w_mat, ((0, 0), (0, 0), (0, c_pad - c))).astype(jnp.bfloat16)

    # --- phase-1 tiling: (megacore split) x (row blocks, reduction-resident stats) ---
    m_outer = n * oh
    toh = _choose_toh(m_outer, ow, c, c_pad, tile_budget, target_rows)
    nsplit = 2 if m_outer > toh else 1                         # v7x: one split per TC
    m_outer_pad = _round_up(m_outer, nsplit * toh)
    if m_outer_pad != m_outer:
        # zero rows contribute nothing to sum / sum_sq; true M is used below
        xg = jnp.pad(xg, ((0, m_outer_pad - m_outer), (0, 0), (0, 0)))
    bps = m_outer_pad // (nsplit * toh)                        # blocks per split
    tm = toh * ow

    conv, stats = pl.pallas_call(
        conv_stats_kernel,
        out_shape=(jax.ShapeDtypeStruct((m_outer_pad * ow, c_pad), jnp.bfloat16),
                   jax.ShapeDtypeStruct((nsplit, 2, c_pad), jnp.float32)),
        grid=(nsplit, bps),
        in_specs=[pl.BlockSpec((toh, 6 * whalf, c),
                               lambda s, i: (s * bps + i, 0, 0)),
                  pl.BlockSpec((9, c, c_pad), lambda s, i: (0, 0, 0))],
        out_specs=(pl.BlockSpec((tm, c_pad), lambda s, i: (s * bps + i, 0)),
                   pl.BlockSpec((1, 2, c_pad), lambda s, i: (s, 0, 0))),
        compiler_params=pltpu.CompilerParams(
            dimension_semantics=("parallel", "arbitrary"),
            vmem_limit_bytes=vmem_limit),
    )(xg, w_mat)

    # --- BN finalize once in XLA (tiny [2, C_pad] math): scale / shift vectors ---
    st = stats.sum(axis=0)                                     # reduce megacore partials
    mean = st[0] / float(m_true)
    var = jnp.maximum(st[1] / float(m_true) - mean * mean, 0.0)   # biased (training) var
    inv_std = jax.lax.rsqrt(var + BN_EPS)
    gamma_p = jnp.pad(gamma.astype(jnp.float32), (0, c_pad - c))
    beta_p = jnp.pad(beta.astype(jnp.float32), (0, c_pad - c))
    scale = (gamma_p * inv_std).reshape(1, c_pad)
    shift = (beta_p - mean * gamma_p * inv_std).reshape(1, c_pad)

    # --- phase 2: streaming normalize + LeakyReLU with fused NHWC->NCHW store ---
    # TODO(synk): for very small C, recompute the conv from xg here instead of
    # round-tripping the channel-padded bf16 intermediate through HBM.
    thw = _choose_thw(ohw)
    jb = ohw // thw
    out = pl.pallas_call(
        bn_act_kernel,
        out_shape=jax.ShapeDtypeStruct((n, c, ohw), jnp.float32),
        grid=(n, jb),
        in_specs=[pl.BlockSpec((thw, c_pad), lambda b, j: (b * jb + j, 0)),
                  pl.BlockSpec((1, c_pad), lambda b, j: (0, 0)),
                  pl.BlockSpec((1, c_pad), lambda b, j: (0, 0))],
        out_specs=pl.BlockSpec((1, c, thw), lambda b, j: (b, 0, j)),
        compiler_params=pltpu.CompilerParams(
            dimension_semantics=("parallel", "parallel"),
            vmem_limit_bytes=vmem_limit),
    )(conv, scale, shift)

    return out.reshape(n, c, oh, ow)                           # free reshape (NCHW)


def downsample_ref(x_nchw, w_pt, gamma, beta):
    # Pure-JAX f32 reference of the PyTorch forward (training-mode BN).
    x_pad = jnp.pad(x_nchw, ((0, 0), (0, 0), (1, 1), (1, 1)), mode="reflect")
    conv = jax.lax.conv_general_dilated(
        x_pad, w_pt, window_strides=(2, 2), padding="VALID",
        dimension_numbers=("NCHW", "OIHW", "NCHW"))
    mean = jnp.mean(conv, axis=(0, 2, 3), keepdims=True)
    var = jnp.mean((conv - mean) ** 2, axis=(0, 2, 3), keepdims=True)
    y = (conv - mean) * jax.lax.rsqrt(var + BN_EPS)
    y = y * gamma.reshape(1, -1, 1, 1) + beta.reshape(1, -1, 1, 1)
    return jnp.where(y >= 0, y, NEG_SLOPE * y)


if __name__ == "__main__":
    key = jax.random.PRNGKey(0)
    kx, kw, kg, kb = jax.random.split(key, 4)

    N, C, H, W = 2, 4, 16, 16
    x = jax.random.normal(kx, (N, C, H, W), dtype=jnp.float32)

    # Conv2d(C, C, 3, stride=2, padding=1, bias=False) weight, PyTorch [co, ci, kh, kw]
    fan_in = C * 3 * 3
    bound = 1.0 / (fan_in ** 0.5)
    w = jax.random.uniform(kw, (C, C, 3, 3), jnp.float32, -bound, bound)

    # BatchNorm2d affine params (perturbed from 1/0 defaults so affine path is used)
    gamma = 1.0 + 0.1 * jax.random.normal(kg, (C,), jnp.float32)
    beta = 0.1 * jax.random.normal(kb, (C,), jnp.float32)

    out = jax.jit(downsample)(x, w, gamma, beta)
    out = jax.block_until_ready(out)

    ref = downsample_ref(x, w, gamma, beta)
    assert out.shape == (N, C, H // 2, W // 2), out.shape
    max_err = float(jnp.max(jnp.abs(out - ref)))
    # bf16 MXU operands + bf16 intermediate -> looser tolerance than pure f32
    assert jnp.allclose(out, ref, atol=5e-2, rtol=5e-2), max_err

    print("KERNEL_OK")
</pallas_src>

<mosaic_0001>
module attributes {stable_mosaic.version = 11 : i64} {
  func.func @conv_stats_kernel(%arg0: i32, %arg1: i32, %arg2: memref<16x54x4xbf16, #tpu.memory_space<vmem>>, %arg3: memref<9x4x128xbf16, #tpu.memory_space<vmem>>, %arg4: memref<128x128xbf16, #tpu.memory_space<vmem>>, %arg5: memref<1x2x128xf32, #tpu.memory_space<vmem>>) attributes {dimension_semantics = [#tpu.dimension_semantics<parallel>, #tpu.dimension_semantics<arbitrary>], iteration_bounds = array<i64: 1, 1>, scalar_prefetch = 0 : i64, scratch_operands = 0 : i64, tpu.core_type = #tpu.core_type<tc>, window_params = [{transform_indices = @transform_0, window_bounds = array<i64: 16, 54, 4>}, {pipeline_mode = #tpu.pipeline_mode<synchronous>, transform_indices = @transform_1, window_bounds = array<i64: 9, 4, 128>}, {transform_indices = @transform_2, window_bounds = array<i64: 128, 128>}, {transform_indices = @transform_3, window_bounds = array<i64: 1, 2, 128>}]} {
    %c0_i32 = arith.constant 0 : i32
    %0 = arith.cmpi eq, %arg1, %c0_i32 : i32
    %1 = arith.extui %0 : i1 to i32
    %c0_i32_0 = arith.constant 0 : i32
    %2 = arith.cmpi ne, %1, %c0_i32_0 : i32
    scf.if %2 {
      %cst_47 = arith.constant 0.000000e+00 : f32
      %74 = vector.broadcast %cst_47 : f32 to vector<1x2x128xf32>
      %c0_48 = arith.constant 0 : index
      %c0_49 = arith.constant 0 : index
      %c0_50 = arith.constant 0 : index
      %75 = vector.load %arg5[%c0_48, %c0_49, %c0_50] : memref<1x2x128xf32, #tpu.memory_space<vmem>>, vector<1x2x128xf32>
      tpu.vector_store %arg5[%c0_48, %c0_49, %c0_50], %74 {strides = array<i32>} : memref<1x2x128xf32, #tpu.memory_space<vmem>>, vector<1x2x128xf32>,
    } else {
    }
    %c0 = arith.constant 0 : index
    %c0_1 = arith.constant 0 : index
    %c0_2 = arith.constant 0 : index
    %3 = vector.load %arg2[%c0, %c0_1, %c0_2] : memref<16x54x4xbf16, #tpu.memory_space<vmem>>, vector<16x54x4xbf16>
    %cst = arith.constant 0.000000e+00 : f32
    %4 = vector.broadcast %cst : f32 to vector<128x128xf32>
    %5 = vector.extract_strided_slice %3 {offsets = [0, 0, 0], sizes = [16, 8, 4], strides = [1, 1, 1]} : vector<16x54x4xbf16> to vector<16x8x4xbf16>
    %6 = vector.shape_cast %5 : vector<16x8x4xbf16> to vector<128x4xbf16>
    %c0_3 = arith.constant 0 : index
    %c0_4 = arith.constant 0 : index
    %c0_5 = arith.constant 0 : index
    %7 = vector.load %arg3[%c0_3, %c0_4, %c0_5] : memref<9x4x128xbf16, #tpu.memory_space<vmem>>, vector<1x4x128xbf16>
    %8 = vector.shape_cast %7 : vector<1x4x128xbf16> to vector<4x128xbf16>
    %cst_6 = arith.constant dense<0.000000e+00> : vector<128x128xf32>
    %9 = tpu.matmul %6, %8, %cst_6 {dimension_numbers = #tpu.dot_dimension_numbers<[1], [0], [0], [1], [0, 0, 1, 1], [], []>} : vector<128x4xbf16>, vector<4x128xbf16>, vector<128x128xf32> -> vector<128x128xf32>
    %10 = arith.addf %4, %9 : vector<128x128xf32>
    %11 = vector.extract_strided_slice %3 {offsets = [0, 9, 0], sizes = [16, 8, 4], strides = [1, 1, 1]} : vector<16x54x4xbf16> to vector<16x8x4xbf16>
    %12 = vector.shape_cast %11 : vector<16x8x4xbf16> to vector<128x4xbf16>
    %c1 = arith.constant 1 : index
    %c0_7 = arith.constant 0 : index
    %c0_8 = arith.constant 0 : index
    %13 = vector.load %arg3[%c1, %c0_7, %c0_8] : memref<9x4x128xbf16, #tpu.memory_space<vmem>>, vector<1x4x128xbf16>
    %14 = vector.shape_cast %13 : vector<1x4x128xbf16> to vector<4x128xbf16>
    %cst_9 = arith.constant dense<0.000000e+00> : vector<128x128xf32>
    %15 = tpu.matmul %12, %14, %cst_9 {dimension_numbers = #tpu.dot_dimension_numbers<[1], [0], [0], [1], [0, 0, 1, 1], [], []>} : vector<128x4xbf16>, vector<4x128xbf16>, vector<128x128xf32> -> vector<128x128xf32>
    %16 = arith.addf %10, %15 : vector<128x128xf32>
    %17 = vector.extract_strided_slice %3 {offsets = [0, 1, 0], sizes = [16, 8, 4], strides = [1, 1, 1]} : vector<16x54x4xbf16> to vector<16x8x4xbf16>
    %18 = vector.shape_cast %17 : vector<16x8x4xbf16> to vector<128x4xbf16>
    %c2 = arith.constant 2 : index
    %c0_10 = arith.constant 0 : index
    %c0_11 = arith.constant 0 : index
    %19 = vector.load %arg3[%c2, %c0_10, %c0_11] : memref<9x4x128xbf16, #tpu.memory_space<vmem>>, vector<1x4x128xbf16>
    %20 = vector.shape_cast %19 : vector<1x4x128xbf16> to vector<4x128xbf16>
    %cst_12 = arith.constant dense<0.000000e+00> : vector<128x128xf32>
    %21 = tpu.matmul %18, %20, %cst_12 {dimension_numbers = #tpu.dot_dimension_numbers<[1], [0], [0], [1], [0, 0, 1, 1], [], []>} : vector<128x4xbf16>, vector<4x128xbf16>, vector<128x128xf32> -> vector<128x128xf32>
    %22 = arith.addf %16, %21 : vector<128x128xf32>
    %23 = vector.extract_strided_slice %3 {offsets = [0, 18, 0], sizes = [16, 8, 4], strides = [1, 1, 1]} : vector<16x54x4xbf16> to vector<16x8x4xbf16>
    %24 = vector.shape_cast %23 : vector<16x8x4xbf16> to vector<128x4xbf16>
    %c3 = arith.constant 3 : index
    %c0_13 = arith.constant 0 : index
    %c0_14 = arith.constant 0 : index
    %25 = vector.load %arg3[%c3, %c0_13, %c0_14] : memref<9x4x128xbf16, #tpu.memory_space<vmem>>, vector<1x4x128xbf16>
    %26 = vector.shape_cast %25 : vector<1x4x128xbf16> to vector<4x128xbf16>
    %cst_15 = arith.constant dense<0.000000e+00> : vector<128x128xf32>
    %27 = tpu.matmul %24, %26, %cst_15 {dimension_numbers = #tpu.dot_dimension_numbers<[1], [0], [0], [1], [0, 0, 1, 1], [], []>} : vector<128x4xbf16>, vector<4x128xbf16>, vector<128x128xf32> -> vector<128x128xf32>
    %28 = arith.addf %22, %27 : vector<128x128xf32>
    %29 = vector.extract_strided_slice %3 {offsets = [0, 27, 0], sizes = [16, 8, 4], strides = [1, 1, 1]} : vector<16x54x4xbf16> to vector<16x8x4xbf16>
    %30 = vector.shape_cast %29 : vector<16x8x4xbf16> to vector<128x4xbf16>
    %c4 = arith.constant 4 : index
    %c0_16 = arith.constant 0 : index
    %c0_17 = arith.constant 0 : index
    %31 = vector.load %arg3[%c4, %c0_16, %c0_17] : memref<9x4x128xbf16, #tpu.memory_space<vmem>>, vector<1x4x128xbf16>
    %32 = vector.shape_cast %31 : vector<1x4x128xbf16> to vector<4x128xbf16>
    %cst_18 = arith.constant dense<0.000000e+00> : vector<128x128xf32>
    %33 = tpu.matmul %30, %32, %cst_18 {dimension_numbers = #tpu.dot_dimension_numbers<[1], [0], [0], [1], [0, 0, 1, 1], [], []>} : vector<128x4xbf16>, vector<4x128xbf16>, vector<128x128xf32> -> vector<128x128xf32>
    %34 = arith.addf %28, %33 : vector<128x128xf32>
    %35 = vector.extract_strided_slice %3 {offsets = [0, 19, 0], sizes = [16, 8, 4], strides = [1, 1, 1]} : vector<16x54x4xbf16> to vector<16x8x4xbf16>
    %36 = vector.shape_cast %35 : vector<16x8x4xbf16> to vector<128x4xbf16>
    %c5 = arith.constant 5 : index
    %c0_19 = arith.constant 0 : index
    %c0_20 = arith.constant 0 : index
    %37 = vector.load %arg3[%c5, %c0_19, %c0_20] : memref<9x4x128xbf16, #tpu.memory_space<vmem>>, vector<1x4x128xbf16>
    %38 = vector.shape_cast %37 : vector<1x4x128xbf16> to vector<4x128xbf16>
    %cst_21 = arith.constant dense<0.000000e+00> : vector<128x128xf32>
    %39 = tpu.matmul %36, %38, %cst_21 {dimension_numbers = #tpu.dot_dimension_numbers<[1], [0], [0], [1], [0, 0, 1, 1], [], []>} : vector<128x4xbf16>, vector<4x128xbf16>, vector<128x128xf32> -> vector<128x128xf32>
    %40 = arith.addf %34, %39 : vector<128x128xf32>
    %41 = vector.extract_strided_slice %3 {offsets = [0, 36, 0], sizes = [16, 8, 4], strides = [1, 1, 1]} : vector<16x54x4xbf16> to vector<16x8x4xbf16>
    %42 = vector.shape_cast %41 : vector<16x8x4xbf16> to vector<128x4xbf16>
    %c6 = arith.constant 6 : index
    %c0_22 = arith.constant 0 : index
    %c0_23 = arith.constant 0 : index
    %43 = vector.load %arg3[%c6, %c0_22, %c0_23] : memref<9x4x128xbf16, #tpu.memory_space<vmem>>, vector<1x4x128xbf16>
    %44 = vector.shape_cast %43 : vector<1x4x128xbf16> to vector<4x128xbf16>
    %cst_24 = arith.constant dense<0.000000e+00> : vector<128x128xf32>
    %45 = tpu.matmul %42, %44, %cst_24 {dimension_numbers = #tpu.dot_dimension_numbers<[1], [0], [0], [1], [0, 0, 1, 1], [], []>} : vector<128x4xbf16>, vector<4x128xbf16>, vector<128x128xf32> -> vector<128x128xf32>
    %46 = arith.addf %40, %45 : vector<128x128xf32>
    %47 = vector.extract_strided_slice %3 {offsets = [0, 45, 0], sizes = [16, 8, 4], strides = [1, 1, 1]} : vector<16x54x4xbf16> to vector<16x8x4xbf16>
    %48 = vector.shape_cast %47 : vector<16x8x4xbf16> to vector<128x4xbf16>
    %c7 = arith.constant 7 : index
    %c0_25 = arith.constant 0 : index
    %c0_26 = arith.constant 0 : index
    %49 = vector.load %arg3[%c7, %c0_25, %c0_26] : memref<9x4x128xbf16, #tpu.memory_space<vmem>>, vector<1x4x128xbf16>
    %50 = vector.shape_cast %49 : vector<1x4x128xbf16> to vector<4x128xbf16>
    %cst_27 = arith.constant dense<0.000000e+00> : vector<128x128xf32>
    %51 = tpu.matmul %48, %50, %cst_27 {dimension_numbers = #tpu.dot_dimension_numbers<[1], [0], [0], [1], [0, 0, 1, 1], [], []>} : vector<128x4xbf16>, vector<4x128xbf16>, vector<128x128xf32> -> vector<128x128xf32>
    %52 = arith.addf %46, %51 : vector<128x128xf32>
    %53 = vector.extract_strided_slice %3 {offsets = [0, 37, 0], sizes = [16, 8, 4], strides = [1, 1, 1]} : vector<16x54x4xbf16> to vector<16x8x4xbf16>
    %54 = vector.shape_cast %53 : vector<16x8x4xbf16> to vector<128x4xbf16>
    %c8 = arith.constant 8 : index
    %c0_28 = arith.constant 0 : index
    %c0_29 = arith.constant 0 : index
    %55 = vector.load %arg3[%c8, %c0_28, %c0_29] : memref<9x4x128xbf16, #tpu.memory_space<vmem>>, vector<1x4x128xbf16>
    %56 = vector.shape_cast %55 : vector<1x4x128xbf16> to vector<4x128xbf16>
    %cst_30 = arith.constant dense<0.000000e+00> : vector<128x128xf32>
    %57 = tpu.matmul %54, %56, %cst_30 {dimension_numbers = #tpu.dot_dimension_numbers<[1], [0], [0], [1], [0, 0, 1, 1], [], []>} : vector<128x4xbf16>, vector<4x128xbf16>, vector<128x128xf32> -> vector<128x128xf32>
    %58 = arith.addf %52, %57 : vector<128x128xf32>
    %59 = arith.truncf %58 : vector<128x128xf32> to vector<128x128xbf16>
    %c0_31 = arith.constant 0 : index
    %c0_32 = arith.constant 0 : index
    %60 = vector.load %arg4[%c0_31, %c0_32] : memref<128x128xbf16, #tpu.memory_space<vmem>>, vector<128x128xbf16>
    tpu.vector_store %arg4[%c0_31, %c0_32], %59 {strides = array<i32>} : memref<128x128xbf16, #tpu.memory_space<vmem>>, vector<128x128xbf16>,
    %c0_33 = arith.constant 0 : index
    %c0_34 = arith.constant 0 : index
    %c0_35 = arith.constant 0 : index
    %61 = vector.load %arg5[%c0_33, %c0_34, %c0_35] : memref<1x2x128xf32, #tpu.memory_space<vmem>>, vector<1x1x128xf32>
    %cst_36 = arith.constant dense<0.000000e+00> : vector<128xf32>
    %62 = vector.multi_reduction <add>, %58, %cst_36 [0] : vector<128x128xf32> to vector<128xf32>
    %63 = vector.shape_cast %62 : vector<128xf32> to vector<1x128xf32>
    %64 = vector.shape_cast %63 : vector<1x128xf32> to vector<1x1x128xf32>
    %65 = arith.addf %61, %64 : vector<1x1x128xf32>
    %c0_37 = arith.constant 0 : index
    %c0_38 = arith.constant 0 : index
    %c0_39 = arith.constant 0 : index
    %66 = vector.load %arg5[%c0_37, %c0_38, %c0_39] : memref<1x2x128xf32, #tpu.memory_space<vmem>>, vector<1x1x128xf32>
    tpu.vector_store %arg5[%c0_37, %c0_38, %c0_39], %65 {strides = array<i32>} : memref<1x2x128xf32, #tpu.memory_space<vmem>>, vector<1x1x128xf32>,
    %c0_40 = arith.constant 0 : index
    %c1_41 = arith.constant 1 : index
    %c0_42 = arith.constant 0 : index
    %67 = vector.load %arg5[%c0_40, %c1_41, %c0_42] : memref<1x2x128xf32, #tpu.memory_space<vmem>>, vector<1x1x128xf32>
    %68 = arith.mulf %58, %58 : vector<128x128xf32>
    %cst_43 = arith.constant dense<0.000000e+00> : vector<128xf32>
    %69 = vector.multi_reduction <add>, %68, %cst_43 [0] : vector<128x128xf32> to vector<128xf32>
    %70 = vector.shape_cast %69 : vector<128xf32> to vector<1x128xf32>
    %71 = vector.shape_cast %70 : vector<1x128xf32> to vector<1x1x128xf32>
    %72 = arith.addf %67, %71 : vector<1x1x128xf32>
    %c0_44 = arith.constant 0 : index
    %c1_45 = arith.constant 1 : index
    %c0_46 = arith.constant 0 : index
    %73 = vector.load %arg5[%c0_44, %c1_45, %c0_46] : memref<1x2x128xf32, #tpu.memory_space<vmem>>, vector<1x1x128xf32>
    tpu.vector_store %arg5[%c0_44, %c1_45, %c0_46], %72 {strides = array<i32>} : memref<1x2x128xf32, #tpu.memory_space<vmem>>, vector<1x1x128xf32>,
    return
  }
  func.func @transform_0(%arg0: i32, %arg1: i32) -> (i32, i32, i32) {
    %c1_i32 = arith.constant 1 : i32
    %0 = arith.muli %arg0, %c1_i32 : i32
    %1 = arith.addi %0, %arg1 : i32
    %c0_i32 = arith.constant 0 : i32
    %c0_i32_0 = arith.constant 0 : i32
    %c0_i32_1 = arith.constant 0 : i32
    return %1, %c0_i32, %c0_i32_0 : i32, i32, i32
  }
  func.func @transform_1(%arg0: i32, %arg1: i32) -> (i32, i32, i32) {
    %c0_i32 = arith.constant 0 : i32
    %c0_i32_0 = arith.constant 0 : i32
    %c0_i32_1 = arith.constant 0 : i32
    %c0_i32_2 = arith.constant 0 : i32
    return %c0_i32, %c0_i32_0, %c0_i32_1 : i32, i32, i32
  }
  func.func @transform_2(%arg0: i32, %arg1: i32) -> (i32, i32) {
    %c1_i32 = arith.constant 1 : i32
    %0 = arith.muli %arg0, %c1_i32 : i32
    %1 = arith.addi %0, %arg1 : i32
    %c0_i32 = arith.constant 0 : i32
    %c0_i32_0 = arith.constant 0 : i32
    return %1, %c0_i32 : i32, i32
  }
  func.func @transform_3(%arg0: i32, %arg1: i32) -> (i32, i32, i32) {
    %c0_i32 = arith.constant 0 : i32
    %c0_i32_0 = arith.constant 0 : i32
    %c0_i32_1 = arith.constant 0 : i32
    return %arg0, %c0_i32, %c0_i32_0 : i32, i32, i32
  }
}

module attributes {stable_mosaic.version = 11 : i64} {
  func.func @bn_act_kernel(%arg0: i32, %arg1: i32, %arg2: memref<64x128xbf16, #tpu.memory_space<vmem>>, %arg3: memref<1x128xf32, #tpu.memory_space<vmem>>, %arg4: memref<1x128xf32, #tpu.memory_space<vmem>>, %arg5: memref<1x4x64xf32, #tpu.memory_space<vmem>>) attributes {dimension_semantics = [#tpu.dimension_semantics<parallel>, #tpu.dimension_semantics<parallel>], iteration_bounds = array<i64: 2, 1>, scalar_prefetch = 0 : i64, scratch_operands = 0 : i64, tpu.core_type = #tpu.core_type<tc>, window_params = [{transform_indices = @transform_0, window_bounds = array<i64: 64, 128>}, {pipeline_mode = #tpu.pipeline_mode<synchronous>, transform_indices = @transform_1, window_bounds = array<i64: 1, 128>}, {pipeline_mode = #tpu.pipeline_mode<synchronous>, transform_indices = @transform_2, window_bounds = array<i64: 1, 128>}, {transform_indices = @transform_3, window_bounds = array<i64: 1, 4, 64>}]} {
    %c0 = arith.constant 0 : index
    %c0_0 = arith.constant 0 : index
    %0 = vector.load %arg2[%c0, %c0_0] : memref<64x128xbf16, #tpu.memory_space<vmem>>, vector<64x128xbf16>
    %1 = arith.extf %0 : vector<64x128xbf16> to vector<64x128xf32>
    %c0_1 = arith.constant 0 : index
    %c0_2 = arith.constant 0 : index
    %2 = vector.load %arg3[%c0_1, %c0_2] : memref<1x128xf32, #tpu.memory_space<vmem>>, vector<1x128xf32>
    %3 = vector.broadcast %2 : vector<1x128xf32> to vector<64x128xf32>
    %4 = arith.mulf %1, %3 : vector<64x128xf32>
    %c0_3 = arith.constant 0 : index
    %c0_4 = arith.constant 0 : index
    %5 = vector.load %arg4[%c0_3, %c0_4] : memref<1x128xf32, #tpu.memory_space<vmem>>, vector<1x128xf32>
    %6 = vector.broadcast %5 : vector<1x128xf32> to vector<64x128xf32>
    %7 = arith.addf %4, %6 : vector<64x128xf32>
    %cst = arith.constant 0.000000e+00 : f32
    %8 = vector.broadcast %cst : f32 to vector<64x128xf32>
    %9 = arith.cmpf oge, %7, %8 : vector<64x128xf32>
    %cst_5 = arith.constant 0.00999999977 : f32
    %10 = vector.broadcast %cst_5 : f32 to vector<64x128xf32>
    %11 = arith.mulf %10, %7 : vector<64x128xf32>
    %12 = arith.select %9, %7, %11 : vector<64x128xi1>, vector<64x128xf32>
    %13 = tpu.transpose %12, [1, 0] : vector<64x128xf32> -> vector<128x64xf32>
    %14 = vector.extract_strided_slice %13 {offsets = [0, 0], sizes = [4, 64], strides = [1, 1]} : vector<128x64xf32> to vector<4x64xf32>
    %15 = vector.shape_cast %14 : vector<4x64xf32> to vector<1x4x64xf32>
    %c0_6 = arith.constant 0 : index
    %c0_7 = arith.constant 0 : index
    %c0_8 = arith.constant 0 : index
    %16 = vector.load %arg5[%c0_6, %c0_7, %c0_8] : memref<1x4x64xf32, #tpu.memory_space<vmem>>, vector<1x4x64xf32>
    tpu.vector_store %arg5[%c0_6, %c0_7, %c0_8], %15 {strides = array<i32>} : memref<1x4x64xf32, #tpu.memory_space<vmem>>, vector<1x4x64xf32>,
    return
  }
  func.func @transform_0(%arg0: i32, %arg1: i32) -> (i32, i32) {
    %c1_i32 = arith.constant 1 : i32
    %0 = arith.muli %arg0, %c1_i32 : i32
    %1 = arith.addi %0, %arg1 : i32
    %c0_i32 = arith.constant 0 : i32
    %c0_i32_0 = arith.constant 0 : i32
    return %1, %c0_i32 : i32, i32
  }
  func.func @transform_1(%arg0: i32, %arg1: i32) -> (i32, i32) {
    %c0_i32 = arith.constant 0 : i32
    %c0_i32_0 = arith.constant 0 : i32
    %c0_i32_1 = arith.constant 0 : i32
    return %c0_i32, %c0_i32_0 : i32, i32
  }
  func.func @transform_2(%arg0: i32, %arg1: i32) -> (i32, i32) {
    %c0_i32 = arith.constant 0 : i32
    %c0_i32_0 = arith.constant 0 : i32
    %c0_i32_1 = arith.constant 0 : i32
    return %c0_i32, %c0_i32_0 : i32, i32
  }
  func.func @transform_3(%arg0: i32, %arg1: i32) -> (i32, i32, i32) {
    %c0_i32 = arith.constant 0 : i32
    %c0_i32_0 = arith.constant 0 : i32
    return %arg0, %c0_i32, %arg1 : i32, i32, i32
  }
}

</mosaic_0001>

<llo_original>
// kernel: downsample.3
$region0: #{downsample.3}
  #allocation0 [shape = 'u32[]', space=smem, size = 0x4, offset = 0x4, fixed_abs, tag = 'smem constant byte address 0x4 - core index']
  #allocation1 [shape = 'u32[144,128]{1,0:T(1,128)}', space=vmem, size = 0x12000, scoped, tag = 'internal scratch']
  %s0 = inlined_call_operand.vmem [shape: bf16[128,128], index: 0, kind: input, shape index: {}]
  %s1 = inlined_call_operand.vmem [shape: f32[1,128], index: 1, kind: input, shape index: {}]
  %s2 = inlined_call_operand.vmem [shape: f32[1,128], index: 2, kind: input, shape index: {}]
  %s3 = inlined_call_operand.vmem [shape: f32[2,4,64], index: 3, kind: output, shape index: {}]
  %s4 = sld [smem:[#allocation0]]
  $region45: #{downsample.3} parent=0
    _
  %s6 = ssub.s32 1, %s4
  %s7 = scalar_select 0, %s6, %s4
  loop: start=0, step=1, limit=4
  $region2: #{downsample.3} parent=0 // loop_pre_header
    _
  $region3: #{downsample.3} parent=0 // loop_header
    %s9 = sphi 0, %s13
    %p10 = scmp.ge.s32.totalorder %s9, 4
    %s16 = sphi 0, %s28
    %s17 = sphi 0, %s24
    %s18 = sphi 0, %s16
    %s19 = sphi 0, %s17
    %s20 = sphi 0, %s18
    %s21 = sphi 0, %s19
    %s33 = sphi 0, %s35
    %s36 = sphi 0, %s33
    %s37 = sphi 0, %s36
    %s53 = sphi 0, %s37
    %s57 = sphi 0, %s57
    %s59 = sphi 0, %s57
    %s60 = sphi 0, %s59
    %s74 = sphi 0, %s60
    %s78 = sphi 0, %s78
    %s80 = sphi 0, %s78
    %s81 = sphi 0, %s80
    %s95 = sphi 0, %s81
    %s103 = sphi 0, %s105
    %s106 = sphi 0, %s103
    %s107 = sphi 0, %s106
    %s123 = sphi 0, %s107
  $region4: #{downsample.3} parent=0 // loop_header_branch
    %12 = sbr.rel (%p10) target = $region8
  $region5: #{downsample.3} parent=0 // loop_body
    %s14 = ssub.s32 %s9, 1
    %s15 = ssub.s32 %s9, 2
    %s22 = sadd.s32 1, %s17
    %p23 = scmp.ge.s32.totalorder %s22, 1
    %s24 = scalar_select %p23, 0, %s22
    %s25 = sadd.s32 1, %s16
    %s26 = scalar_select %p23, %s25, %s16
    %p27 = scmp.ge.s32.totalorder %s26, 2
    %s28 = scalar_select %p27, 0, %s26
    %s29 = sadd.s32 %s16, %s17
    %s30 = sadd.s32 %s28, %s24
    %s31 = ssub.s32 %s29, %s30
    %p32 = scmp.eq.s32.totalorder %s31, 0
    %s34 = sadd.s32 %s33, 1
    %s35 = scalar_select %p32, %s33, %s34
    %p38 = pneg %p32
    %p39 = scmp.eq.s32.totalorder %s9, 1
    %p40 = por %p38, %p39
    %p41 = scmp.ne.s32.totalorder %s33, %s36
    %p42 = scmp.eq.s32.totalorder %s9, 0
    %p43 = por %p41, %p42
    %p44 = scmp.ne.s32.totalorder %s33, %s36
    %p45 = scmp.eq.s32.totalorder %s14, 1
    %p46 = por %p44, %p45
    %p47 = scmp.ne.s32.totalorder %s36, %s37
    %p48 = scmp.eq.s32.totalorder %s14, 0
    %p49 = por %p47, %p48
    %p50 = scmp.ne.s32.totalorder %s36, %s37
    %p51 = scmp.eq.s32.totalorder %s15, 1
    %p52 = por %p50, %p51
    %p54 = scmp.ne.s32.totalorder %s37, %s53
    %p55 = scmp.eq.s32.totalorder %s15, 0
    %p56 = por %p54, %p55
    %s58 = sadd.s32 %s57, 1
    %p61 = scmp.eq.s32.totalorder %s9, 1
    %p62 = scmp.ne.s32.totalorder %s57, %s59
    %p63 = scmp.eq.s32.totalorder %s9, 0
    %p64 = por %p62, %p63
    %p65 = scmp.ne.s32.totalorder %s57, %s59
    %p66 = scmp.eq.s32.totalorder %s14, 1
    %p67 = por %p65, %p66
    %p68 = scmp.ne.s32.totalorder %s59, %s60
    %p69 = scmp.eq.s32.totalorder %s14, 0
    %p70 = por %p68, %p69
    %p71 = scmp.ne.s32.totalorder %s59, %s60
    %p72 = scmp.eq.s32.totalorder %s15, 1
    %p73 = por %p71, %p72
    %p75 = scmp.ne.s32.totalorder %s60, %s74
    %p76 = scmp.eq.s32.totalorder %s15, 0
    %p77 = por %p75, %p76
    %s79 = sadd.s32 %s78, 1
    %p82 = scmp.eq.s32.totalorder %s9, 1
    %p83 = scmp.ne.s32.totalorder %s78, %s80
    %p84 = scmp.eq.s32.totalorder %s9, 0
    %p85 = por %p83, %p84
    %p86 = scmp.ne.s32.totalorder %s78, %s80
    %p87 = scmp.eq.s32.totalorder %s14, 1
    %p88 = por %p86, %p87
    %p89 = scmp.ne.s32.totalorder %s80, %s81
    %p90 = scmp.eq.s32.totalorder %s14, 0
    %p91 = por %p89, %p90
    %p92 = scmp.ne.s32.totalorder %s80, %s81
    %p93 = scmp.eq.s32.totalorder %s15, 1
    %p94 = por %p92, %p93
    %p96 = scmp.ne.s32.totalorder %s81, %s95
    %p97 = scmp.eq.s32.totalorder %s15, 0
    %p98 = por %p96, %p97
    %s99 = ssub.s32 %s16, %s28
    %s100 = ssub.s32 %s17, %s24
    %s101 = sor.u32 %s99, %s100
    %p102 = scmp.eq.s32.totalorder %s101, 0
    %s104 = sadd.s32 %s103, 1
    %s105 = scalar_select %p102, %s103, %s104
    %p108 = pneg %p102
    %p109 = scmp.eq.s32.totalorder %s9, 1
    %p110 = por %p108, %p109
    %p111 = scmp.ne.s32.totalorder %s103, %s106
    %p112 = scmp.eq.s32.totalorder %s9, 0
    %p113 = por %p111, %p112
    %p114 = scmp.ne.s32.totalorder %s103, %s106
    %p115 = scmp.eq.s32.totalorder %s14, 1
    %p116 = por %p114, %p115
    %p117 = scmp.ne.s32.totalorder %s106, %s107
    %p118 = scmp.eq.s32.totalorder %s14, 0
    %p119 = por %p117, %p118
    %p120 = scmp.ne.s32.totalorder %s106, %s107
    %p121 = scmp.eq.s32.totalorder %s15, 1
    %p122 = por %p120, %p121
    %p124 = scmp.ne.s32.totalorder %s107, %s123
    %p125 = scmp.eq.s32.totalorder %s15, 0
    %p126 = por %p124, %p125
    %p127 = scmp.le.s32.totalorder 1, %s9
    %p128 = scmp.lt.s32.totalorder %s9, 3
    %p129 = pnand %p127, %p128
    %p130 = pneg %p129
    // Predicated region
    $region9: #{downsample.3} parent=5 // pred_check
      _
    $region10: #{downsample.3} parent=5 // pred_check_branch
      %132 = sbr.rel (%p129) target = $region12
    $region11: #{downsample.3} parent=5 // pred_region
      %s133 = ssub.s32 %s9, 1
      // Predicated region
      $region13: #{downsample.3} parent=11 // pred_check
        %p134 = pneg %p70
      $region14: #{downsample.3} parent=11 // pred_check_branch
        %136 = sbr.rel (%p134) target = $region16
      $region15: #{downsample.3} parent=11 // pred_region
        _
      $region16: #{downsample.3} parent=11 // pred_fallthru
        _
      // Predicated region
      $region17: #{downsample.3} parent=11 // pred_check
        %p137 = pneg %p91
      $region18: #{downsample.3} parent=11 // pred_check_branch
        %139 = sbr.rel (%p137) target = $region20
      $region19: #{downsample.3} parent=11 // pred_region
        _
      $region20: #{downsample.3} parent=11 // pred_fallthru
        _
    $region12: #{downsample.3} parent=5 // pred_fallthru
      _
    %p140 = scmp.lt.s32.totalorder %s9, 2
    // Predicated region
    $region21: #{downsample.3} parent=5 // pred_check
      %p141 = pneg %p140
    $region22: #{downsample.3} parent=5 // pred_check_branch
      %143 = sbr.rel (%p141) target = $region24
    $region23: #{downsample.3} parent=5 // pred_region
      // Predicated region
      $region25: #{downsample.3} parent=23 // pred_check
        %p144 = pneg %p43
      $region26: #{downsample.3} parent=23 // pred_check_branch
        %146 = sbr.rel (%p144) target = $region28
      $region27: #{downsample.3} parent=23 // pred_region
        %s147 = sadd.s32 %s16, %s17
        %s148 = smul.u32 8, %s147
        %p149 = scmp.lt.s32.totalorder %s148, 15
        %s150 = scalar_select %p149, %s148, 15
        %s151 = smul.addr %s150, 4
        %s152 = scalar_lea.vmem %s0, %s151
        %s153 = sadd.s32 %s16, %s17
        %s154 = smul.u32 8, %s153
      $region28: #{downsample.3} parent=23 // pred_fallthru
        _
    $region24: #{downsample.3} parent=5 // pred_fallthru
      _
    %p155 = scmp.le.s32.totalorder 1, %s9
    %p156 = scmp.lt.s32.totalorder %s9, 3
    %p157 = pnand %p155, %p156
    %p158 = pneg %p157
    // Predicated region
    $region29: #{downsample.3} parent=5 // pred_check
      _
    $region30: #{downsample.3} parent=5 // pred_check_branch
      %160 = sbr.rel (%p157) target = $region32
    $region31: #{downsample.3} parent=5 // pred_region
      %s161 = ssub.s32 %s9, 1
      %s162 = sadd.s32 %s18, %s19
      %s163 = smul.u32 8, %s162
      %p164 = scmp.lt.s32.totalorder %s163, 15
      %s165 = scalar_select %p164, %s163, 15
      %s166 = smul.addr %s165, 4
      %s167 = scalar_lea.vmem %s0, %s166
      %p168 = pneg %p49
      %p169 = pneg %p46
      %p170 = pneg %p70
      %p171 = pneg %p67
      %p172 = pneg %p91
      %p173 = pneg %p88
      %p174 = pneg %p119
      %p175 = pneg %p116
      %p176 = scmp.lt.s32.totalorder %s18, 1
      %s177 = scalar_select %p176, %s18, 1
      %p178 = scmp.lt.s32.totalorder %s19, 0
      %s179 = scalar_select %p178, %s19, 0
      %s180 = sadd.s32 %s179, %s177
      %s181 = smul.addr %s180, 4
      %s182 = scalar_lea.vmem %s3, %s181
      %s183 = sadd.s32 %s18, %s19
      %s184 = smul.u32 8, %s183
      %p185 = scmp.lt.s32.totalorder %s184, 15
      %s186 = scalar_select %p185, %s184, 15
      %s187 = smul.addr %s186, 4
      %s188 = scalar_lea.vmem %s0, %s187
      %s189 = sadd.s32 %s18, %s19
      %s190 = smul.u32 8, %s189
      %p191 = scmp.lt.s32.totalorder %s18, 1
      %s192 = scalar_select %p191, %s18, 1
      %p193 = scmp.lt.s32.totalorder %s19, 0
      %s194 = scalar_select %p193, %s19, 0
      %s195 = sadd.s32 %s194, %s192
      %s196 = smul.addr %s195, 4
      %s197 = scalar_lea.vmem %s3, %s196
      %v198 = vld [vmem:[%s188] sm:$0xf]
      %v199 = vld [vmem:[%s188 + $0x4] sm:$0xf]
      %v200 = vld [vmem:[%s188 + $0x8] sm:$0xf]
      %v201 = vld [vmem:[%s188 + $0xc] sm:$0xf]
      %v202 = vld [vmem:[%s188 + $0x10] sm:$0xf]
      %v203 = vld [vmem:[%s188 + $0x14] sm:$0xf]
      %v204 = vld [vmem:[%s188 + $0x18] sm:$0xf]
      %v205 = vld [vmem:[%s188 + $0x1c] sm:$0xf]
      %v206 = vunpack.c.l.bf16 %v198
      %v207 = vunpack.c.l.bf16 %v199
      %v208 = vunpack.c.l.bf16 %v200
      %v209 = vunpack.c.l.bf16 %v201
      %v210 = vunpack.c.l.bf16 %v202
      %v211 = vunpack.c.l.bf16 %v203
      %v212 = vunpack.c.l.bf16 %v204
      %v213 = vunpack.c.l.bf16 %v205
      %v214 = vld [vmem:[%s1] sm:$0x1]
      %v216 = vlaneseq
      %v217 = vshrl.u32 %v216, 7
      %v218 = vsub.s32 0, %v217
      %v219 = vrot.slane %v214, %v218
      %v221 = vmul.f32 %v206, %v219
      %v222 = vmul.f32 %v207, %v219
      %v223 = vmul.f32 %v208, %v219
      %v224 = vmul.f32 %v209, %v219
      %v225 = vmul.f32 %v210, %v219
      %v226 = vmul.f32 %v211, %v219
      %v227 = vmul.f32 %v212, %v219
      %v228 = vmul.f32 %v213, %v219
      %v229 = vld [vmem:[%s2] sm:$0x1]
      %v231 = vlaneseq
      %v232 = vshrl.u32 %v231, 7
      %v233 = vsub.s32 0, %v232
      %v234 = vrot.slane %v229, %v233
      %v236 = vadd.f32 %v221, %v234
      %v237 = vadd.f32 %v222, %v234
      %v238 = vadd.f32 %v223, %v234
      %v239 = vadd.f32 %v224, %v234
      %v240 = vadd.f32 %v225, %v234
      %v241 = vadd.f32 %v226, %v234
      %v242 = vadd.f32 %v227, %v234
      %v243 = vadd.f32 %v228, %v234
      %vm244 = vcmp.ge.f32.partialorder %v236, 0.0
      %vm245 = vcmp.ge.f32.partialorder %v237, 0.0
      %vm246 = vcmp.ge.f32.partialorder %v238, 0.0
      %vm247 = vcmp.ge.f32.partialorder %v239, 0.0
      %vm248 = vcmp.ge.f32.partialorder %v240, 0.0
      %vm249 = vcmp.ge.f32.partialorder %v241, 0.0
      %vm250 = vcmp.ge.f32.partialorder %v242, 0.0
      %vm251 = vcmp.ge.f32.partialorder %v243, 0.0
      %v252 = vmul.f32 %v236, 0.01
      %v253 = vmul.f32 %v237, 0.01
      %v254 = vmul.f32 %v238, 0.01
      %v255 = vmul.f32 %v239, 0.01
      %v256 = vmul.f32 %v240, 0.01
      %v257 = vmul.f32 %v241, 0.01
      %v258 = vmul.f32 %v242, 0.01
      %v259 = vmul.f32 %v243, 0.01
      %v260 = vsel %vm244, %v236, %v252
      %v261 = vsel %vm245, %v237, %v253
      %v262 = vsel %vm246, %v238, %v254
      %v263 = vsel %vm247, %v239, %v255
      %v264 = vsel %vm248, %v240, %v256
      %v265 = vsel %vm249, %v241, %v257
      %v266 = vsel %vm250, %v242, %v258
      %v267 = vsel %vm251, %v243, %v259
      %268 = vxpose.xlu0.b32.start [1/16] %v260, 128
      %269 = vxpose.xlu0.b32.cont [2/16] %v261, 128
      %270 = vxpose.xlu0.b32.cont [3/16] %v262, 128
      %271 = vxpose.xlu0.b32.cont [4/16] %v263, 128
      %272 = vxpose.xlu0.b32.cont [5/16] %v264, 128
      %273 = vxpose.xlu0.b32.cont [6/16] %v265, 128
      %274 = vxpose.xlu0.b32.cont [7/16] %v266, 128
      %275 = vxpose.xlu0.b32.cont [8/16] %v267, 128
      %276 = vxpose.xlu0.b32.cont [9/16] 0.0, 128
      %277 = vxpose.xlu0.b32.cont [10/16] 0.0, 128
      %278 = vxpose.xlu0.b32.cont [11/16] 0.0, 128
      %279 = vxpose.xlu0.b32.cont [12/16] 0.0, 128
      %280 = vxpose.xlu0.b32.cont [13/16] 0.0, 128
      %281 = vxpose.xlu0.b32.cont [14/16] 0.0, 128
      %282 = vxpose.xlu0.b32.cont [15/16] 0.0, 128
      %283 = vxpose.xlu0.b32.end [16/16] 0.0, 128
      %v284 = vpop.trf.xlu0
      %v285 = vpop.trf.xlu0
      %v286 = vpop.trf.xlu0
      %v287 = vpop.trf.xlu0
      %v288 = vpop.trf.xlu0
      %v289 = vpop.trf.xlu0
      %v290 = vpop.trf.xlu0
      %v291 = vpop.trf.xlu0
      %v292 = vpop.trf.xlu0
      %v293 = vpop.trf.xlu0
      %v294 = vpop.trf.xlu0
      %v295 = vpop.trf.xlu0
      %v296 = vpop.trf.xlu0
      %v297 = vpop.trf.xlu0
      %v298 = vpop.trf.xlu0
      %v299 = vpop.trf.xlu0
      %vm300 = vcmask 519168
      %301 = vst.msk [vmem:[%s197] sm:$0xf] %vm300, %v284
      %p302 = scmp.lt.s32.totalorder %s18, 1
      %s303 = scalar_select %p302, %s18, 1
      %p304 = scmp.lt.s32.totalorder %s19, 0
      %s305 = scalar_select %p304, %s19, 0
      %s306 = sadd.s32 %s305, %s303
      %s307 = smul.addr %s306, 4
      %s308 = scalar_lea.vmem %s3, %s307
      // Predicated region
      $region33: #{downsample.3} parent=31 // pred_check
        %p309 = pneg %p116
      $region34: #{downsample.3} parent=31 // pred_check_branch
        %311 = sbr.rel (%p309) target = $region36
      $region35: #{downsample.3} parent=31 // pred_region
        _
      $region36: #{downsample.3} parent=31 // pred_fallthru
        _
    $region32: #{downsample.3} parent=5 // pred_fallthru
      _
    %p312 = scmp.le.s32.totalorder 2, %s9
    // Predicated region
    $region37: #{downsample.3} parent=5 // pred_check
      %p313 = pneg %p312
    $region38: #{downsample.3} parent=5 // pred_check_branch
      %315 = sbr.rel (%p313) target = $region40
    $region39: #{downsample.3} parent=5 // pred_region
      %s316 = ssub.s32 %s9, 2
      // Predicated region
      $region41: #{downsample.3} parent=39 // pred_check
        %p317 = pneg %p122
      $region42: #{downsample.3} parent=39 // pred_check_branch
        %319 = sbr.rel (%p317) target = $region44
      $region43: #{downsample.3} parent=39 // pred_region
        %p320 = scmp.lt.s32.totalorder %s20, 1
        %s321 = scalar_select %p320, %s20, 1
        %p322 = scmp.lt.s32.totalorder %s21, 0
        %s323 = scalar_select %p322, %s21, 0
        %s324 = sadd.s32 %s323, %s321
        %s325 = smul.addr %s324, 4
        %s326 = scalar_lea.vmem %s3, %s325
      $region44: #{downsample.3} parent=39 // pred_fallthru
        _
    $region40: #{downsample.3} parent=5 // pred_fallthru
      _
  $region6: #{downsample.3} parent=0 // loop_footer
    %s13 = sadd.s32 1, %s9
  $region7: #{downsample.3} parent=0 // loop_footer_branch
    %8 = sbr.rel target = $region3
  $region8: #{downsample.3} parent=0 // loop_exit
    _

// kernel: downsample.2
$region0: #{downsample.2}
  #allocation0 [shape = 'u32[]', space=smem, size = 0x4, offset = 0x4, fixed_abs, tag = 'smem constant byte address 0x4 - core index']
  #allocation1 [shape = 'u32[144,128]{1,0:T(1,128)}', space=vmem, size = 0x12000, scoped, tag = 'internal scratch']
  %s0 = inlined_call_operand.vmem [shape: bf16[16,54,4], index: 0, kind: input, shape index: {}]
  %s1 = inlined_call_operand.vmem [shape: bf16[9,4,128], index: 1, kind: input, shape index: {}]
  %s2 = inlined_call_operand.vmem [shape: bf16[128,128], index: 2, kind: output, shape index: {0}]
  %s3 = inlined_call_operand.vmem [shape: f32[1,2,128], index: 3, kind: output, shape index: {1}]
  %4 = xla_tuple %s2, %s3
  %s5 = sld [smem:[#allocation0]]
  $region30: #{downsample.2} parent=0
    _
  %s7 = ssub.s32 1, %s5
  %s8 = scalar_select 0, %s7, %s5
  // Predicated region
  $region2: #{downsample.2} parent=0 // pred_check
    _
  $region3: #{downsample.2} parent=0 // pred_check_branch
    %10 = sbr.rel (0) target = $region5
  $region4: #{downsample.2} parent=0 // pred_region
    %s11 = sadd.s32 0, 0
    %s12 = smul.u32 16, %s11
    %p13 = scmp.lt.s32.totalorder %s12, 15
    %s14 = scalar_select %p13, %s12, 15
    %s15 = smul.addr %s14, 7
    %s16 = smul.addr %s15, 4
    %s17 = scalar_lea.vmem %s0, %s16
    %s18 = sadd.s32 0, 0
    %s19 = smul.u32 16, %s18
  $region5: #{downsample.2} parent=0 // pred_fallthru
    _
  // Predicated region
  $region6: #{downsample.2} parent=0 // pred_check
    _
  $region7: #{downsample.2} parent=0 // pred_check_branch
    %21 = sbr.rel (0) target = $region9
  $region8: #{downsample.2} parent=0 // pred_region
    _
  $region9: #{downsample.2} parent=0 // pred_fallthru
    _
  %s22 = sadd.s32 0, 0
  %s23 = smul.u32 16, %s22
  %p24 = scmp.lt.s32.totalorder %s23, 15
  %s25 = scalar_select %p24, %s23, 15
  %s26 = smul.addr %s25, 7
  %s27 = smul.addr %s26, 4
  %s28 = scalar_lea.vmem %s0, %s27
  %s29 = sadd.s32 0, 0
  %s30 = smul.u32 16, %s29
  %p31 = scmp.lt.s32.totalorder %s30, 15
  %s32 = scalar_select %p31, %s30, 15
  %s33 = smul.addr %s32, 4
  %s34 = scalar_lea.vmem %s2, %s33
  %s35 = sadd.s32 0, 0
  %s36 = smul.u32 16, %s35
  %p37 = scmp.lt.s32.totalorder %s36, 15
  %s38 = scalar_select %p37, %s36, 15
  %s39 = smul.addr %s38, 7
  %s40 = smul.addr %s39, 4
  %s41 = scalar_lea.vmem %s0, %s40
  %s42 = sadd.s32 0, 0
  %s43 = smul.u32 16, %s42
  %s44 = sadd.s32 0, 0
  %s45 = smul.u32 16, %s44
  %p46 = scmp.lt.s32.totalorder %s45, 15
  %s47 = scalar_select %p46, %s45, 15
  %s48 = smul.addr %s47, 4
  %s49 = scalar_lea.vmem %s2, %s48
  %s50 = sadd.s32 0, 0
  %s51 = smul.u32 16, %s50
  %p53 = scmp.eq.s32.totalorder 0, 0
  // Predicated region
  $region10: #{downsample.2} parent=0 // pred_check
    %p54 = pneg %p53
  $region11: #{downsample.2} parent=0 // pred_check_branch
    %56 = sbr.rel (%p54) target = $region13
  $region12: #{downsample.2} parent=0 // pred_region
    %57 = vst [vmem:[%s3] sm:$0x3] 0.0
  $region13: #{downsample.2} parent=0 // pred_fallthru
    _
  %v58 = vld [vmem:[%s41] sm:$0xf]
  %v59 = vld [vmem:[%s41 + $0x4] sm:$0xf]
  %v60 = vld [vmem:[%s41 + $0x8] sm:$0xf]
  %v61 = vld [vmem:[%s41 + $0xc] sm:$0xf]
  %v62 = vld [vmem:[%s41 + $0x10] sm:$0xf]
  %v63 = vld [vmem:[%s41 + $0x14] sm:$0xf]
  %v64 = vld [vmem:[%s41 + $0x18] sm:$0x7]
  %v65 = vld [vmem:[%s41 + $0x1c] sm:$0xf]
  %v66 = vld [vmem:[%s41 + $0x20] sm:$0xf]
  %v67 = vld [vmem:[%s41 + $0x24] sm:$0xf]
  %v68 = vld [vmem:[%s41 + $0x28] sm:$0xf]
  %v69 = vld [vmem:[%s41 + $0x2c] sm:$0xf]
  %v70 = vld [vmem:[%s41 + $0x30] sm:$0xf]
  %v71 = vld [vmem:[%s41 + $0x34] sm:$0x7]
  %v72 = vld [vmem:[%s41 + $0x38] sm:$0xf]
  %v73 = vld [vmem:[%s41 + $0x3c] sm:$0xf]
  %v74 = vld [vmem:[%s41 + $0x40] sm:$0xf]
  %v75 = vld [vmem:[%s41 + $0x44] sm:$0xf]
  %v76 = vld [vmem:[%s41 + $0x48] sm:$0xf]
  %v77 = vld [vmem:[%s41 + $0x4c] sm:$0xf]
  %v78 = vld [vmem:[%s41 + $0x50] sm:$0x7]
  %v79 = vld [vmem:[%s41 + $0x54] sm:$0xf]
  %v80 = vld [vmem:[%s41 + $0x58] sm:$0xf]
  %v81 = vld [vmem:[%s41 + $0x5c] sm:$0xf]
  %v82 = vld [vmem:[%s41 + $0x60] sm:$0xf]
  %v83 = vld [vmem:[%s41 + $0x64] sm:$0xf]
  %v84 = vld [vmem:[%s41 + $0x68] sm:$0xf]
  %v85 = vld [vmem:[%s41 + $0x6c] sm:$0x7]
  %v86 = vld [vmem:[%s41 + $0x70] sm:$0xf]
  %v87 = vld [vmem:[%s41 + $0x74] sm:$0xf]
  %v88 = vld [vmem:[%s41 + $0x78] sm:$0xf]
  %v89 = vld [vmem:[%s41 + $0x7c] sm:$0xf]
  %v90 = vld [vmem:[%s41 + $0x80] sm:$0xf]
  %v91 = vld [vmem:[%s41 + $0x84] sm:$0xf]
  %v92 = vld [vmem:[%s41 + $0x88] sm:$0x7]
  %v93 = vld [vmem:[%s41 + $0x8c] sm:$0xf]
  %v94 = vld [vmem:[%s41 + $0x90] sm:$0xf]
  %v95 = vld [vmem:[%s41 + $0x94] sm:$0xf]
  %v96 = vld [vmem:[%s41 + $0x98] sm:$0xf]
  %v97 = vld [vmem:[%s41 + $0x9c] sm:$0xf]
  %v98 = vld [vmem:[%s41 + $0xa0] sm:$0xf]
  %v99 = vld [vmem:[%s41 + $0xa4] sm:$0x7]
  %v100 = vld [vmem:[%s41 + $0xa8] sm:$0xf]
  %v101 = vld [vmem:[%s41 + $0xac] sm:$0xf]
  %v102 = vld [vmem:[%s41 + $0xb0] sm:$0xf]
  %v103 = vld [vmem:[%s41 + $0xb4] sm:$0xf]
  %v104 = vld [vmem:[%s41 + $0xb8] sm:$0xf]
  %v105 = vld [vmem:[%s41 + $0xbc] sm:$0xf]
  %v106 = vld [vmem:[%s41 + $0xc0] sm:$0x7]
  %v107 = vld [vmem:[%s41 + $0xc4] sm:$0xf]
  %v108 = vld [vmem:[%s41 + $0xc8] sm:$0xf]
  %v109 = vld [vmem:[%s41 + $0xcc] sm:$0xf]
  %v110 = vld [vmem:[%s41 + $0xd0] sm:$0xf]
  %v111 = vld [vmem:[%s41 + $0xd4] sm:$0xf]
  %v112 = vld [vmem:[%s41 + $0xd8] sm:$0xf]
  %v113 = vld [vmem:[%s41 + $0xdc] sm:$0x7]
  %v114 = vld [vmem:[%s41 + $0xe0] sm:$0xf]
  %v115 = vld [vmem:[%s41 + $0xe4] sm:$0xf]
  %v116 = vld [vmem:[%s41 + $0xe8] sm:$0xf]
  %v117 = vld [vmem:[%s41 + $0xec] sm:$0xf]
  %v118 = vld [vmem:[%s41 + $0xf0] sm:$0xf]
  %v119 = vld [vmem:[%s41 + $0xf4] sm:$0xf]
  %v120 = vld [vmem:[%s41 + $0xf8] sm:$0x7]
  %v121 = vld [vmem:[%s41 + $0xfc] sm:$0xf]
  %v122 = vld [vmem:[%s41 + $0x100] sm:$0xf]
  %v123 = vld [vmem:[%s41 + $0x104] sm:$0xf]
  %v124 = vld [vmem:[%s41 + $0x108] sm:$0xf]
  %v125 = vld [vmem:[%s41 + $0x10c] sm:$0xf]
  %v126 = vld [vmem:[%s41 + $0x110] sm:$0xf]
  %v127 = vld [vmem:[%s41 + $0x114] sm:$0x7]
  %v128 = vld [vmem:[%s41 + $0x118] sm:$0xf]
  %v129 = vld [vmem:[%s41 + $0x11c] sm:$0xf]
  %v130 = vld [vmem:[%s41 + $0x120] sm:$0xf]
  %v131 = vld [vmem:[%s41 + $0x124] sm:$0xf]
  %v132 = vld [vmem:[%s41 + $0x128] sm:$0xf]
  %v133 = vld [vmem:[%s41 + $0x12c] sm:$0xf]
  %v134 = vld [vmem:[%s41 + $0x130] sm:$0x7]
  %v135 = vld [vmem:[%s41 + $0x134] sm:$0xf]
  %v136 = vld [vmem:[%s41 + $0x138] sm:$0xf]
  %v137 = vld [vmem:[%s41 + $0x13c] sm:$0xf]
  %v138 = vld [vmem:[%s41 + $0x140] sm:$0xf]
  %v139 = vld [vmem:[%s41 + $0x144] sm:$0xf]
  %v140 = vld [vmem:[%s41 + $0x148] sm:$0xf]
  %v141 = vld [vmem:[%s41 + $0x14c] sm:$0x7]
  %v142 = vld [vmem:[%s41 + $0x150] sm:$0xf]
  %v143 = vld [vmem:[%s41 + $0x154] sm:$0xf]
  %v144 = vld [vmem:[%s41 + $0x158] sm:$0xf]
  %v145 = vld [vmem:[%s41 + $0x15c] sm:$0xf]
  %v146 = vld [vmem:[%s41 + $0x160] sm:$0xf]
  %v147 = vld [vmem:[%s41 + $0x164] sm:$0xf]
  %v148 = vld [vmem:[%s41 + $0x168] sm:$0x7]
  %v149 = vld [vmem:[%s41 + $0x16c] sm:$0xf]
  %v150 = vld [vmem:[%s41 + $0x170] sm:$0xf]
  %v151 = vld [vmem:[%s41 + $0x174] sm:$0xf]
  %v152 = vld [vmem:[%s41 + $0x178] sm:$0xf]
  %v153 = vld [vmem:[%s41 + $0x17c] sm:$0xf]
  %v154 = vld [vmem:[%s41 + $0x180] sm:$0xf]
  %v155 = vld [vmem:[%s41 + $0x184] sm:$0x7]
  %v156 = vld [vmem:[%s41 + $0x188] sm:$0xf]
  %v157 = vld [vmem:[%s41 + $0x18c] sm:$0xf]
  %v158 = vld [vmem:[%s41 + $0x190] sm:$0xf]
  %v159 = vld [vmem:[%s41 + $0x194] sm:$0xf]
  %v160 = vld [vmem:[%s41 + $0x198] sm:$0xf]
  %v161 = vld [vmem:[%s41 + $0x19c] sm:$0xf]
  %v162 = vld [vmem:[%s41 + $0x1a0] sm:$0x7]
  %v163 = vld [vmem:[%s41 + $0x1a4] sm:$0xf]
  %v164 = vld [vmem:[%s41 + $0x1a8] sm:$0xf]
  %v165 = vld [vmem:[%s41 + $0x1ac] sm:$0xf]
  %v166 = vld [vmem:[%s41 + $0x1b0] sm:$0xf]
  %v167 = vld [vmem:[%s41 + $0x1b4] sm:$0xf]
  %v168 = vld [vmem:[%s41 + $0x1b8] sm:$0xf]
  %v169 = vld [vmem:[%s41 + $0x1bc] sm:$0x7]
  %v170 = vld [vmem:[%s1] sm:$0x3]
  %vm171 = vsmask.f32 3328
  %vm172 = vsmask.f32 7440
  %vm173 = vmor %vm171, %vm172
  %v175 = vshrl.u32 %v59, 16
  %v177 = vrot.slane %v175, 4
  %v178 = vshll.u32 %v59, 16
  %v180 = vrot.slane %v178, 5
  %v181 = vor.u32 %v177, %v180
  %v182 = vrot.slane %v181, 4
  %v184 = vshll.u32 %v60, 16
  %v186 = vrot.slane %v184, 5
  %v187 = vsel %vm173, %v182, %v186
  %v189 = vshrl.u32 %v66, 16
  %v191 = vrot.slane %v189, 4
  %v192 = vshll.u32 %v66, 16
  %v194 = vrot.slane %v192, 5
  %v195 = vor.u32 %v191, %v194
  %v196 = vrot.slane %v195, 4
  %v198 = vshll.u32 %v67, 16
  %v200 = vrot.slane %v198, 5
  %v201 = vsel %vm173, %v196, %v200
  %v203 = vshrl.u32 %v73, 16
  %v205 = vrot.slane %v203, 4
  %v206 = vshll.u32 %v73, 16
  %v208 = vrot.slane %v206, 5
  %v209 = vor.u32 %v205, %v208
  %v210 = vrot.slane %v209, 4
  %v212 = vshll.u32 %v74, 16
  %v214 = vrot.slane %v212, 5
  %v215 = vsel %vm173, %v210, %v214
  %v217 = vshrl.u32 %v80, 16
  %v219 = vrot.slane %v217, 4
  %v220 = vshll.u32 %v80, 16
  %v222 = vrot.slane %v220, 5
  %v223 = vor.u32 %v219, %v222
  %v224 = vrot.slane %v223, 4
  %v226 = vshll.u32 %v81, 16
  %v228 = vrot.slane %v226, 5
  %v229 = vsel %vm173, %v224, %v228
  %v231 = vshrl.u32 %v87, 16
  %v233 = vrot.slane %v231, 4
  %v234 = vshll.u32 %v87, 16
  %v236 = vrot.slane %v234, 5
  %v237 = vor.u32 %v233, %v236
  %v238 = vrot.slane %v237, 4
  %v240 = vshll.u32 %v88, 16
  %v242 = vrot.slane %v240, 5
  %v243 = vsel %vm173, %v238, %v242
  %v245 = vshrl.u32 %v94, 16
  %v247 = vrot.slane %v245, 4
  %v248 = vshll.u32 %v94, 16
  %v250 = vrot.slane %v248, 5
  %v251 = vor.u32 %v247, %v250
  %v252 = vrot.slane %v251, 4
  %v254 = vshll.u32 %v95, 16
  %v256 = vrot.slane %v254, 5
  %v257 = vsel %vm173, %v252, %v256
  %v259 = vshrl.u32 %v101, 16
  %v261 = vrot.slane %v259, 4
  %v262 = vshll.u32 %v101, 16
  %v264 = vrot.slane %v262, 5
  %v265 = vor.u32 %v261, %v264
  %v266 = vrot.slane %v265, 4
  %v268 = vshll.u32 %v102, 16
  %v270 = vrot.slane %v268, 5
  %v271 = vsel %vm173, %v266, %v270
  %v273 = vshrl.u32 %v108, 16
  %v275 = vrot.slane %v273, 4
  %v276 = vshll.u32 %v108, 16
  %v278 = vrot.slane %v276, 5
  %v279 = vor.u32 %v275, %v278
  %v280 = vrot.slane %v279, 4
  %v282 = vshll.u32 %v109, 16
  %v284 = vrot.slane %v282, 5
  %v285 = vsel %vm173, %v280, %v284
  %v287 = vshrl.u32 %v115, 16
  %v289 = vrot.slane %v287, 4
  %v290 = vshll.u32 %v115, 16
  %v292 = vrot.slane %v290, 5
  %v293 = vor.u32 %v289, %v292
  %v294 = vrot.slane %v293, 4
  %v296 = vshll.u32 %v116, 16
  %v298 = vrot.slane %v296, 5
  %v299 = vsel %vm173, %v294, %v298
  %v301 = vshrl.u32 %v122, 16
  %v303 = vrot.slane %v301, 4
  %v304 = vshll.u32 %v122, 16
  %v306 = vrot.slane %v304, 5
  %v307 = vor.u32 %v303, %v306
  %v308 = vrot.slane %v307, 4
  %v310 = vshll.u32 %v123, 16
  %v312 = vrot.slane %v310, 5
  %v313 = vsel %vm173, %v308, %v312
  %v315 = vshrl.u32 %v129, 16
  %v317 = vrot.slane %v315, 4
  %v318 = vshll.u32 %v129, 16
  %v320 = vrot.slane %v318, 5
  %v321 = vor.u32 %v317, %v320
  %v322 = vrot.slane %v321, 4
  %v324 = vshll.u32 %v130, 16
  %v326 = vrot.slane %v324, 5
  %v327 = vsel %vm173, %v322, %v326
  %v329 = vshrl.u32 %v136, 16
  %v331 = vrot.slane %v329, 4
  %v332 = vshll.u32 %v136, 16
  %v334 = vrot.slane %v332, 5
  %v335 = vor.u32 %v331, %v334
  %v336 = vrot.slane %v335, 4
  %v338 = vshll.u32 %v137, 16
  %v340 = vrot.slane %v338, 5
  %v341 = vsel %vm173, %v336, %v340
  %v343 = vshrl.u32 %v143, 16
  %v345 = vrot.slane %v343, 4
  %v346 = vshll.u32 %v143, 16
  %v348 = vrot.slane %v346, 5
  %v349 = vor.u32 %v345, %v348
  %v350 = vrot.slane %v349, 4
  %v352 = vshll.u32 %v144, 16
  %v354 = vrot.slane %v352, 5
  %v355 = vsel %vm173, %v350, %v354
  %v357 = vshrl.u32 %v150, 16
  %v359 = vrot.slane %v357, 4
  %v360 = vshll.u32 %v150, 16
  %v362 = vrot.slane %v360, 5
  %v363 = vor.u32 %v359, %v362
  %v364 = vrot.slane %v363, 4
  %v366 = vshll.u32 %v151, 16
  %v368 = vrot.slane %v366, 5
  %v369 = vsel %vm173, %v364, %v368
  %v371 = vshrl.u32 %v157, 16
  %v373 = vrot.slane %v371, 4
  %v374 = vshll.u32 %v157, 16
  %v376 = vrot.slane %v374, 5
  %v377 = vor.u32 %v373, %v376
  %v378 = vrot.slane %v377, 4
  %v380 = vshll.u32 %v158, 16
  %v382 = vrot.slane %v380, 5
  %v383 = vsel %vm173, %v378, %v382
  %v385 = vshrl.u32 %v164, 16
  %v387 = vrot.slane %v385, 4
  %v388 = vshll.u32 %v164, 16
  %v390 = vrot.slane %v388, 5
  %v391 = vor.u32 %v387, %v390
  %v392 = vrot.slane %v391, 4
  %v394 = vshll.u32 %v165, 16
  %v396 = vrot.slane %v394, 5
  %v397 = vsel %vm173, %v392, %v396
  %s398 = scalar_lea.vmem %s1, 2
  %v399 = vld [vmem:[%s398] sm:$0x3]
  %v400 = vunpack.c.l.b16 %v187
  %v401 = vunpack.c.l.b16 %v201
  %v402 = vunpack.c.l.b16 %v215
  %v403 = vunpack.c.l.b16 %v229
  %v404 = vunpack.c.l.b16 %v243
  %v405 = vunpack.c.l.b16 %v257
  %v406 = vunpack.c.l.b16 %v271
  %v407 = vunpack.c.l.b16 %v285
  %v408 = vunpack.c.l.b16 %v299
  %v409 = vunpack.c.l.b16 %v313
  %v410 = vunpack.c.l.b16 %v327
  %v411 = vunpack.c.l.b16 %v341
  %v412 = vunpack.c.l.b16 %v355
  %v413 = vunpack.c.l.b16 %v369
  %v414 = vunpack.c.l.b16 %v383
  %v415 = vunpack.c.l.b16 %v397
  %v416 = vpack.c.b16 %v401, %v400
  %v417 = vpack.c.b16 %v403, %v402
  %v418 = vpack.c.b16 %v405, %v404
  %v419 = vpack.c.b16 %v407, %v406
  %v420 = vpack.c.b16 %v409, %v408
  %v421 = vpack.c.b16 %v411, %v410
  %v422 = vpack.c.b16 %v413, %v412
  %v423 = vpack.c.b16 %v415, %v414
  %vm424 = vcmask 31744
  %v426 = vsel %vm424, %v416, 0
  %v429 = vsel %vm424, %v417, 0
  %v432 = vsel %vm424, %v418, 0
  %v435 = vsel %vm424, %v419, 0
  %v438 = vsel %vm424, %v420, 0
  %v441 = vsel %vm424, %v421, 0
  %v444 = vsel %vm424, %v422, 0
  %v447 = vsel %vm424, %v423, 0
  %vm449 = vcmask 1041408
  %v451 = vsel %vm449, %v399, 0
  %453 = vmatprep.subr.bf16.mxu0 0
  %454 = vmatpush1.bf16.msra.mxu0 %v451
  %455 = vmatprep.subr.bf16.mxu0 0
  %456 = vmatpush1.bf16.msra.mxu0 0
  %457 = vmatprep.subr.bf16.mxu0 0
  %458 = vmatpush1.bf16.msra.mxu0 0
  %459 = vmatprep.subr.bf16.mxu0 0
  %460 = vmatpush1.bf16.msra.mxu0 0
  %461 = vmatprep.subr.bf16.mxu0 0
  %462 = vmatpush1.bf16.msra.mxu0 0
  %463 = vmatprep.subr.bf16.mxu0 0
  %464 = vmatpush1.bf16.msra.mxu0 0
  %465 = vmatprep.subr.bf16.mxu0 0
  %466 = vmatpush1.bf16.msra.mxu0 0
  %467 = vmatprep.subr.bf16.mxu0 0
  %468 = vmatpush1.bf16.msra.mxu0 0
  %469 = vmatprep.subr.bf16.mxu0 0
  %470 = vmatpush1.bf16.msra.mxu0 0
  %471 = vmatprep.subr.bf16.mxu0 0
  %472 = vmatpush1.bf16.msra.mxu0 0
  %473 = vmatprep.subr.bf16.mxu0 0
  %474 = vmatpush1.bf16.msra.mxu0 0
  %475 = vmatprep.subr.bf16.mxu0 0
  %476 = vmatpush1.bf16.msra.mxu0 0
  %477 = vmatprep.subr.bf16.mxu0 0
  %478 = vmatpush1.bf16.msra.mxu0 0
  %479 = vmatprep.subr.bf16.mxu0 0
  %480 = vmatpush1.bf16.msra.mxu0 0
  %481 = vmatprep.subr.bf16.mxu0 0
  %482 = vmatpush1.bf16.msra.mxu0 0
  %483 = vmatprep.subr.bf16.mxu0 0
  %484 = vmatpush1.bf16.msra.mxu0 0
  %485 = vmatprep.mubr.bf16.mxu0 0
  %486 = vmatmul.mubr.bf16.gmra.mrb[0].mxu0 %v426
  %v487 = vpop.f32.mrb[0].mxu0
  %v488 = vadd.f32 0.0, %v487
  %v489 = vpop.f32.mrb[0].mxu0
  %v490 = vpop.f32.mrb[0].mxu0
  %v491 = vadd.f32 0.0, %v490
  %v492 = vpop.f32.mrb[0].mxu0
  %493 = vmatprep.mubr.bf16.mxu0 0
  %494 = vmatmul.mubr.bf16.gmra.mrb[0].mxu0 %v429
  %v495 = vpop.f32.mrb[0].mxu0
  %v496 = vadd.f32 0.0, %v495
  %v497 = vpop.f32.mrb[0].mxu0
  %v498 = vpop.f32.mrb[0].mxu0
  %v499 = vadd.f32 0.0, %v498
  %v500 = vpop.f32.mrb[0].mxu0
  %501 = vmatprep.mubr.bf16.mxu0 0
  %502 = vmatmul.mubr.bf16.gmra.mrb[0].mxu0 %v432
  %v503 = vpop.f32.mrb[0].mxu0
  %v504 = vadd.f32 0.0, %v503
  %v505 = vpop.f32.mrb[0].mxu0
  %v506 = vpop.f32.mrb[0].mxu0
  %v507 = vadd.f32 0.0, %v506
  %v508 = vpop.f32.mrb[0].mxu0
  %509 = vmatprep.mubr.bf16.mxu0 0
  %510 = vmatmul.mubr.bf16.gmra.mrb[0].mxu0 %v435
  %v511 = vpop.f32.mrb[0].mxu0
  %v512 = vadd.f32 0.0, %v511
  %v513 = vpop.f32.mrb[0].mxu0
  %v514 = vpop.f32.mrb[0].mxu0
  %v515 = vadd.f32 0.0, %v514
  %v516 = vpop.f32.mrb[0].mxu0
  %517 = vmatprep.mubr.bf16.mxu0 0
  %518 = vmatmul.mubr.bf16.gmra.mrb[0].mxu0 %v438
  %v519 = vpop.f32.mrb[0].mxu0
  %v520 = vadd.f32 0.0, %v519
  %v521 = vpop.f32.mrb[0].mxu0
  %v522 = vpop.f32.mrb[0].mxu0
  %v523 = vadd.f32 0.0, %v522
  %v524 = vpop.f32.mrb[0].mxu0
  %525 = vmatprep.mubr.bf16.mxu0 0
  %526 = vmatmul.mubr.bf16.gmra.mrb[0].mxu0 %v441
  %v527 = vpop.f32.mrb[0].mxu0
  %v528 = vadd.f32 0.0, %v527
  %v529 = vpop.f32.mrb[0].mxu0
  %v530 = vpop.f32.mrb[0].mxu0
  %v531 = vadd.f32 0.0, %v530
  %v532 = vpop.f32.mrb[0].mxu0
  %533 = vmatprep.mubr.bf16.mxu0 0
  %534 = vmatmul.mubr.bf16.gmra.mrb[0].mxu0 %v444
  %v535 = vpop.f32.mrb[0].mxu0
  %v536 = vadd.f32 0.0, %v535
  %v537 = vpop.f32.mrb[0].mxu0
  %v538 = vpop.f32.mrb[0].mxu0
  %v539 = vadd.f32 0.0, %v538
  %v540 = vpop.f32.mrb[0].mxu0
  %541 = vmatprep.mubr.bf16.mxu0 0
  %542 = vmatmul.mubr.bf16.gmra.mrb[0].mxu0 %v447
  %v543 = vpop.f32.mrb[0].mxu0
  %v544 = vadd.f32 0.0, %v543
  %v545 = vpop.f32.mrb[0].mxu0
  %v546 = vpop.f32.mrb[0].mxu0
  %v547 = vadd.f32 0.0, %v546
  %v548 = vpop.f32.mrb[0].mxu0
  %549 = vdwg.mxu0
  %v566 = vunpack.c.l.b16 %v58
  %v567 = vunpack.c.l.b16 %v65
  %v568 = vunpack.c.l.b16 %v72
  %v569 = vunpack.c.l.b16 %v79
  %v570 = vunpack.c.l.b16 %v86
  %v571 = vunpack.c.l.b16 %v93
  %v572 = vunpack.c.l.b16 %v100
  %v573 = vunpack.c.l.b16 %v107
  %v574 = vunpack.c.l.b16 %v114
  %v575 = vunpack.c.l.b16 %v121
  %v576 = vunpack.c.l.b16 %v128
  %v577 = vunpack.c.l.b16 %v135
  %v578 = vunpack.c.l.b16 %v142
  %v579 = vunpack.c.l.b16 %v149
  %v580 = vunpack.c.l.b16 %v156
  %v581 = vunpack.c.l.b16 %v163
  %v582 = vpack.c.b16 %v567, %v566
  %v583 = vpack.c.b16 %v569, %v568
  %v584 = vpack.c.b16 %v571, %v570
  %v585 = vpack.c.b16 %v573, %v572
  %v586 = vpack.c.b16 %v575, %v574
  %v587 = vpack.c.b16 %v577, %v576
  %v588 = vpack.c.b16 %v579, %v578
  %v589 = vpack.c.b16 %v581, %v580
  %v591 = vsel %vm424, %v582, 0
  %v594 = vsel %vm424, %v583, 0
  %v597 = vsel %vm424, %v584, 0
  %v600 = vsel %vm424, %v585, 0
  %v603 = vsel %vm424, %v586, 0
  %v606 = vsel %vm424, %v587, 0
  %v609 = vsel %vm424, %v588, 0
  %v612 = vsel %vm424, %v589, 0
  %v615 = vsel %vm449, %v170, 0
  %617 = vmatprep.subr.bf16.mxu0 0
  %618 = vmatpush1.bf16.msra.mxu0 %v615
  %619 = vmatprep.subr.bf16.mxu0 0
  %620 = vmatpush1.bf16.msra.mxu0 0
  %621 = vmatprep.subr.bf16.mxu0 0
  %622 = vmatpush1.bf16.msra.mxu0 0
  %623 = vmatprep.subr.bf16.mxu0 0
  %624 = vmatpush1.bf16.msra.mxu0 0
  %625 = vmatprep.subr.bf16.mxu0 0
  %626 = vmatpush1.bf16.msra.mxu0 0
  %627 = vmatprep.subr.bf16.mxu0 0
  %628 = vmatpush1.bf16.msra.mxu0 0
  %629 = vmatprep.subr.bf16.mxu0 0
  %630 = vmatpush1.bf16.msra.mxu0 0
  %631 = vmatprep.subr.bf16.mxu0 0
  %632 = vmatpush1.bf16.msra.mxu0 0
  %633 = vmatprep.subr.bf16.mxu0 0
  %634 = vmatpush1.bf16.msra.mxu0 0
  %635 = vmatprep.subr.bf16.mxu0 0
  %636 = vmatpush1.bf16.msra.mxu0 0
  %637 = vmatprep.subr.bf16.mxu0 0
  %638 = vmatpush1.bf16.msra.mxu0 0
  %639 = vmatprep.subr.bf16.mxu0 0
  %640 = vmatpush1.bf16.msra.mxu0 0
  %641 = vmatprep.subr.bf16.mxu0 0
  %642 = vmatpush1.bf16.msra.mxu0 0
  %643 = vmatprep.subr.bf16.mxu0 0
  %644 = vmatpush1.bf16.msra.mxu0 0
  %645 = vmatprep.subr.bf16.mxu0 0
  %646 = vmatpush1.bf16.msra.mxu0 0
  %647 = vmatprep.subr.bf16.mxu0 0
  %648 = vmatpush1.bf16.msra.mxu0 0
  %649 = vmatprep.mubr.bf16.mxu0 0
  %650 = vmatmul.mubr.bf16.gmra.mrb[0].mxu0 %v591
  %v651 = vpop.f32.mrb[0].mxu0
  %v652 = vadd.f32 %v488, %v651
  %v653 = vpop.f32.mrb[0].mxu0
  %v654 = vpop.f32.mrb[0].mxu0
  %v655 = vadd.f32 %v491, %v654
  %v656 = vpop.f32.mrb[0].mxu0
  %657 = vmatprep.mubr.bf16.mxu0 0
  %658 = vmatmul.mubr.bf16.gmra.mrb[0].mxu0 %v594
  %v659 = vpop.f32.mrb[0].mxu0
  %v660 = vadd.f32 %v496, %v659
  %v661 = vpop.f32.mrb[0].mxu0
  %v662 = vpop.f32.mrb[0].mxu0
  %v663 = vadd.f32 %v499, %v662
  %v664 = vpop.f32.mrb[0].mxu0
  %665 = vmatprep.mubr.bf16.mxu0 0
  %666 = vmatmul.mubr.bf16.gmra.mrb[0].mxu0 %v597
  %v667 = vpop.f32.mrb[0].mxu0
  %v668 = vadd.f32 %v504, %v667
  %v669 = vpop.f32.mrb[0].mxu0
  %v670 = vpop.f32.mrb[0].mxu0
  %v671 = vadd.f32 %v507, %v670
  %v672 = vpop.f32.mrb[0].mxu0
  %673 = vmatprep.mubr.bf16.mxu0 0
  %674 = vmatmul.mubr.bf16.gmra.mrb[0].mxu0 %v600
  %v675 = vpop.f32.mrb[0].mxu0
  %v676 = vadd.f32 %v512, %v675
  %v677 = vpop.f32.mrb[0].mxu0
  %v678 = vpop.f32.mrb[0].mxu0
  %v679 = vadd.f32 %v515, %v678
  %v680 = vpop.f32.mrb[0].mxu0
  %681 = vmatprep.mubr.bf16.mxu0 0
  %682 = vmatmul.mubr.bf16.gmra.mrb[0].mxu0 %v603
  %v683 = vpop.f32.mrb[0].mxu0
  %v684 = vadd.f32 %v520, %v683
  %v685 = vpop.f32.mrb[0].mxu0
  %v686 = vpop.f32.mrb[0].mxu0
  %v687 = vadd.f32 %v523, %v686
  %v688 = vpop.f32.mrb[0].mxu0
  %689 = vmatprep.mubr.bf16.mxu0 0
  %690 = vmatmul.mubr.bf16.gmra.mrb[0].mxu0 %v606
  %v691 = vpop.f32.mrb[0].mxu0
  %v692 = vadd.f32 %v528, %v691
  %v693 = vpop.f32.mrb[0].mxu0
  %v694 = vpop.f32.mrb[0].mxu0
  %v695 = vadd.f32 %v531, %v694
  %v696 = vpop.f32.mrb[0].mxu0
  %697 = vmatprep.mubr.bf16.mxu0 0
  %698 = vmatmul.mubr.bf16.gmra.mrb[0].mxu0 %v609
  %v699 = vpop.f32.mrb[0].mxu0
  %v700 = vadd.f32 %v536, %v699
  %v701 = vpop.f32.mrb[0].mxu0
  %v702 = vpop.f32.mrb[0].mxu0
  %v703 = vadd.f32 %v539, %v702
  %v704 = vpop.f32.mrb[0].mxu0
  %705 = vmatprep.mubr.bf16.mxu0 0
  %706 = vmatmul.mubr.bf16.gmra.mrb[0].mxu0 %v612
  %v707 = vpop.f32.mrb[0].mxu0
  %v708 = vadd.f32 %v544, %v707
  %v709 = vpop.f32.mrb[0].mxu0
  %v710 = vpop.f32.mrb[0].mxu0
  %v711 = vadd.f32 %v547, %v710
  %v712 = vpop.f32.mrb[0].mxu0
  %713 = vdwg.mxu0
  %v715 = vshrl.u32 %v58, 16
  %v717 = vrot.slane %v715, 4
  %v718 = vshll.u32 %v58, 16
  %v720 = vrot.slane %v718, 5
  %v721 = vor.u32 %v717, %v720
  %v722 = vrot.slane %v721, 4
  %v723 = vsel %vm173, %v722, %v180
  %v725 = vshrl.u32 %v65, 16
  %v727 = vrot.slane %v725, 4
  %v728 = vshll.u32 %v65, 16
  %v730 = vrot.slane %v728, 5
  %v731 = vor.u32 %v727, %v730
  %v732 = vrot.slane %v731, 4
  %v733 = vsel %vm173, %v732, %v194
  %v735 = vshrl.u32 %v72, 16
  %v737 = vrot.slane %v735, 4
  %v738 = vshll.u32 %v72, 16
  %v740 = vrot.slane %v738, 5
  %v741 = vor.u32 %v737, %v740
  %v742 = vrot.slane %v741, 4
  %v743 = vsel %vm173, %v742, %v208
  %v745 = vshrl.u32 %v79, 16
  %v747 = vrot.slane %v745, 4
  %v748 = vshll.u32 %v79, 16
  %v750 = vrot.slane %v748, 5
  %v751 = vor.u32 %v747, %v750
  %v752 = vrot.slane %v751, 4
  %v753 = vsel %vm173, %v752, %v222
  %v755 = vshrl.u32 %v86, 16
  %v757 = vrot.slane %v755, 4
  %v758 = vshll.u32 %v86, 16
  %v760 = vrot.slane %v758, 5
  %v761 = vor.u32 %v757, %v760
  %v762 = vrot.slane %v761, 4
  %v763 = vsel %vm173, %v762, %v236
  %v765 = vshrl.u32 %v93, 16
  %v767 = vrot.slane %v765, 4
  %v768 = vshll.u32 %v93, 16
  %v770 = vrot.slane %v768, 5
  %v771 = vor.u32 %v767, %v770
  %v772 = vrot.slane %v771, 4
  %v773 = vsel %vm173, %v772, %v250
  %v775 = vshrl.u32 %v100, 16
  %v777 = vrot.slane %v775, 4
  %v778 = vshll.u32 %v100, 16
  %v780 = vrot.slane %v778, 5
  %v781 = vor.u32 %v777, %v780
  %v782 = vrot.slane %v781, 4
  %v783 = vsel %vm173, %v782, %v264
  %v785 = vshrl.u32 %v107, 16
  %v787 = vrot.slane %v785, 4
  %v788 = vshll.u32 %v107, 16
  %v790 = vrot.slane %v788, 5
  %v791 = vor.u32 %v787, %v790
  %v792 = vrot.slane %v791, 4
  %v793 = vsel %vm173, %v792, %v278
  %v795 = vshrl.u32 %v114, 16
  %v797 = vrot.slane %v795, 4
  %v798 = vshll.u32 %v114, 16
  %v800 = vrot.slane %v798, 5
  %v801 = vor.u32 %v797, %v800
  %v802 = vrot.slane %v801, 4
  %v803 = vsel %vm173, %v802, %v292
  %v805 = vshrl.u32 %v121, 16
  %v807 = vrot.slane %v805, 4
  %v808 = vshll.u32 %v121, 16
  %v810 = vrot.slane %v808, 5
  %v811 = vor.u32 %v807, %v810
  %v812 = vrot.slane %v811, 4
  %v813 = vsel %vm173, %v812, %v306
  %v815 = vshrl.u32 %v128, 16
  %v817 = vrot.slane %v815, 4
  %v818 = vshll.u32 %v128, 16
  %v820 = vrot.slane %v818, 5
  %v821 = vor.u32 %v817, %v820
  %v822 = vrot.slane %v821, 4
  %v823 = vsel %vm173, %v822, %v320
  %v825 = vshrl.u32 %v135, 16
  %v827 = vrot.slane %v825, 4
  %v828 = vshll.u32 %v135, 16
  %v830 = vrot.slane %v828, 5
  %v831 = vor.u32 %v827, %v830
  %v832 = vrot.slane %v831, 4
  %v833 = vsel %vm173, %v832, %v334
  %v835 = vshrl.u32 %v142, 16
  %v837 = vrot.slane %v835, 4
  %v838 = vshll.u32 %v142, 16
  %v840 = vrot.slane %v838, 5
  %v841 = vor.u32 %v837, %v840
  %v842 = vrot.slane %v841, 4
  %v843 = vsel %vm173, %v842, %v348
  %v845 = vshrl.u32 %v149, 16
  %v847 = vrot.slane %v845, 4
  %v848 = vshll.u32 %v149, 16
  %v850 = vrot.slane %v848, 5
  %v851 = vor.u32 %v847, %v850
  %v852 = vrot.slane %v851, 4
  %v853 = vsel %vm173, %v852, %v362
  %v855 = vshrl.u32 %v156, 16
  %v857 = vrot.slane %v855, 4
  %v858 = vshll.u32 %v156, 16
  %v860 = vrot.slane %v858, 5
  %v861 = vor.u32 %v857, %v860
  %v862 = vrot.slane %v861, 4
  %v863 = vsel %vm173, %v862, %v376
  %v865 = vshrl.u32 %v163, 16
  %v867 = vrot.slane %v865, 4
  %v868 = vshll.u32 %v163, 16
  %v870 = vrot.slane %v868, 5
  %v871 = vor.u32 %v867, %v870
  %v872 = vrot.slane %v871, 4
  %v873 = vsel %vm173, %v872, %v390
  %s874 = scalar_lea.vmem %s1, 4
  %v875 = vld [vmem:[%s874] sm:$0x3]
  %v876 = vunpack.c.l.b16 %v723
  %v877 = vunpack.c.l.b16 %v733
  %v878 = vunpack.c.l.b16 %v743
  %v879 = vunpack.c.l.b16 %v753
  %v880 = vunpack.c.l.b16 %v763
  %v881 = vunpack.c.l.b16 %v773
  %v882 = vunpack.c.l.b16 %v783
  %v883 = vunpack.c.l.b16 %v793
  %v884 = vunpack.c.l.b16 %v803
  %v885 = vunpack.c.l.b16 %v813
  %v886 = vunpack.c.l.b16 %v823
  %v887 = vunpack.c.l.b16 %v833
  %v888 = vunpack.c.l.b16 %v843
  %v889 = vunpack.c.l.b16 %v853
  %v890 = vunpack.c.l.b16 %v863
  %v891 = vunpack.c.l.b16 %v873
  %v892 = vpack.c.b16 %v877, %v876
  %v893 = vpack.c.b16 %v879, %v878
  %v894 = vpack.c.b16 %v881, %v880
  %v895 = vpack.c.b16 %v883, %v882
  %v896 = vpack.c.b16 %v885, %v884
  %v897 = vpack.c.b16 %v887, %v886
  %v898 = vpack.c.b16 %v889, %v888
  %v899 = vpack.c.b16 %v891, %v890
  %v901 = vsel %vm424, %v892, 0
  %v904 = vsel %vm424, %v893, 0
  %v907 = vsel %vm424, %v894, 0
  %v910 = vsel %vm424, %v895, 0
  %v913 = vsel %vm424, %v896, 0
  %v916 = vsel %vm424, %v897, 0
  %v919 = vsel %vm424, %v898, 0
  %v922 = vsel %vm424, %v899, 0
  %v925 = vsel %vm449, %v875, 0
  %927 = vmatprep.subr.bf16.mxu0 0
  %928 = vmatpush1.bf16.msra.mxu0 %v925
  %929 = vmatprep.subr.bf16.mxu0 0
  %930 = vmatpush1.bf16.msra.mxu0 0
  %931 = vmatprep.subr.bf16.mxu0 0
  %932 = vmatpush1.bf16.msra.mxu0 0
  %933 = vmatprep.subr.bf16.mxu0 0
  %934 = vmatpush1.bf16.msra.mxu0 0
  %935 = vmatprep.subr.bf16.mxu0 0
  %936 = vmatpush1.bf16.msra.mxu0 0
  %937 = vmatprep.subr.bf16.mxu0 0
  %938 = vmatpush1.bf16.msra.mxu0 0
  %939 = vmatprep.subr.bf16.mxu0 0
  %940 = vmatpush1.bf16.msra.mxu0 0
  %941 = vmatprep.subr.bf16.mxu0 0
  %942 = vmatpush1.bf16.msra.mxu0 0
  %943 = vmatprep.subr.bf16.mxu0 0
  %944 = vmatpush1.bf16.msra.mxu0 0
  %945 = vmatprep.subr.bf16.mxu0 0
  %946 = vmatpush1.bf16.msra.mxu0 0
  %947 = vmatprep.subr.bf16.mxu0 0
  %948 = vmatpush1.bf16.msra.mxu0 0
  %949 = vmatprep.subr.bf16.mxu0 0
  %950 = vmatpush1.bf16.msra.mxu0 0
  %951 = vmatprep.subr.bf16.mxu0 0
  %952 = vmatpush1.bf16.msra.mxu0 0
  %953 = vmatprep.subr.bf16.mxu0 0
  %954 = vmatpush1.bf16.msra.mxu0 0
  %955 = vmatprep.subr.bf16.mxu0 0
  %956 = vmatpush1.bf16.msra.mxu0 0
  %957 = vmatprep.subr.bf16.mxu0 0
  %958 = vmatpush1.bf16.msra.mxu0 0
  %959 = vmatprep.mubr.bf16.mxu0 0
  %960 = vmatmul.mubr.bf16.gmra.mrb[0].mxu0 %v901
  %v961 = vpop.f32.mrb[0].mxu0
  %v962 = vadd.f32 0.0, %v961
  %v963 = vpop.f32.mrb[0].mxu0
  %v964 = vpop.f32.mrb[0].mxu0
  %v965 = vadd.f32 0.0, %v964
  %v966 = vpop.f32.mrb[0].mxu0
  %967 = vmatprep.mubr.bf16.mxu0 0
  %968 = vmatmul.mubr.bf16.gmra.mrb[0].mxu0 %v904
  %v969 = vpop.f32.mrb[0].mxu0
  %v970 = vadd.f32 0.0, %v969
  %v971 = vpop.f32.mrb[0].mxu0
  %v972 = vpop.f32.mrb[0].mxu0
  %v973 = vadd.f32 0.0, %v972
  %v974 = vpop.f32.mrb[0].mxu0
  %975 = vmatprep.mubr.bf16.mxu0 0
  %976 = vmatmul.mubr.bf16.gmra.mrb[0].mxu0 %v907
  %v977 = vpop.f32.mrb[0].mxu0
  %v978 = vadd.f32 0.0, %v977
  %v979 = vpop.f32.mrb[0].mxu0
  %v980 = vpop.f32.mrb[0].mxu0
  %v981 = vadd.f32 0.0, %v980
  %v982 = vpop.f32.mrb[0].mxu0
  %983 = vmatprep.mubr.bf16.mxu0 0
  %984 = vmatmul.mubr.bf16.gmra.mrb[0].mxu0 %v910
  %v985 = vpop.f32.mrb[0].mxu0
  %v986 = vadd.f32 0.0, %v985
  %v987 = vpop.f32.mrb[0].mxu0
  %v988 = vpop.f32.mrb[0].mxu0
  %v989 = vadd.f32 0.0, %v988
  %v990 = vpop.f32.mrb[0].mxu0
  %991 = vmatprep.mubr.bf16.mxu0 0
  %992 = vmatmul.mubr.bf16.gmra.mrb[0].mxu0 %v913
  %v993 = vpop.f32.mrb[0].mxu0
  %v994 = vadd.f32 0.0, %v993
  %v995 = vpop.f32.mrb[0].mxu0
  %v996 = vpop.f32.mrb[0].mxu0
  %v997 = vadd.f32 0.0, %v996
  %v998 = vpop.f32.mrb[0].mxu0
  %999 = vmatprep.mubr.bf16.mxu0 0
  %1000 = vmatmul.mubr.bf16.gmra.mrb[0].mxu0 %v916
  %v1001 = vpop.f32.mrb[0].mxu0
  %v1002 = vadd.f32 0.0, %v1001
  %v1003 = vpop.f32.mrb[0].mxu0
  %v1004 = vpop.f32.mrb[0].mxu0
  %v1005 = vadd.f32 0.0, %v1004
  %v1006 = vpop.f32.mrb[0].mxu0
  %1007 = vmatprep.mubr.bf16.mxu0 0
  %1008 = vmatmul.mubr.bf16.gmra.mrb[0].mxu0 %v919
  %v1009 = vpop.f32.mrb[0].mxu0
  %v1010 = vadd.f32 0.0, %v1009
  %v1011 = vpop.f32.mrb[0].mxu0
  %v1012 = vpop.f32.mrb[0].mxu0
  %v1013 = vadd.f32 0.0, %v1012
  %v1014 = vpop.f32.mrb[0].mxu0
  %1015 = vmatprep.mubr.bf16.mxu0 0
  %1016 = vmatmul.mubr.bf16.gmra.mrb[0].mxu0 %v922
  %v1017 = vpop.f32.mrb[0].mxu0
  %v1018 = vadd.f32 0.0, %v1017
  %v1019 = vpop.f32.mrb[0].mxu0
  %v1020 = vpop.f32.mrb[0].mxu0
  %v1021 = vadd.f32 0.0, %v1020
  %v1022 = vpop.f32.mrb[0].mxu0
  %1023 = vdwg.mxu0
  %v1024 = vadd.f32 %v652, %v962
  %v1025 = vadd.f32 %v655, %v965
  %v1026 = vadd.f32 %v660, %v970
  %v1027 = vadd.f32 %v663, %v973
  %v1028 = vadd.f32 %v668, %v978
  %v1029 = vadd.f32 %v671, %v981
  %v1030 = vadd.f32 %v676, %v986
  %v1031 = vadd.f32 %v679, %v989
  %v1032 = vadd.f32 %v684, %v994
  %v1033 = vadd.f32 %v687, %v997
  %v1034 = vadd.f32 %v692, %v1002
  %v1035 = vadd.f32 %v695, %v1005
  %v1036 = vadd.f32 %v700, %v1010
  %v1037 = vadd.f32 %v703, %v1013
  %v1038 = vadd.f32 %v708, %v1018
  %v1039 = vadd.f32 %v711, %v1021
  %vm1072 = vcmask 1042432
  %vm1073 = vcmask 1046532
  %vm1074 = vmor %vm1072, %vm1073
  %v1075 = vrot.slane %v60, 5
  %v1076 = vrot.slane %v1075, 4
  %v1077 = vrot.slane %v61, 5
  %v1078 = vsel %vm1074, %v1076, %v1077
  %v1079 = vrot.slane %v67, 5
  %v1080 = vrot.slane %v1079, 4
  %v1081 = vrot.slane %v68, 5
  %v1082 = vsel %vm1074, %v1080, %v1081
  %v1083 = vrot.slane %v74, 5
  %v1084 = vrot.slane %v1083, 4
  %v1085 = vrot.slane %v75, 5
  %v1086 = vsel %vm1074, %v1084, %v1085
  %v1087 = vrot.slane %v81, 5
  %v1088 = vrot.slane %v1087, 4
  %v1089 = vrot.slane %v82, 5
  %v1090 = vsel %vm1074, %v1088, %v1089
  %v1091 = vrot.slane %v88, 5
  %v1092 = vrot.slane %v1091, 4
  %v1093 = vrot.slane %v89, 5
  %v1094 = vsel %vm1074, %v1092, %v1093
  %v1095 = vrot.slane %v95, 5
  %v1096 = vrot.slane %v1095, 4
  %v1097 = vrot.slane %v96, 5
  %v1098 = vsel %vm1074, %v1096, %v1097
  %v1099 = vrot.slane %v102, 5
  %v1100 = vrot.slane %v1099, 4
  %v1101 = vrot.slane %v103, 5
  %v1102 = vsel %vm1074, %v1100, %v1101
  %v1103 = vrot.slane %v109, 5
  %v1104 = vrot.slane %v1103, 4
  %v1105 = vrot.slane %v110, 5
  %v1106 = vsel %vm1074, %v1104, %v1105
  %v1107 = vrot.slane %v116, 5
  %v1108 = vrot.slane %v1107, 4
  %v1109 = vrot.slane %v117, 5
  %v1110 = vsel %vm1074, %v1108, %v1109
  %v1111 = vrot.slane %v123, 5
  %v1112 = vrot.slane %v1111, 4
  %v1113 = vrot.slane %v124, 5
  %v1114 = vsel %vm1074, %v1112, %v1113
  %v1115 = vrot.slane %v130, 5
  %v1116 = vrot.slane %v1115, 4
  %v1117 = vrot.slane %v131, 5
  %v1118 = vsel %vm1074, %v1116, %v1117
  %v1119 = vrot.slane %v137, 5
  %v1120 = vrot.slane %v1119, 4
  %v1121 = vrot.slane %v138, 5
  %v1122 = vsel %vm1074, %v1120, %v1121
  %v1123 = vrot.slane %v144, 5
  %v1124 = vrot.slane %v1123, 4
  %v1125 = vrot.slane %v145, 5
  %v1126 = vsel %vm1074, %v1124, %v1125
  %v1127 = vrot.slane %v151, 5
  %v1128 = vrot.slane %v1127, 4
  %v1129 = vrot.slane %v152, 5
  %v1130 = vsel %vm1074, %v1128, %v1129
  %v1131 = vrot.slane %v158, 5
  %v1132 = vrot.slane %v1131, 4
  %v1133 = vrot.slane %v159, 5
  %v1134 = vsel %vm1074, %v1132, %v1133
  %v1135 = vrot.slane %v165, 5
  %v1136 = vrot.slane %v1135, 4
  %v1137 = vrot.slane %v166, 5
  %v1138 = vsel %vm1074, %v1136, %v1137
  %s1139 = scalar_lea.vmem %s1, 6
  %v1140 = vld [vmem:[%s1139] sm:$0x3]
  %v1141 = vunpack.c.l.b16 %v1078
  %v1142 = vunpack.c.l.b16 %v1082
  %v1143 = vunpack.c.l.b16 %v1086
  %v1144 = vunpack.c.l.b16 %v1090
  %v1145 = vunpack.c.l.b16 %v1094
  %v1146 = vunpack.c.l.b16 %v1098
  %v1147 = vunpack.c.l.b16 %v1102
  %v1148 = vunpack.c.l.b16 %v1106
  %v1149 = vunpack.c.l.b16 %v1110
  %v1150 = vunpack.c.l.b16 %v1114
  %v1151 = vunpack.c.l.b16 %v1118
  %v1152 = vunpack.c.l.b16 %v1122
  %v1153 = vunpack.c.l.b16 %v1126
  %v1154 = vunpack.c.l.b16 %v1130
  %v1155 = vunpack.c.l.b16 %v1134
  %v1156 = vunpack.c.l.b16 %v1138
  %v1157 = vpack.c.b16 %v1142, %v1141
  %v1158 = vpack.c.b16 %v1144, %v1143
  %v1159 = vpack.c.b16 %v1146, %v1145
  %v1160 = vpack.c.b16 %v1148, %v1147
  %v1161 = vpack.c.b16 %v1150, %v1149
  %v1162 = vpack.c.b16 %v1152, %v1151
  %v1163 = vpack.c.b16 %v1154, %v1153
  %v1164 = vpack.c.b16 %v1156, %v1155
  %v1166 = vsel %vm424, %v1157, 0
  %v1169 = vsel %vm424, %v1158, 0
  %v1172 = vsel %vm424, %v1159, 0
  %v1175 = vsel %vm424, %v1160, 0
  %v1178 = vsel %vm424, %v1161, 0
  %v1181 = vsel %vm424, %v1162, 0
  %v1184 = vsel %vm424, %v1163, 0
  %v1187 = vsel %vm424, %v1164, 0
  %v1190 = vsel %vm449, %v1140, 0
  %1192 = vmatprep.subr.bf16.mxu0 0
  %1193 = vmatpush1.bf16.msra.mxu0 %v1190
  %1194 = vmatprep.subr.bf16.mxu0 0
  %1195 = vmatpush1.bf16.msra.mxu0 0
  %1196 = vmatprep.subr.bf16.mxu0 0
  %1197 = vmatpush1.bf16.msra.mxu0 0
  %1198 = vmatprep.subr.bf16.mxu0 0
  %1199 = vmatpush1.bf16.msra.mxu0 0
  %1200 = vmatprep.subr.bf16.mxu0 0
  %1201 = vmatpush1.bf16.msra.mxu0 0
  %1202 = vmatprep.subr.bf16.mxu0 0
  %1203 = vmatpush1.bf16.msra.mxu0 0
  %1204 = vmatprep.subr.bf16.mxu0 0
  %1205 = vmatpush1.bf16.msra.mxu0 0
  %1206 = vmatprep.subr.bf16.mxu0 0
  %1207 = vmatpush1.bf16.msra.mxu0 0
  %1208 = vmatprep.subr.bf16.mxu0 0
  %1209 = vmatpush1.bf16.msra.mxu0 0
  %1210 = vmatprep.subr.bf16.mxu0 0
  %1211 = vmatpush1.bf16.msra.mxu0 0
  %1212 = vmatprep.subr.bf16.mxu0 0
  %1213 = vmatpush1.bf16.msra.mxu0 0
  %1214 = vmatprep.subr.bf16.mxu0 0
  %1215 = vmatpush1.bf16.msra.mxu0 0
  %1216 = vmatprep.subr.bf16.mxu0 0
  %1217 = vmatpush1.bf16.msra.mxu0 0
  %1218 = vmatprep.subr.bf16.mxu0 0
  %1219 = vmatpush1.bf16.msra.mxu0 0
  %1220 = vmatprep.subr.bf16.mxu0 0
  %1221 = vmatpush1.bf16.msra.mxu0 0
  %1222 = vmatprep.subr.bf16.mxu0 0
  %1223 = vmatpush1.bf16.msra.mxu0 0
  %1224 = vmatprep.mubr.bf16.mxu0 0
  %1225 = vmatmul.mubr.bf16.gmra.mrb[0].mxu0 %v1166
  %v1226 = vpop.f32.mrb[0].mxu0
  %v1227 = vadd.f32 0.0, %v1226
  %v1228 = vpop.f32.mrb[0].mxu0
  %v1229 = vpop.f32.mrb[0].mxu0
  %v1230 = vadd.f32 0.0, %v1229
  %v1231 = vpop.f32.mrb[0].mxu0
  %1232 = vmatprep.mubr.bf16.mxu0 0
  %1233 = vmatmul.mubr.bf16.gmra.mrb[0].mxu0 %v1169
  %v1234 = vpop.f32.mrb[0].mxu0
  %v1235 = vadd.f32 0.0, %v1234
  %v1236 = vpop.f32.mrb[0].mxu0
  %v1237 = vpop.f32.mrb[0].mxu0
  %v1238 = vadd.f32 0.0, %v1237
  %v1239 = vpop.f32.mrb[0].mxu0
  %1240 = vmatprep.mubr.bf16.mxu0 0
  %1241 = vmatmul.mubr.bf16.gmra.mrb[0].mxu0 %v1172
  %v1242 = vpop.f32.mrb[0].mxu0
  %v1243 = vadd.f32 0.0, %v1242
  %v1244 = vpop.f32.mrb[0].mxu0
  %v1245 = vpop.f32.mrb[0].mxu0
  %v1246 = vadd.f32 0.0, %v1245
  %v1247 = vpop.f32.mrb[0].mxu0
  %1248 = vmatprep.mubr.bf16.mxu0 0
  %1249 = vmatmul.mubr.bf16.gmra.mrb[0].mxu0 %v1175
  %v1250 = vpop.f32.mrb[0].mxu0
  %v1251 = vadd.f32 0.0, %v1250
  %v1252 = vpop.f32.mrb[0].mxu0
  %v1253 = vpop.f32.mrb[0].mxu0
  %v1254 = vadd.f32 0.0, %v1253
  %v1255 = vpop.f32.mrb[0].mxu0
  %1256 = vmatprep.mubr.bf16.mxu0 0
  %1257 = vmatmul.mubr.bf16.gmra.mrb[0].mxu0 %v1178
  %v1258 = vpop.f32.mrb[0].mxu0
  %v1259 = vadd.f32 0.0, %v1258
  %v1260 = vpop.f32.mrb[0].mxu0
  %v1261 = vpop.f32.mrb[0].mxu0
  %v1262 = vadd.f32 0.0, %v1261
  %v1263 = vpop.f32.mrb[0].mxu0
  %1264 = vmatprep.mubr.bf16.mxu0 0
  %1265 = vmatmul.mubr.bf16.gmra.mrb[0].mxu0 %v1181
  %v1266 = vpop.f32.mrb[0].mxu0
  %v1267 = vadd.f32 0.0, %v1266
  %v1268 = vpop.f32.mrb[0].mxu0
  %v1269 = vpop.f32.mrb[0].mxu0
  %v1270 = vadd.f32 0.0, %v1269
  %v1271 = vpop.f32.mrb[0].mxu0
  %1272 = vmatprep.mubr.bf16.mxu0 0
  %1273 = vmatmul.mubr.bf16.gmra.mrb[0].mxu0 %v1184
  %v1274 = vpop.f32.mrb[0].mxu0
  %v1275 = vadd.f32 0.0, %v1274
  %v1276 = vpop.f32.mrb[0].mxu0
  %v1277 = vpop.f32.mrb[0].mxu0
  %v1278 = vadd.f32 0.0, %v1277
  %v1279 = vpop.f32.mrb[0].mxu0
  %1280 = vmatprep.mubr.bf16.mxu0 0
  %1281 = vmatmul.mubr.bf16.gmra.mrb[0].mxu0 %v1187
  %v1282 = vpop.f32.mrb[0].mxu0
  %v1283 = vadd.f32 0.0, %v1282
  %v1284 = vpop.f32.mrb[0].mxu0
  %v1285 = vpop.f32.mrb[0].mxu0
  %v1286 = vadd.f32 0.0, %v1285
  %v1287 = vpop.f32.mrb[0].mxu0
  %1288 = vdwg.mxu0
  %v1289 = vadd.f32 %v1024, %v1227
  %v1290 = vadd.f32 %v1025, %v1230
  %v1291 = vadd.f32 %v1026, %v1235
  %v1292 = vadd.f32 %v1027, %v1238
  %v1293 = vadd.f32 %v1028, %v1243
  %v1294 = vadd.f32 %v1029, %v1246
  %v1295 = vadd.f32 %v1030, %v1251
  %v1296 = vadd.f32 %v1031, %v1254
  %v1297 = vadd.f32 %v1032, %v1259
  %v1298 = vadd.f32 %v1033, %v1262
  %v1299 = vadd.f32 %v1034, %v1267
  %v1300 = vadd.f32 %v1035, %v1270
  %v1301 = vadd.f32 %v1036, %v1275
  %v1302 = vadd.f32 %v1037, %v1278
  %v1303 = vadd.f32 %v1038, %v1283
  %v1304 = vadd.f32 %v1039, %v1286
  %vm1305 = vsmask.f32 2304
  %vm1306 = vsmask.f32 6416
  %vm1307 = vmor %vm1305, %vm1306
  %v1309 = vshrl.u32 %v61, 16
  %v1311 = vrot.slane %v1309, 5
  %v1312 = vshll.u32 %v61, 16
  %v1314 = vrot.slane %v1312, 6
  %v1315 = vor.u32 %v1311, %v1314
  %v1316 = vrot.slane %v1315, 4
  %v1318 = vshrl.u32 %v62, 16
  %v1320 = vrot.slane %v1318, 5
  %v1321 = vshll.u32 %v62, 16
  %v1323 = vrot.slane %v1321, 6
  %v1324 = vor.u32 %v1320, %v1323
  %v1325 = vsel %vm1307, %v1316, %v1324
  %v1327 = vshrl.u32 %v68, 16
  %v1329 = vrot.slane %v1327, 5
  %v1330 = vshll.u32 %v68, 16
  %v1332 = vrot.slane %v1330, 6
  %v1333 = vor.u32 %v1329, %v1332
  %v1334 = vrot.slane %v1333, 4
  %v1336 = vshrl.u32 %v69, 16
  %v1338 = vrot.slane %v1336, 5
  %v1339 = vshll.u32 %v69, 16
  %v1341 = vrot.slane %v1339, 6
  %v1342 = vor.u32 %v1338, %v1341
  %v1343 = vsel %vm1307, %v1334, %v1342
  %v1345 = vshrl.u32 %v75, 16
  %v1347 = vrot.slane %v1345, 5
  %v1348 = vshll.u32 %v75, 16
  %v1350 = vrot.slane %v1348, 6
  %v1351 = vor.u32 %v1347, %v1350
  %v1352 = vrot.slane %v1351, 4
  %v1354 = vshrl.u32 %v76, 16
  %v1356 = vrot.slane %v1354, 5
  %v1357 = vshll.u32 %v76, 16
  %v1359 = vrot.slane %v1357, 6
  %v1360 = vor.u32 %v1356, %v1359
  %v1361 = vsel %vm1307, %v1352, %v1360
  %v1363 = vshrl.u32 %v82, 16
  %v1365 = vrot.slane %v1363, 5
  %v1366 = vshll.u32 %v82, 16
  %v1368 = vrot.slane %v1366, 6
  %v1369 = vor.u32 %v1365, %v1368
  %v1370 = vrot.slane %v1369, 4
  %v1372 = vshrl.u32 %v83, 16
  %v1374 = vrot.slane %v1372, 5
  %v1375 = vshll.u32 %v83, 16
  %v1377 = vrot.slane %v1375, 6
  %v1378 = vor.u32 %v1374, %v1377
  %v1379 = vsel %vm1307, %v1370, %v1378
  %v1381 = vshrl.u32 %v89, 16
  %v1383 = vrot.slane %v1381, 5
  %v1384 = vshll.u32 %v89, 16
  %v1386 = vrot.slane %v1384, 6
  %v1387 = vor.u32 %v1383, %v1386
  %v1388 = vrot.slane %v1387, 4
  %v1390 = vshrl.u32 %v90, 16
  %v1392 = vrot.slane %v1390, 5
  %v1393 = vshll.u32 %v90, 16
  %v1395 = vrot.slane %v1393, 6
  %v1396 = vor.u32 %v1392, %v1395
  %v1397 = vsel %vm1307, %v1388, %v1396
  %v1399 = vshrl.u32 %v96, 16
  %v1401 = vrot.slane %v1399, 5
  %v1402 = vshll.u32 %v96, 16
  %v1404 = vrot.slane %v1402, 6
  %v1405 = vor.u32 %v1401, %v1404
  %v1406 = vrot.slane %v1405, 4
  %v1408 = vshrl.u32 %v97, 16
  %v1410 = vrot.slane %v1408, 5
  %v1411 = vshll.u32 %v97, 16
  %v1413 = vrot.slane %v1411, 6
  %v1414 = vor.u32 %v1410, %v1413
  %v1415 = vsel %vm1307, %v1406, %v1414
  %v1417 = vshrl.u32 %v103, 16
  %v1419 = vrot.slane %v1417, 5
  %v1420 = vshll.u32 %v103, 16
  %v1422 = vrot.slane %v1420, 6
  %v1423 = vor.u32 %v1419, %v1422
  %v1424 = vrot.slane %v1423, 4
  %v1426 = vshrl.u32 %v104, 16
  %v1428 = vrot.slane %v1426, 5
  %v1429 = vshll.u32 %v104, 16
  %v1431 = vrot.slane %v1429, 6
  %v1432 = vor.u32 %v1428, %v1431
  %v1433 = vsel %vm1307, %v1424, %v1432
  %v1435 = vshrl.u32 %v110, 16
  %v1437 = vrot.slane %v1435, 5
  %v1438 = vshll.u32 %v110, 16
  %v1440 = vrot.slane %v1438, 6
  %v1441 = vor.u32 %v1437, %v1440
  %v1442 = vrot.slane %v1441, 4
  %v1444 = vshrl.u32 %v111, 16
  %v1446 = vrot.slane %v1444, 5
  %v1447 = vshll.u32 %v111, 16
  %v1449 = vrot.slane %v1447, 6
  %v1450 = vor.u32 %v1446, %v1449
  %v1451 = vsel %vm1307, %v1442, %v1450
  %v1453 = vshrl.u32 %v117, 16
  %v1455 = vrot.slane %v1453, 5
  %v1456 = vshll.u32 %v117, 16
  %v1458 = vrot.slane %v1456, 6
  %v1459 = vor.u32 %v1455, %v1458
  %v1460 = vrot.slane %v1459, 4
  %v1462 = vshrl.u32 %v118, 16
  %v1464 = vrot.slane %v1462, 5
  %v1465 = vshll.u32 %v118, 16
  %v1467 = vrot.slane %v1465, 6
  %v1468 = vor.u32 %v1464, %v1467
  %v1469 = vsel %vm1307, %v1460, %v1468
  %v1471 = vshrl.u32 %v124, 16
  %v1473 = vrot.slane %v1471, 5
  %v1474 = vshll.u32 %v124, 16
  %v1476 = vrot.slane %v1474, 6
  %v1477 = vor.u32 %v1473, %v1476
  %v1478 = vrot.slane %v1477, 4
  %v1480 = vshrl.u32 %v125, 16
  %v1482 = vrot.slane %v1480, 5
  %v1483 = vshll.u32 %v125, 16
  %v1485 = vrot.slane %v1483, 6
  %v1486 = vor.u32 %v1482, %v1485
  %v1487 = vsel %vm1307, %v1478, %v1486
  %v1489 = vshrl.u32 %v131, 16
  %v1491 = vrot.slane %v1489, 5
  %v1492 = vshll.u32 %v131, 16
  %v1494 = vrot.slane %v1492, 6
  %v1495 = vor.u32 %v1491, %v1494
  %v1496 = vrot.slane %v1495, 4
  %v1498 = vshrl.u32 %v132, 16
  %v1500 = vrot.slane %v1498, 5
  %v1501 = vshll.u32 %v132, 16
  %v1503 = vrot.slane %v1501, 6
  %v1504 = vor.u32 %v1500, %v1503
  %v1505 = vsel %vm1307, %v1496, %v1504
  %v1507 = vshrl.u32 %v138, 16
  %v1509 = vrot.slane %v1507, 5
  %v1510 = vshll.u32 %v138, 16
  %v1512 = vrot.slane %v1510, 6
  %v1513 = vor.u32 %v1509, %v1512
  %v1514 = vrot.slane %v1513, 4
  %v1516 = vshrl.u32 %v139, 16
  %v1518 = vrot.slane %v1516, 5
  %v1519 = vshll.u32 %v139, 16
  %v1521 = vrot.slane %v1519, 6
  %v1522 = vor.u32 %v1518, %v1521
  %v1523 = vsel %vm1307, %v1514, %v1522
  %v1525 = vshrl.u32 %v145, 16
  %v1527 = vrot.slane %v1525, 5
  %v1528 = vshll.u32 %v145, 16
  %v1530 = vrot.slane %v1528, 6
  %v1531 = vor.u32 %v1527, %v1530
  %v1532 = vrot.slane %v1531, 4
  %v1534 = vshrl.u32 %v146, 16
  %v1536 = vrot.slane %v1534, 5
  %v1537 = vshll.u32 %v146, 16
  %v1539 = vrot.slane %v1537, 6
  %v1540 = vor.u32 %v1536, %v1539
  %v1541 = vsel %vm1307, %v1532, %v1540
  %v1543 = vshrl.u32 %v152, 16
  %v1545 = vrot.slane %v1543, 5
  %v1546 = vshll.u32 %v152, 16
  %v1548 = vrot.slane %v1546, 6
  %v1549 = vor.u32 %v1545, %v1548
  %v1550 = vrot.slane %v1549, 4
  %v1552 = vshrl.u32 %v153, 16
  %v1554 = vrot.slane %v1552, 5
  %v1555 = vshll.u32 %v153, 16
  %v1557 = vrot.slane %v1555, 6
  %v1558 = vor.u32 %v1554, %v1557
  %v1559 = vsel %vm1307, %v1550, %v1558
  %v1561 = vshrl.u32 %v159, 16
  %v1563 = vrot.slane %v1561, 5
  %v1564 = vshll.u32 %v159, 16
  %v1566 = vrot.slane %v1564, 6
  %v1567 = vor.u32 %v1563, %v1566
  %v1568 = vrot.slane %v1567, 4
  %v1570 = vshrl.u32 %v160, 16
  %v1572 = vrot.slane %v1570, 5
  %v1573 = vshll.u32 %v160, 16
  %v1575 = vrot.slane %v1573, 6
  %v1576 = vor.u32 %v1572, %v1575
  %v1577 = vsel %vm1307, %v1568, %v1576
  %v1579 = vshrl.u32 %v166, 16
  %v1581 = vrot.slane %v1579, 5
  %v1582 = vshll.u32 %v166, 16
  %v1584 = vrot.slane %v1582, 6
  %v1585 = vor.u32 %v1581, %v1584
  %v1586 = vrot.slane %v1585, 4
  %v1588 = vshrl.u32 %v167, 16
  %v1590 = vrot.slane %v1588, 5
  %v1591 = vshll.u32 %v167, 16
  %v1593 = vrot.slane %v1591, 6
  %v1594 = vor.u32 %v1590, %v1593
  %v1595 = vsel %vm1307, %v1586, %v1594
  %s1596 = scalar_lea.vmem %s1, 8
  %v1597 = vld [vmem:[%s1596] sm:$0x3]
  %v1598 = vunpack.c.l.b16 %v1325
  %v1599 = vunpack.c.l.b16 %v1343
  %v1600 = vunpack.c.l.b16 %v1361
  %v1601 = vunpack.c.l.b16 %v1379
  %v1602 = vunpack.c.l.b16 %v1397
  %v1603 = vunpack.c.l.b16 %v1415
  %v1604 = vunpack.c.l.b16 %v1433
  %v1605 = vunpack.c.l.b16 %v1451
  %v1606 = vunpack.c.l.b16 %v1469
  %v1607 = vunpack.c.l.b16 %v1487
  %v1608 = vunpack.c.l.b16 %v1505
  %v1609 = vunpack.c.l.b16 %v1523
  %v1610 = vunpack.c.l.b16 %v1541
  %v1611 = vunpack.c.l.b16 %v1559
  %v1612 = vunpack.c.l.b16 %v1577
  %v1613 = vunpack.c.l.b16 %v1595
  %v1614 = vpack.c.b16 %v1599, %v1598
  %v1615 = vpack.c.b16 %v1601, %v1600
  %v1616 = vpack.c.b16 %v1603, %v1602
  %v1617 = vpack.c.b16 %v1605, %v1604
  %v1618 = vpack.c.b16 %v1607, %v1606
  %v1619 = vpack.c.b16 %v1609, %v1608
  %v1620 = vpack.c.b16 %v1611, %v1610
  %v1621 = vpack.c.b16 %v1613, %v1612
  %v1623 = vsel %vm424, %v1614, 0
  %v1626 = vsel %vm424, %v1615, 0
  %v1629 = vsel %vm424, %v1616, 0
  %v1632 = vsel %vm424, %v1617, 0
  %v1635 = vsel %vm424, %v1618, 0
  %v1638 = vsel %vm424, %v1619, 0
  %v1641 = vsel %vm424, %v1620, 0
  %v1644 = vsel %vm424, %v1621, 0
  %v1647 = vsel %vm449, %v1597, 0
  %1649 = vmatprep.subr.bf16.mxu0 0
  %1650 = vmatpush1.bf16.msra.mxu0 %v1647
  %1651 = vmatprep.subr.bf16.mxu0 0
  %1652 = vmatpush1.bf16.msra.mxu0 0
  %1653 = vmatprep.subr.bf16.mxu0 0
  %1654 = vmatpush1.bf16.msra.mxu0 0
  %1655 = vmatprep.subr.bf16.mxu0 0
  %1656 = vmatpush1.bf16.msra.mxu0 0
  %1657 = vmatprep.subr.bf16.mxu0 0
  %1658 = vmatpush1.bf16.msra.mxu0 0
  %1659 = vmatprep.subr.bf16.mxu0 0
  %1660 = vmatpush1.bf16.msra.mxu0 0
  %1661 = vmatprep.subr.bf16.mxu0 0
  %1662 = vmatpush1.bf16.msra.mxu0 0
  %1663 = vmatprep.subr.bf16.mxu0 0
  %1664 = vmatpush1.bf16.msra.mxu0 0
  %1665 = vmatprep.subr.bf16.mxu0 0
  %1666 = vmatpush1.bf16.msra.mxu0 0
  %1667 = vmatprep.subr.bf16.mxu0 0
  %1668 = vmatpush1.bf16.msra.mxu0 0
  %1669 = vmatprep.subr.bf16.mxu0 0
  %1670 = vmatpush1.bf16.msra.mxu0 0
  %1671 = vmatprep.subr.bf16.mxu0 0
  %1672 = vmatpush1.bf16.msra.mxu0 0
  %1673 = vmatprep.subr.bf16.mxu0 0
  %1674 = vmatpush1.bf16.msra.mxu0 0
  %1675 = vmatprep.subr.bf16.mxu0 0
  %1676 = vmatpush1.bf16.msra.mxu0 0
  %1677 = vmatprep.subr.bf16.mxu0 0
  %1678 = vmatpush1.bf16.msra.mxu0 0
  %1679 = vmatprep.subr.bf16.mxu0 0
  %1680 = vmatpush1.bf16.msra.mxu0 0
  %1681 = vmatprep.mubr.bf16.mxu0 0
  %1682 = vmatmul.mubr.bf16.gmra.mrb[0].mxu0 %v1623
  %v1683 = vpop.f32.mrb[0].mxu0
  %v1684 = vadd.f32 0.0, %v1683
  %v1685 = vpop.f32.mrb[0].mxu0
  %v1686 = vpop.f32.mrb[0].mxu0
  %v1687 = vadd.f32 0.0, %v1686
  %v1688 = vpop.f32.mrb[0].mxu0
  %1689 = vmatprep.mubr.bf16.mxu0 0
  %1690 = vmatmul.mubr.bf16.gmra.mrb[0].mxu0 %v1626
  %v1691 = vpop.f32.mrb[0].mxu0
  %v1692 = vadd.f32 0.0, %v1691
  %v1693 = vpop.f32.mrb[0].mxu0
  %v1694 = vpop.f32.mrb[0].mxu0
  %v1695 = vadd.f32 0.0, %v1694
  %v1696 = vpop.f32.mrb[0].mxu0
  %1697 = vmatprep.mubr.bf16.mxu0 0
  %1698 = vmatmul.mubr.bf16.gmra.mrb[0].mxu0 %v1629
  %v1699 = vpop.f32.mrb[0].mxu0
  %v1700 = vadd.f32 0.0, %v1699
  %v1701 = vpop.f32.mrb[0].mxu0
  %v1702 = vpop.f32.mrb[0].mxu0
  %v1703 = vadd.f32 0.0, %v1702
  %v1704 = vpop.f32.mrb[0].mxu0
  %1705 = vmatprep.mubr.bf16.mxu0 0
  %1706 = vmatmul.mubr.bf16.gmra.mrb[0].mxu0 %v1632
  %v1707 = vpop.f32.mrb[0].mxu0
  %v1708 = vadd.f32 0.0, %v1707
  %v1709 = vpop.f32.mrb[0].mxu0
  %v1710 = vpop.f32.mrb[0].mxu0
  %v1711 = vadd.f32 0.0, %v1710
  %v1712 = vpop.f32.mrb[0].mxu0
  %1713 = vmatprep.mubr.bf16.mxu0 0
  %1714 = vmatmul.mubr.bf16.gmra.mrb[0].mxu0 %v1635
  %v1715 = vpop.f32.mrb[0].mxu0
  %v1716 = vadd.f32 0.0, %v1715
  %v1717 = vpop.f32.mrb[0].mxu0
  %v1718 = vpop.f32.mrb[0].mxu0
  %v1719 = vadd.f32 0.0, %v1718
  %v1720 = vpop.f32.mrb[0].mxu0
  %1721 = vmatprep.mubr.bf16.mxu0 0
  %1722 = vmatmul.mubr.bf16.gmra.mrb[0].mxu0 %v1638
  %v1723 = vpop.f32.mrb[0].mxu0
  %v1724 = vadd.f32 0.0, %v1723
  %v1725 = vpop.f32.mrb[0].mxu0
  %v1726 = vpop.f32.mrb[0].mxu0
  %v1727 = vadd.f32 0.0, %v1726
  %v1728 = vpop.f32.mrb[0].mxu0
  %1729 = vmatprep.mubr.bf16.mxu0 0
  %1730 = vmatmul.mubr.bf16.gmra.mrb[0].mxu0 %v1641
  %v1731 = vpop.f32.mrb[0].mxu0
  %v1732 = vadd.f32 0.0, %v1731
  %v1733 = vpop.f32.mrb[0].mxu0
  %v1734 = vpop.f32.mrb[0].mxu0
  %v1735 = vadd.f32 0.0, %v1734
  %v1736 = vpop.f32.mrb[0].mxu0
  %1737 = vmatprep.mubr.bf16.mxu0 0
  %1738 = vmatmul.mubr.bf16.gmra.mrb[0].mxu0 %v1644
  %v1739 = vpop.f32.mrb[0].mxu0
  %v1740 = vadd.f32 0.0, %v1739
  %v1741 = vpop.f32.mrb[0].mxu0
  %v1742 = vpop.f32.mrb[0].mxu0
  %v1743 = vadd.f32 0.0, %v1742
  %v1744 = vpop.f32.mrb[0].mxu0
  %1745 = vdwg.mxu0
  %v1746 = vadd.f32 %v1289, %v1684
  %v1747 = vadd.f32 %v1290, %v1687
  %v1748 = vadd.f32 %v1291, %v1692
  %v1749 = vadd.f32 %v1292, %v1695
  %v1750 = vadd.f32 %v1293, %v1700
  %v1751 = vadd.f32 %v1294, %v1703
  %v1752 = vadd.f32 %v1295, %v1708
  %v1753 = vadd.f32 %v1296, %v1711
  %v1754 = vadd.f32 %v1297, %v1716
  %v1755 = vadd.f32 %v1298, %v1719
  %v1756 = vadd.f32 %v1299, %v1724
  %v1757 = vadd.f32 %v1300, %v1727
  %v1758 = vadd.f32 %v1301, %v1732
  %v1759 = vadd.f32 %v1302, %v1735
  %v1760 = vadd.f32 %v1303, %v1740
  %v1761 = vadd.f32 %v1304, %v1743
  %v1762 = vshrl.u32 %v60, 16
  %v1764 = vrot.slane %v1762, 5
  %v1765 = vrot.slane %v184, 6
  %v1766 = vor.u32 %v1764, %v1765
  %v1767 = vrot.slane %v1766, 4
  %v1768 = vsel %vm1307, %v1767, %v1315
  %v1769 = vshrl.u32 %v67, 16
  %v1771 = vrot.slane %v1769, 5
  %v1772 = vrot.slane %v198, 6
  %v1773 = vor.u32 %v1771, %v1772
  %v1774 = vrot.slane %v1773, 4
  %v1775 = vsel %vm1307, %v1774, %v1333
  %v1776 = vshrl.u32 %v74, 16
  %v1778 = vrot.slane %v1776, 5
  %v1779 = vrot.slane %v212, 6
  %v1780 = vor.u32 %v1778, %v1779
  %v1781 = vrot.slane %v1780, 4
  %v1782 = vsel %vm1307, %v1781, %v1351
  %v1783 = vshrl.u32 %v81, 16
  %v1785 = vrot.slane %v1783, 5
  %v1786 = vrot.slane %v226, 6
  %v1787 = vor.u32 %v1785, %v1786
  %v1788 = vrot.slane %v1787, 4
  %v1789 = vsel %vm1307, %v1788, %v1369
  %v1790 = vshrl.u32 %v88, 16
  %v1792 = vrot.slane %v1790, 5
  %v1793 = vrot.slane %v240, 6
  %v1794 = vor.u32 %v1792, %v1793
  %v1795 = vrot.slane %v1794, 4
  %v1796 = vsel %vm1307, %v1795, %v1387
  %v1797 = vshrl.u32 %v95, 16
  %v1799 = vrot.slane %v1797, 5
  %v1800 = vrot.slane %v254, 6
  %v1801 = vor.u32 %v1799, %v1800
  %v1802 = vrot.slane %v1801, 4
  %v1803 = vsel %vm1307, %v1802, %v1405
  %v1804 = vshrl.u32 %v102, 16
  %v1806 = vrot.slane %v1804, 5
  %v1807 = vrot.slane %v268, 6
  %v1808 = vor.u32 %v1806, %v1807
  %v1809 = vrot.slane %v1808, 4
  %v1810 = vsel %vm1307, %v1809, %v1423
  %v1811 = vshrl.u32 %v109, 16
  %v1813 = vrot.slane %v1811, 5
  %v1814 = vrot.slane %v282, 6
  %v1815 = vor.u32 %v1813, %v1814
  %v1816 = vrot.slane %v1815, 4
  %v1817 = vsel %vm1307, %v1816, %v1441
  %v1818 = vshrl.u32 %v116, 16
  %v1820 = vrot.slane %v1818, 5
  %v1821 = vrot.slane %v296, 6
  %v1822 = vor.u32 %v1820, %v1821
  %v1823 = vrot.slane %v1822, 4
  %v1824 = vsel %vm1307, %v1823, %v1459
  %v1825 = vshrl.u32 %v123, 16
  %v1827 = vrot.slane %v1825, 5
  %v1828 = vrot.slane %v310, 6
  %v1829 = vor.u32 %v1827, %v1828
  %v1830 = vrot.slane %v1829, 4
  %v1831 = vsel %vm1307, %v1830, %v1477
  %v1832 = vshrl.u32 %v130, 16
  %v1834 = vrot.slane %v1832, 5
  %v1835 = vrot.slane %v324, 6
  %v1836 = vor.u32 %v1834, %v1835
  %v1837 = vrot.slane %v1836, 4
  %v1838 = vsel %vm1307, %v1837, %v1495
  %v1839 = vshrl.u32 %v137, 16
  %v1841 = vrot.slane %v1839, 5
  %v1842 = vrot.slane %v338, 6
  %v1843 = vor.u32 %v1841, %v1842
  %v1844 = vrot.slane %v1843, 4
  %v1845 = vsel %vm1307, %v1844, %v1513
  %v1846 = vshrl.u32 %v144, 16
  %v1848 = vrot.slane %v1846, 5
  %v1849 = vrot.slane %v352, 6
  %v1850 = vor.u32 %v1848, %v1849
  %v1851 = vrot.slane %v1850, 4
  %v1852 = vsel %vm1307, %v1851, %v1531
  %v1853 = vshrl.u32 %v151, 16
  %v1855 = vrot.slane %v1853, 5
  %v1856 = vrot.slane %v366, 6
  %v1857 = vor.u32 %v1855, %v1856
  %v1858 = vrot.slane %v1857, 4
  %v1859 = vsel %vm1307, %v1858, %v1549
  %v1860 = vshrl.u32 %v158, 16
  %v1862 = vrot.slane %v1860, 5
  %v1863 = vrot.slane %v380, 6
  %v1864 = vor.u32 %v1862, %v1863
  %v1865 = vrot.slane %v1864, 4
  %v1866 = vsel %vm1307, %v1865, %v1567
  %v1867 = vshrl.u32 %v165, 16
  %v1869 = vrot.slane %v1867, 5
  %v1870 = vrot.slane %v394, 6
  %v1871 = vor.u32 %v1869, %v1870
  %v1872 = vrot.slane %v1871, 4
  %v1873 = vsel %vm1307, %v1872, %v1585
  %s1874 = scalar_lea.vmem %s1, 10
  %v1875 = vld [vmem:[%s1874] sm:$0x3]
  %v1876 = vunpack.c.l.b16 %v1768
  %v1877 = vunpack.c.l.b16 %v1775
  %v1878 = vunpack.c.l.b16 %v1782
  %v1879 = vunpack.c.l.b16 %v1789
  %v1880 = vunpack.c.l.b16 %v1796
  %v1881 = vunpack.c.l.b16 %v1803
  %v1882 = vunpack.c.l.b16 %v1810
  %v1883 = vunpack.c.l.b16 %v1817
  %v1884 = vunpack.c.l.b16 %v1824
  %v1885 = vunpack.c.l.b16 %v1831
  %v1886 = vunpack.c.l.b16 %v1838
  %v1887 = vunpack.c.l.b16 %v1845
  %v1888 = vunpack.c.l.b16 %v1852
  %v1889 = vunpack.c.l.b16 %v1859
  %v1890 = vunpack.c.l.b16 %v1866
  %v1891 = vunpack.c.l.b16 %v1873
  %v1892 = vpack.c.b16 %v1877, %v1876
  %v1893 = vpack.c.b16 %v1879, %v1878
  %v1894 = vpack.c.b16 %v1881, %v1880
  %v1895 = vpack.c.b16 %v1883, %v1882
  %v1896 = vpack.c.b16 %v1885, %v1884
  %v1897 = vpack.c.b16 %v1887, %v1886
  %v1898 = vpack.c.b16 %v1889, %v1888
  %v1899 = vpack.c.b16 %v1891, %v1890
  %v1901 = vsel %vm424, %v1892, 0
  %v1904 = vsel %vm424, %v1893, 0
  %v1907 = vsel %vm424, %v1894, 0
  %v1910 = vsel %vm424, %v1895, 0
  %v1913 = vsel %vm424, %v1896, 0
  %v1916 = vsel %vm424, %v1897, 0
  %v1919 = vsel %vm424, %v1898, 0
  %v1922 = vsel %vm424, %v1899, 0
  %v1925 = vsel %vm449, %v1875, 0
  %1927 = vmatprep.subr.bf16.mxu0 0
  %1928 = vmatpush1.bf16.msra.mxu0 %v1925
  %1929 = vmatprep.subr.bf16.mxu0 0
  %1930 = vmatpush1.bf16.msra.mxu0 0
  %1931 = vmatprep.subr.bf16.mxu0 0
  %1932 = vmatpush1.bf16.msra.mxu0 0
  %1933 = vmatprep.subr.bf16.mxu0 0
  %1934 = vmatpush1.bf16.msra.mxu0 0
  %1935 = vmatprep.subr.bf16.mxu0 0
  %1936 = vmatpush1.bf16.msra.mxu0 0
  %1937 = vmatprep.subr.bf16.mxu0 0
  %1938 = vmatpush1.bf16.msra.mxu0 0
  %1939 = vmatprep.subr.bf16.mxu0 0
  %1940 = vmatpush1.bf16.msra.mxu0 0
  %1941 = vmatprep.subr.bf16.mxu0 0
  %1942 = vmatpush1.bf16.msra.mxu0 0
  %1943 = vmatprep.subr.bf16.mxu0 0
  %1944 = vmatpush1.bf16.msra.mxu0 0
  %1945 = vmatprep.subr.bf16.mxu0 0
  %1946 = vmatpush1.bf16.msra.mxu0 0
  %1947 = vmatprep.subr.bf16.mxu0 0
  %1948 = vmatpush1.bf16.msra.mxu0 0
  %1949 = vmatprep.subr.bf16.mxu0 0
  %1950 = vmatpush1.bf16.msra.mxu0 0
  %1951 = vmatprep.subr.bf16.mxu0 0
  %1952 = vmatpush1.bf16.msra.mxu0 0
  %1953 = vmatprep.subr.bf16.mxu0 0
  %1954 = vmatpush1.bf16.msra.mxu0 0
  %1955 = vmatprep.subr.bf16.mxu0 0
  %1956 = vmatpush1.bf16.msra.mxu0 0
  %1957 = vmatprep.subr.bf16.mxu0 0
  %1958 = vmatpush1.bf16.msra.mxu0 0
  %1959 = vmatprep.mubr.bf16.mxu0 0
  %1960 = vmatmul.mubr.bf16.gmra.mrb[0].mxu0 %v1901
  %v1961 = vpop.f32.mrb[0].mxu0
  %v1962 = vadd.f32 0.0, %v1961
  %v1963 = vpop.f32.mrb[0].mxu0
  %v1964 = vpop.f32.mrb[0].mxu0
  %v1965 = vadd.f32 0.0, %v1964
  %v1966 = vpop.f32.mrb[0].mxu0
  %1967 = vmatprep.mubr.bf16.mxu0 0
  %1968 = vmatmul.mubr.bf16.gmra.mrb[0].mxu0 %v1904
  %v1969 = vpop.f32.mrb[0].mxu0
  %v1970 = vadd.f32 0.0, %v1969
  %v1971 = vpop.f32.mrb[0].mxu0
  %v1972 = vpop.f32.mrb[0].mxu0
  %v1973 = vadd.f32 0.0, %v1972
  %v1974 = vpop.f32.mrb[0].mxu0
  %1975 = vmatprep.mubr.bf16.mxu0 0
  %1976 = vmatmul.mubr.bf16.gmra.mrb[0].mxu0 %v1907
  %v1977 = vpop.f32.mrb[0].mxu0
  %v1978 = vadd.f32 0.0, %v1977
  %v1979 = vpop.f32.mrb[0].mxu0
  %v1980 = vpop.f32.mrb[0].mxu0
  %v1981 = vadd.f32 0.0, %v1980
  %v1982 = vpop.f32.mrb[0].mxu0
  %1983 = vmatprep.mubr.bf16.mxu0 0
  %1984 = vmatmul.mubr.bf16.gmra.mrb[0].mxu0 %v1910
  %v1985 = vpop.f32.mrb[0].mxu0
  %v1986 = vadd.f32 0.0, %v1985
  %v1987 = vpop.f32.mrb[0].mxu0
  %v1988 = vpop.f32.mrb[0].mxu0
  %v1989 = vadd.f32 0.0, %v1988
  %v1990 = vpop.f32.mrb[0].mxu0
  %1991 = vmatprep.mubr.bf16.mxu0 0
  %1992 = vmatmul.mubr.bf16.gmra.mrb[0].mxu0 %v1913
  %v1993 = vpop.f32.mrb[0].mxu0
  %v1994 = vadd.f32 0.0, %v1993
  %v1995 = vpop.f32.mrb[0].mxu0
  %v1996 = vpop.f32.mrb[0].mxu0
  %v1997 = vadd.f32 0.0, %v1996
  %v1998 = vpop.f32.mrb[0].mxu0
  %1999 = vmatprep.mubr.bf16.mxu0 0
  %2000 = vmatmul.mubr.bf16.gmra.mrb[0].mxu0 %v1916
  %v2001 = vpop.f32.mrb[0].mxu0
  %v2002 = vadd.f32 0.0, %v2001
  %v2003 = vpop.f32.mrb[0].mxu0
  %v2004 = vpop.f32.mrb[0].mxu0
  %v2005 = vadd.f32 0.0, %v2004
  %v2006 = vpop.f32.mrb[0].mxu0
  %2007 = vmatprep.mubr.bf16.mxu0 0
  %2008 = vmatmul.mubr.bf16.gmra.mrb[0].mxu0 %v1919
  %v2009 = vpop.f32.mrb[0].mxu0
  %v2010 = vadd.f32 0.0, %v2009
  %v2011 = vpop.f32.mrb[0].mxu0
  %v2012 = vpop.f32.mrb[0].mxu0
  %v2013 = vadd.f32 0.0, %v2012
  %v2014 = vpop.f32.mrb[0].mxu0
  %2015 = vmatprep.mubr.bf16.mxu0 0
  %2016 = vmatmul.mubr.bf16.gmra.mrb[0].mxu0 %v1922
  %v2017 = vpop.f32.mrb[0].mxu0
  %v2018 = vadd.f32 0.0, %v2017
  %v2019 = vpop.f32.mrb[0].mxu0
  %v2020 = vpop.f32.mrb[0].mxu0
  %v2021 = vadd.f32 0.0, %v2020
  %v2022 = vpop.f32.mrb[0].mxu0
  %2023 = vdwg.mxu0
  %v2024 = vadd.f32 %v1746, %v1962
  %v2025 = vadd.f32 %v1747, %v1965
  %v2026 = vadd.f32 %v1748, %v1970
  %v2027 = vadd.f32 %v1749, %v1973
  %v2028 = vadd.f32 %v1750, %v1978
  %v2029 = vadd.f32 %v1751, %v1981
  %v2030 = vadd.f32 %v1752, %v1986
  %v2031 = vadd.f32 %v1753, %v1989
  %v2032 = vadd.f32 %v1754, %v1994
  %v2033 = vadd.f32 %v1755, %v1997
  %v2034 = vadd.f32 %v1756, %v2002
  %v2035 = vadd.f32 %v1757, %v2005
  %v2036 = vadd.f32 %v1758, %v2010
  %v2037 = vadd.f32 %v1759, %v2013
  %v2038 = vadd.f32 %v1760, %v2018
  %v2039 = vadd.f32 %v1761, %v2021
  %vm2072 = vcmask 1041408
  %vm2073 = vcmask 1045508
  %vm2074 = vmor %vm2072, %vm2073
  %v2075 = vrot.slane %v62, 6
  %v2076 = vrot.slane %v2075, 4
  %v2077 = vrot.slane %v63, 6
  %v2078 = vsel %vm2074, %v2076, %v2077
  %v2079 = vrot.slane %v69, 6
  %v2080 = vrot.slane %v2079, 4
  %v2081 = vrot.slane %v70, 6
  %v2082 = vsel %vm2074, %v2080, %v2081
  %v2083 = vrot.slane %v76, 6
  %v2084 = vrot.slane %v2083, 4
  %v2085 = vrot.slane %v77, 6
  %v2086 = vsel %vm2074, %v2084, %v2085
  %v2087 = vrot.slane %v83, 6
  %v2088 = vrot.slane %v2087, 4
  %v2089 = vrot.slane %v84, 6
  %v2090 = vsel %vm2074, %v2088, %v2089
  %v2091 = vrot.slane %v90, 6
  %v2092 = vrot.slane %v2091, 4
  %v2093 = vrot.slane %v91, 6
  %v2094 = vsel %vm2074, %v2092, %v2093
  %v2095 = vrot.slane %v97, 6
  %v2096 = vrot.slane %v2095, 4
  %v2097 = vrot.slane %v98, 6
  %v2098 = vsel %vm2074, %v2096, %v2097
  %v2099 = vrot.slane %v104, 6
  %v2100 = vrot.slane %v2099, 4
  %v2101 = vrot.slane %v105, 6
  %v2102 = vsel %vm2074, %v2100, %v2101
  %v2103 = vrot.slane %v111, 6
  %v2104 = vrot.slane %v2103, 4
  %v2105 = vrot.slane %v112, 6
  %v2106 = vsel %vm2074, %v2104, %v2105
  %v2107 = vrot.slane %v118, 6
  %v2108 = vrot.slane %v2107, 4
  %v2109 = vrot.slane %v119, 6
  %v2110 = vsel %vm2074, %v2108, %v2109
  %v2111 = vrot.slane %v125, 6
  %v2112 = vrot.slane %v2111, 4
  %v2113 = vrot.slane %v126, 6
  %v2114 = vsel %vm2074, %v2112, %v2113
  %v2115 = vrot.slane %v132, 6
  %v2116 = vrot.slane %v2115, 4
  %v2117 = vrot.slane %v133, 6
  %v2118 = vsel %vm2074, %v2116, %v2117
  %v2119 = vrot.slane %v139, 6
  %v2120 = vrot.slane %v2119, 4
  %v2121 = vrot.slane %v140, 6
  %v2122 = vsel %vm2074, %v2120, %v2121
  %v2123 = vrot.slane %v146, 6
  %v2124 = vrot.slane %v2123, 4
  %v2125 = vrot.slane %v147, 6
  %v2126 = vsel %vm2074, %v2124, %v2125
  %v2127 = vrot.slane %v153, 6
  %v2128 = vrot.slane %v2127, 4
  %v2129 = vrot.slane %v154, 6
  %v2130 = vsel %vm2074, %v2128, %v2129
  %v2131 = vrot.slane %v160, 6
  %v2132 = vrot.slane %v2131, 4
  %v2133 = vrot.slane %v161, 6
  %v2134 = vsel %vm2074, %v2132, %v2133
  %v2135 = vrot.slane %v167, 6
  %v2136 = vrot.slane %v2135, 4
  %v2137 = vrot.slane %v168, 6
  %v2138 = vsel %vm2074, %v2136, %v2137
  %s2139 = scalar_lea.vmem %s1, 12
  %v2140 = vld [vmem:[%s2139] sm:$0x3]
  %v2141 = vunpack.c.l.b16 %v2078
  %v2142 = vunpack.c.l.b16 %v2082
  %v2143 = vunpack.c.l.b16 %v2086
  %v2144 = vunpack.c.l.b16 %v2090
  %v2145 = vunpack.c.l.b16 %v2094
  %v2146 = vunpack.c.l.b16 %v2098
  %v2147 = vunpack.c.l.b16 %v2102
  %v2148 = vunpack.c.l.b16 %v2106
  %v2149 = vunpack.c.l.b16 %v2110
  %v2150 = vunpack.c.l.b16 %v2114
  %v2151 = vunpack.c.l.b16 %v2118
  %v2152 = vunpack.c.l.b16 %v2122
  %v2153 = vunpack.c.l.b16 %v2126
  %v2154 = vunpack.c.l.b16 %v2130
  %v2155 = vunpack.c.l.b16 %v2134
  %v2156 = vunpack.c.l.b16 %v2138
  %v2157 = vpack.c.b16 %v2142, %v2141
  %v2158 = vpack.c.b16 %v2144, %v2143
  %v2159 = vpack.c.b16 %v2146, %v2145
  %v2160 = vpack.c.b16 %v2148, %v2147
  %v2161 = vpack.c.b16 %v2150, %v2149
  %v2162 = vpack.c.b16 %v2152, %v2151
  %v2163 = vpack.c.b16 %v2154, %v2153
  %v2164 = vpack.c.b16 %v2156, %v2155
  %v2166 = vsel %vm424, %v2157, 0
  %v2169 = vsel %vm424, %v2158, 0
  %v2172 = vsel %vm424, %v2159, 0
  %v2175 = vsel %vm424, %v2160, 0
  %v2178 = vsel %vm424, %v2161, 0
  %v2181 = vsel %vm424, %v2162, 0
  %v2184 = vsel %vm424, %v2163, 0
  %v2187 = vsel %vm424, %v2164, 0
  %v2190 = vsel %vm449, %v2140, 0
  %2192 = vmatprep.subr.bf16.mxu0 0
  %2193 = vmatpush1.bf16.msra.mxu0 %v2190
  %2194 = vmatprep.subr.bf16.mxu0 0
  %2195 = vmatpush1.bf16.msra.mxu0 0
  %2196 = vmatprep.subr.bf16.mxu0 0
  %2197 = vmatpush1.bf16.msra.mxu0 0
  %2198 = vmatprep.subr.bf16.mxu0 0
  %2199 = vmatpush1.bf16.msra.mxu0 0
  %2200 = vmatprep.subr.bf16.mxu0 0
  %2201 = vmatpush1.bf16.msra.mxu0 0
  %2202 = vmatprep.subr.bf16.mxu0 0
  %2203 = vmatpush1.bf16.msra.mxu0 0
  %2204 = vmatprep.subr.bf16.mxu0 0
  %2205 = vmatpush1.bf16.msra.mxu0 0
  %2206 = vmatprep.subr.bf16.mxu0 0
  %2207 = vmatpush1.bf16.msra.mxu0 0
  %2208 = vmatprep.subr.bf16.mxu0 0
  %2209 = vmatpush1.bf16.msra.mxu0 0
  %2210 = vmatprep.subr.bf16.mxu0 0
  %2211 = vmatpush1.bf16.msra.mxu0 0
  %2212 = vmatprep.subr.bf16.mxu0 0
  %2213 = vmatpush1.bf16.msra.mxu0 0
  %2214 = vmatprep.subr.bf16.mxu0 0
  %2215 = vmatpush1.bf16.msra.mxu0 0
  %2216 = vmatprep.subr.bf16.mxu0 0
  %2217 = vmatpush1.bf16.msra.mxu0 0
  %2218 = vmatprep.subr.bf16.mxu0 0
  %2219 = vmatpush1.bf16.msra.mxu0 0
  %2220 = vmatprep.subr.bf16.mxu0 0
  %2221 = vmatpush1.bf16.msra.mxu0 0
  %2222 = vmatprep.subr.bf16.mxu0 0
  %2223 = vmatpush1.bf16.msra.mxu0 0
  %2224 = vmatprep.mubr.bf16.mxu0 0
  %2225 = vmatmul.mubr.bf16.gmra.mrb[0].mxu0 %v2166
  %v2226 = vpop.f32.mrb[0].mxu0
  %v2227 = vadd.f32 0.0, %v2226
  %v2228 = vpop.f32.mrb[0].mxu0
  %v2229 = vpop.f32.mrb[0].mxu0
  %v2230 = vadd.f32 0.0, %v2229
  %v2231 = vpop.f32.mrb[0].mxu0
  %2232 = vmatprep.mubr.bf16.mxu0 0
  %2233 = vmatmul.mubr.bf16.gmra.mrb[0].mxu0 %v2169
  %v2234 = vpop.f32.mrb[0].mxu0
  %v2235 = vadd.f32 0.0, %v2234
  %v2236 = vpop.f32.mrb[0].mxu0
  %v2237 = vpop.f32.mrb[0].mxu0
  %v2238 = vadd.f32 0.0, %v2237
  %v2239 = vpop.f32.mrb[0].mxu0
  %2240 = vmatprep.mubr.bf16.mxu0 0
  %2241 = vmatmul.mubr.bf16.gmra.mrb[0].mxu0 %v2172
  %v2242 = vpop.f32.mrb[0].mxu0
  %v2243 = vadd.f32 0.0, %v2242
  %v2244 = vpop.f32.mrb[0].mxu0
  %v2245 = vpop.f32.mrb[0].mxu0
  %v2246 = vadd.f32 0.0, %v2245
  %v2247 = vpop.f32.mrb[0].mxu0
  %2248 = vmatprep.mubr.bf16.mxu0 0
  %2249 = vmatmul.mubr.bf16.gmra.mrb[0].mxu0 %v2175
  %v2250 = vpop.f32.mrb[0].mxu0
  %v2251 = vadd.f32 0.0, %v2250
  %v2252 = vpop.f32.mrb[0].mxu0
  %v2253 = vpop.f32.mrb[0].mxu0
  %v2254 = vadd.f32 0.0, %v2253
  %v2255 = vpop.f32.mrb[0].mxu0
  %2256 = vmatprep.mubr.bf16.mxu0 0
  %2257 = vmatmul.mubr.bf16.gmra.mrb[0].mxu0 %v2178
  %v2258 = vpop.f32.mrb[0].mxu0
  %v2259 = vadd.f32 0.0, %v2258
  %v2260 = vpop.f32.mrb[0].mxu0
  %v2261 = vpop.f32.mrb[0].mxu0
  %v2262 = vadd.f32 0.0, %v2261
  %v2263 = vpop.f32.mrb[0].mxu0
  %2264 = vmatprep.mubr.bf16.mxu0 0
  %2265 = vmatmul.mubr.bf16.gmra.mrb[0].mxu0 %v2181
  %v2266 = vpop.f32.mrb[0].mxu0
  %v2267 = vadd.f32 0.0, %v2266
  %v2268 = vpop.f32.mrb[0].mxu0
  %v2269 = vpop.f32.mrb[0].mxu0
  %v2270 = vadd.f32 0.0, %v2269
  %v2271 = vpop.f32.mrb[0].mxu0
  %2272 = vmatprep.mubr.bf16.mxu0 0
  %2273 = vmatmul.mubr.bf16.gmra.mrb[0].mxu0 %v2184
  %v2274 = vpop.f32.mrb[0].mxu0
  %v2275 = vadd.f32 0.0, %v2274
  %v2276 = vpop.f32.mrb[0].mxu0
  %v2277 = vpop.f32.mrb[0].mxu0
  %v2278 = vadd.f32 0.0, %v2277
  %v2279 = vpop.f32.mrb[0].mxu0
  %2280 = vmatprep.mubr.bf16.mxu0 0
  %2281 = vmatmul.mubr.bf16.gmra.mrb[0].mxu0 %v2187
  %v2282 = vpop.f32.mrb[0].mxu0
  %v2283 = vadd.f32 0.0, %v2282
  %v2284 = vpop.f32.mrb[0].mxu0
  %v2285 = vpop.f32.mrb[0].mxu0
  %v2286 = vadd.f32 0.0, %v2285
  %v2287 = vpop.f32.mrb[0].mxu0
  %2288 = vdwg.mxu0
  %v2289 = vadd.f32 %v2024, %v2227
  %v2290 = vadd.f32 %v2025, %v2230
  %v2291 = vadd.f32 %v2026, %v2235
  %v2292 = vadd.f32 %v2027, %v2238
  %v2293 = vadd.f32 %v2028, %v2243
  %v2294 = vadd.f32 %v2029, %v2246
  %v2295 = vadd.f32 %v2030, %v2251
  %v2296 = vadd.f32 %v2031, %v2254
  %v2297 = vadd.f32 %v2032, %v2259
  %v2298 = vadd.f32 %v2033, %v2262
  %v2299 = vadd.f32 %v2034, %v2267
  %v2300 = vadd.f32 %v2035, %v2270
  %v2301 = vadd.f32 %v2036, %v2275
  %v2302 = vadd.f32 %v2037, %v2278
  %v2303 = vadd.f32 %v2038, %v2283
  %v2304 = vadd.f32 %v2039, %v2286
  %vm2305 = vsmask.f32 1280
  %vm2306 = vsmask.f32 5392
  %vm2307 = vmor %vm2305, %vm2306
  %v2309 = vshrl.u32 %v63, 16
  %v2311 = vrot.slane %v2309, 6
  %v2312 = vshll.u32 %v63, 16
  %v2314 = vrot.slane %v2312, 7
  %v2315 = vor.u32 %v2311, %v2314
  %v2316 = vrot.slane %v2315, 4
  %v2318 = vshrl.u32 %v64, 16
  %v2320 = vrot.slane %v2318, 6
  %v2321 = vshll.u32 %v64, 16
  %v2323 = vrot.slane %v2321, 7
  %v2324 = vor.u32 %v2320, %v2323
  %v2325 = vsel %vm2307, %v2316, %v2324
  %v2327 = vshrl.u32 %v70, 16
  %v2329 = vrot.slane %v2327, 6
  %v2330 = vshll.u32 %v70, 16
  %v2332 = vrot.slane %v2330, 7
  %v2333 = vor.u32 %v2329, %v2332
  %v2334 = vrot.slane %v2333, 4
  %v2336 = vshrl.u32 %v71, 16
  %v2338 = vrot.slane %v2336, 6
  %v2339 = vshll.u32 %v71, 16
  %v2341 = vrot.slane %v2339, 7
  %v2342 = vor.u32 %v2338, %v2341
  %v2343 = vsel %vm2307, %v2334, %v2342
  %v2345 = vshrl.u32 %v77, 16
  %v2347 = vrot.slane %v2345, 6
  %v2348 = vshll.u32 %v77, 16
  %v2350 = vrot.slane %v2348, 7
  %v2351 = vor.u32 %v2347, %v2350
  %v2352 = vrot.slane %v2351, 4
  %v2354 = vshrl.u32 %v78, 16
  %v2356 = vrot.slane %v2354, 6
  %v2357 = vshll.u32 %v78, 16
  %v2359 = vrot.slane %v2357, 7
  %v2360 = vor.u32 %v2356, %v2359
  %v2361 = vsel %vm2307, %v2352, %v2360
  %v2363 = vshrl.u32 %v84, 16
  %v2365 = vrot.slane %v2363, 6
  %v2366 = vshll.u32 %v84, 16
  %v2368 = vrot.slane %v2366, 7
  %v2369 = vor.u32 %v2365, %v2368
  %v2370 = vrot.slane %v2369, 4
  %v2372 = vshrl.u32 %v85, 16
  %v2374 = vrot.slane %v2372, 6
  %v2375 = vshll.u32 %v85, 16
  %v2377 = vrot.slane %v2375, 7
  %v2378 = vor.u32 %v2374, %v2377
  %v2379 = vsel %vm2307, %v2370, %v2378
  %v2381 = vshrl.u32 %v91, 16
  %v2383 = vrot.slane %v2381, 6
  %v2384 = vshll.u32 %v91, 16
  %v2386 = vrot.slane %v2384, 7
  %v2387 = vor.u32 %v2383, %v2386
  %v2388 = vrot.slane %v2387, 4
  %v2390 = vshrl.u32 %v92, 16
  %v2392 = vrot.slane %v2390, 6
  %v2393 = vshll.u32 %v92, 16
  %v2395 = vrot.slane %v2393, 7
  %v2396 = vor.u32 %v2392, %v2395
  %v2397 = vsel %vm2307, %v2388, %v2396
  %v2399 = vshrl.u32 %v98, 16
  %v2401 = vrot.slane %v2399, 6
  %v2402 = vshll.u32 %v98, 16
  %v2404 = vrot.slane %v2402, 7
  %v2405 = vor.u32 %v2401, %v2404
  %v2406 = vrot.slane %v2405, 4
  %v2408 = vshrl.u32 %v99, 16
  %v2410 = vrot.slane %v2408, 6
  %v2411 = vshll.u32 %v99, 16
  %v2413 = vrot.slane %v2411, 7
  %v2414 = vor.u32 %v2410, %v2413
  %v2415 = vsel %vm2307, %v2406, %v2414
  %v2417 = vshrl.u32 %v105, 16
  %v2419 = vrot.slane %v2417, 6
  %v2420 = vshll.u32 %v105, 16
  %v2422 = vrot.slane %v2420, 7
  %v2423 = vor.u32 %v2419, %v2422
  %v2424 = vrot.slane %v2423, 4
  %v2426 = vshrl.u32 %v106, 16
  %v2428 = vrot.slane %v2426, 6
  %v2429 = vshll.u32 %v106, 16
  %v2431 = vrot.slane %v2429, 7
  %v2432 = vor.u32 %v2428, %v2431
  %v2433 = vsel %vm2307, %v2424, %v2432
  %v2435 = vshrl.u32 %v112, 16
  %v2437 = vrot.slane %v2435, 6
  %v2438 = vshll.u32 %v112, 16
  %v2440 = vrot.slane %v2438, 7
  %v2441 = vor.u32 %v2437, %v2440
  %v2442 = vrot.slane %v2441, 4
  %v2444 = vshrl.u32 %v113, 16
  %v2446 = vrot.slane %v2444, 6
  %v2447 = vshll.u32 %v113, 16
  %v2449 = vrot.slane %v2447, 7
  %v2450 = vor.u32 %v2446, %v2449
  %v2451 = vsel %vm2307, %v2442, %v2450
  %v2453 = vshrl.u32 %v119, 16
  %v2455 = vrot.slane %v2453, 6
  %v2456 = vshll.u32 %v119, 16
  %v2458 = vrot.slane %v2456, 7
  %v2459 = vor.u32 %v2455, %v2458
  %v2460 = vrot.slane %v2459, 4
  %v2462 = vshrl.u32 %v120, 16
  %v2464 = vrot.slane %v2462, 6
  %v2465 = vshll.u32 %v120, 16
  %v2467 = vrot.slane %v2465, 7
  %v2468 = vor.u32 %v2464, %v2467
  %v2469 = vsel %vm2307, %v2460, %v2468
  %v2471 = vshrl.u32 %v126, 16
  %v2473 = vrot.slane %v2471, 6
  %v2474 = vshll.u32 %v126, 16
  %v2476 = vrot.slane %v2474, 7
  %v2477 = vor.u32 %v2473, %v2476
  %v2478 = vrot.slane %v2477, 4
  %v2480 = vshrl.u32 %v127, 16
  %v2482 = vrot.slane %v2480, 6
  %v2483 = vshll.u32 %v127, 16
  %v2485 = vrot.slane %v2483, 7
  %v2486 = vor.u32 %v2482, %v2485
  %v2487 = vsel %vm2307, %v2478, %v2486
  %v2489 = vshrl.u32 %v133, 16
  %v2491 = vrot.slane %v2489, 6
  %v2492 = vshll.u32 %v133, 16
  %v2494 = vrot.slane %v2492, 7
  %v2495 = vor.u32 %v2491, %v2494
  %v2496 = vrot.slane %v2495, 4
  %v2498 = vshrl.u32 %v134, 16
  %v2500 = vrot.slane %v2498, 6
  %v2501 = vshll.u32 %v134, 16
  %v2503 = vrot.slane %v2501, 7
  %v2504 = vor.u32 %v2500, %v2503
  %v2505 = vsel %vm2307, %v2496, %v2504
  %v2507 = vshrl.u32 %v140, 16
  %v2509 = vrot.slane %v2507, 6
  %v2510 = vshll.u32 %v140, 16
  %v2512 = vrot.slane %v2510, 7
  %v2513 = vor.u32 %v2509, %v2512
  %v2514 = vrot.slane %v2513, 4
  %v2516 = vshrl.u32 %v141, 16
  %v2518 = vrot.slane %v2516, 6
  %v2519 = vshll.u32 %v141, 16
  %v2521 = vrot.slane %v2519, 7
  %v2522 = vor.u32 %v2518, %v2521
  %v2523 = vsel %vm2307, %v2514, %v2522
  %v2525 = vshrl.u32 %v147, 16
  %v2527 = vrot.slane %v2525, 6
  %v2528 = vshll.u32 %v147, 16
  %v2530 = vrot.slane %v2528, 7
  %v2531 = vor.u32 %v2527, %v2530
  %v2532 = vrot.slane %v2531, 4
  %v2534 = vshrl.u32 %v148, 16
  %v2536 = vrot.slane %v2534, 6
  %v2537 = vshll.u32 %v148, 16
  %v2539 = vrot.slane %v2537, 7
  %v2540 = vor.u32 %v2536, %v2539
  %v2541 = vsel %vm2307, %v2532, %v2540
  %v2543 = vshrl.u32 %v154, 16
  %v2545 = vrot.slane %v2543, 6
  %v2546 = vshll.u32 %v154, 16
  %v2548 = vrot.slane %v2546, 7
  %v2549 = vor.u32 %v2545, %v2548
  %v2550 = vrot.slane %v2549, 4
  %v2552 = vshrl.u32 %v155, 16
  %v2554 = vrot.slane %v2552, 6
  %v2555 = vshll.u32 %v155, 16
  %v2557 = vrot.slane %v2555, 7
  %v2558 = vor.u32 %v2554, %v2557
  %v2559 = vsel %vm2307, %v2550, %v2558
  %v2561 = vshrl.u32 %v161, 16
  %v2563 = vrot.slane %v2561, 6
  %v2564 = vshll.u32 %v161, 16
  %v2566 = vrot.slane %v2564, 7
  %v2567 = vor.u32 %v2563, %v2566
  %v2568 = vrot.slane %v2567, 4
  %v2570 = vshrl.u32 %v162, 16
  %v2572 = vrot.slane %v2570, 6
  %v2573 = vshll.u32 %v162, 16
  %v2575 = vrot.slane %v2573, 7
  %v2576 = vor.u32 %v2572, %v2575
  %v2577 = vsel %vm2307, %v2568, %v2576
  %v2579 = vshrl.u32 %v168, 16
  %v2581 = vrot.slane %v2579, 6
  %v2582 = vshll.u32 %v168, 16
  %v2584 = vrot.slane %v2582, 7
  %v2585 = vor.u32 %v2581, %v2584
  %v2586 = vrot.slane %v2585, 4
  %v2588 = vshrl.u32 %v169, 16
  %v2590 = vrot.slane %v2588, 6
  %v2591 = vshll.u32 %v169, 16
  %v2593 = vrot.slane %v2591, 7
  %v2594 = vor.u32 %v2590, %v2593
  %v2595 = vsel %vm2307, %v2586, %v2594
  %s2596 = scalar_lea.vmem %s1, 14
  %v2597 = vld [vmem:[%s2596] sm:$0x3]
  %v2598 = vunpack.c.l.b16 %v2325
  %v2599 = vunpack.c.l.b16 %v2343
  %v2600 = vunpack.c.l.b16 %v2361
  %v2601 = vunpack.c.l.b16 %v2379
  %v2602 = vunpack.c.l.b16 %v2397
  %v2603 = vunpack.c.l.b16 %v2415
  %v2604 = vunpack.c.l.b16 %v2433
  %v2605 = vunpack.c.l.b16 %v2451
  %v2606 = vunpack.c.l.b16 %v2469
  %v2607 = vunpack.c.l.b16 %v2487
  %v2608 = vunpack.c.l.b16 %v2505
  %v2609 = vunpack.c.l.b16 %v2523
  %v2610 = vunpack.c.l.b16 %v2541
  %v2611 = vunpack.c.l.b16 %v2559
  %v2612 = vunpack.c.l.b16 %v2577
  %v2613 = vunpack.c.l.b16 %v2595
  %v2614 = vpack.c.b16 %v2599, %v2598
  %v2615 = vpack.c.b16 %v2601, %v2600
  %v2616 = vpack.c.b16 %v2603, %v2602
  %v2617 = vpack.c.b16 %v2605, %v2604
  %v2618 = vpack.c.b16 %v2607, %v2606
  %v2619 = vpack.c.b16 %v2609, %v2608
  %v2620 = vpack.c.b16 %v2611, %v2610
  %v2621 = vpack.c.b16 %v2613, %v2612
  %v2623 = vsel %vm424, %v2614, 0
  %v2626 = vsel %vm424, %v2615, 0
  %v2629 = vsel %vm424, %v2616, 0
  %v2632 = vsel %vm424, %v2617, 0
  %v2635 = vsel %vm424, %v2618, 0
  %v2638 = vsel %vm424, %v2619, 0
  %v2641 = vsel %vm424, %v2620, 0
  %v2644 = vsel %vm424, %v2621, 0
  %v2647 = vsel %vm449, %v2597, 0
  %2649 = vmatprep.subr.bf16.mxu0 0
  %2650 = vmatpush1.bf16.msra.mxu0 %v2647
  %2651 = vmatprep.subr.bf16.mxu0 0
  %2652 = vmatpush1.bf16.msra.mxu0 0
  %2653 = vmatprep.subr.bf16.mxu0 0
  %2654 = vmatpush1.bf16.msra.mxu0 0
  %2655 = vmatprep.subr.bf16.mxu0 0
  %2656 = vmatpush1.bf16.msra.mxu0 0
  %2657 = vmatprep.subr.bf16.mxu0 0
  %2658 = vmatpush1.bf16.msra.mxu0 0
  %2659 = vmatprep.subr.bf16.mxu0 0
  %2660 = vmatpush1.bf16.msra.mxu0 0
  %2661 = vmatprep.subr.bf16.mxu0 0
  %2662 = vmatpush1.bf16.msra.mxu0 0
  %2663 = vmatprep.subr.bf16.mxu0 0
  %2664 = vmatpush1.bf16.msra.mxu0 0
  %2665 = vmatprep.subr.bf16.mxu0 0
  %2666 = vmatpush1.bf16.msra.mxu0 0
  %2667 = vmatprep.subr.bf16.mxu0 0
  %2668 = vmatpush1.bf16.msra.mxu0 0
  %2669 = vmatprep.subr.bf16.mxu0 0
  %2670 = vmatpush1.bf16.msra.mxu0 0
  %2671 = vmatprep.subr.bf16.mxu0 0
  %2672 = vmatpush1.bf16.msra.mxu0 0
  %2673 = vmatprep.subr.bf16.mxu0 0
  %2674 = vmatpush1.bf16.msra.mxu0 0
  %2675 = vmatprep.subr.bf16.mxu0 0
  %2676 = vmatpush1.bf16.msra.mxu0 0
  %2677 = vmatprep.subr.bf16.mxu0 0
  %2678 = vmatpush1.bf16.msra.mxu0 0
  %2679 = vmatprep.subr.bf16.mxu0 0
  %2680 = vmatpush1.bf16.msra.mxu0 0
  %2681 = vmatprep.mubr.bf16.mxu0 0
  %2682 = vmatmul.mubr.bf16.gmra.mrb[0].mxu0 %v2623
  %v2683 = vpop.f32.mrb[0].mxu0
  %v2684 = vadd.f32 0.0, %v2683
  %v2685 = vpop.f32.mrb[0].mxu0
  %v2686 = vpop.f32.mrb[0].mxu0
  %v2687 = vadd.f32 0.0, %v2686
  %v2688 = vpop.f32.mrb[0].mxu0
  %2689 = vmatprep.mubr.bf16.mxu0 0
  %2690 = vmatmul.mubr.bf16.gmra.mrb[0].mxu0 %v2626
  %v2691 = vpop.f32.mrb[0].mxu0
  %v2692 = vadd.f32 0.0, %v2691
  %v2693 = vpop.f32.mrb[0].mxu0
  %v2694 = vpop.f32.mrb[0].mxu0
  %v2695 = vadd.f32 0.0, %v2694
  %v2696 = vpop.f32.mrb[0].mxu0
  %2697 = vmatprep.mubr.bf16.mxu0 0
  %2698 = vmatmul.mubr.bf16.gmra.mrb[0].mxu0 %v2629
  %v2699 = vpop.f32.mrb[0].mxu0
  %v2700 = vadd.f32 0.0, %v2699
  %v2701 = vpop.f32.mrb[0].mxu0
  %v2702 = vpop.f32.mrb[0].mxu0
  %v2703 = vadd.f32 0.0, %v2702
  %v2704 = vpop.f32.mrb[0].mxu0
  %2705 = vmatprep.mubr.bf16.mxu0 0
  %2706 = vmatmul.mubr.bf16.gmra.mrb[0].mxu0 %v2632
  %v2707 = vpop.f32.mrb[0].mxu0
  %v2708 = vadd.f32 0.0, %v2707
  %v2709 = vpop.f32.mrb[0].mxu0
  %v2710 = vpop.f32.mrb[0].mxu0
  %v2711 = vadd.f32 0.0, %v2710
  %v2712 = vpop.f32.mrb[0].mxu0
  %2713 = vmatprep.mubr.bf16.mxu0 0
  %2714 = vmatmul.mubr.bf16.gmra.mrb[0].mxu0 %v2635
  %v2715 = vpop.f32.mrb[0].mxu0
  %v2716 = vadd.f32 0.0, %v2715
  %v2717 = vpop.f32.mrb[0].mxu0
  %v2718 = vpop.f32.mrb[0].mxu0
  %v2719 = vadd.f32 0.0, %v2718
  %v2720 = vpop.f32.mrb[0].mxu0
  %2721 = vmatprep.mubr.bf16.mxu0 0
  %2722 = vmatmul.mubr.bf16.gmra.mrb[0].mxu0 %v2638
  %v2723 = vpop.f32.mrb[0].mxu0
  %v2724 = vadd.f32 0.0, %v2723
  %v2725 = vpop.f32.mrb[0].mxu0
  %v2726 = vpop.f32.mrb[0].mxu0
  %v2727 = vadd.f32 0.0, %v2726
  %v2728 = vpop.f32.mrb[0].mxu0
  %2729 = vmatprep.mubr.bf16.mxu0 0
  %2730 = vmatmul.mubr.bf16.gmra.mrb[0].mxu0 %v2641
  %v2731 = vpop.f32.mrb[0].mxu0
  %v2732 = vadd.f32 0.0, %v2731
  %v2733 = vpop.f32.mrb[0].mxu0
  %v2734 = vpop.f32.mrb[0].mxu0
  %v2735 = vadd.f32 0.0, %v2734
  %v2736 = vpop.f32.mrb[0].mxu0
  %2737 = vmatprep.mubr.bf16.mxu0 0
  %2738 = vmatmul.mubr.bf16.gmra.mrb[0].mxu0 %v2644
  %v2739 = vpop.f32.mrb[0].mxu0
  %v2740 = vadd.f32 0.0, %v2739
  %v2741 = vpop.f32.mrb[0].mxu0
  %v2742 = vpop.f32.mrb[0].mxu0
  %v2743 = vadd.f32 0.0, %v2742
  %v2744 = vpop.f32.mrb[0].mxu0
  %2745 = vdwg.mxu0
  %v2746 = vadd.f32 %v2289, %v2684
  %v2747 = vadd.f32 %v2290, %v2687
  %v2748 = vadd.f32 %v2291, %v2692
  %v2749 = vadd.f32 %v2292, %v2695
  %v2750 = vadd.f32 %v2293, %v2700
  %v2751 = vadd.f32 %v2294, %v2703
  %v2752 = vadd.f32 %v2295, %v2708
  %v2753 = vadd.f32 %v2296, %v2711
  %v2754 = vadd.f32 %v2297, %v2716
  %v2755 = vadd.f32 %v2298, %v2719
  %v2756 = vadd.f32 %v2299, %v2724
  %v2757 = vadd.f32 %v2300, %v2727
  %v2758 = vadd.f32 %v2301, %v2732
  %v2759 = vadd.f32 %v2302, %v2735
  %v2760 = vadd.f32 %v2303, %v2740
  %v2761 = vadd.f32 %v2304, %v2743
  %v2762 = vrot.slane %v1318, 6
  %v2763 = vrot.slane %v1321, 7
  %v2764 = vor.u32 %v2762, %v2763
  %v2765 = vrot.slane %v2764, 4
  %v2766 = vsel %vm2307, %v2765, %v2315
  %v2767 = vrot.slane %v1336, 6
  %v2768 = vrot.slane %v1339, 7
  %v2769 = vor.u32 %v2767, %v2768
  %v2770 = vrot.slane %v2769, 4
  %v2771 = vsel %vm2307, %v2770, %v2333
  %v2772 = vrot.slane %v1354, 6
  %v2773 = vrot.slane %v1357, 7
  %v2774 = vor.u32 %v2772, %v2773
  %v2775 = vrot.slane %v2774, 4
  %v2776 = vsel %vm2307, %v2775, %v2351
  %v2777 = vrot.slane %v1372, 6
  %v2778 = vrot.slane %v1375, 7
  %v2779 = vor.u32 %v2777, %v2778
  %v2780 = vrot.slane %v2779, 4
  %v2781 = vsel %vm2307, %v2780, %v2369
  %v2782 = vrot.slane %v1390, 6
  %v2783 = vrot.slane %v1393, 7
  %v2784 = vor.u32 %v2782, %v2783
  %v2785 = vrot.slane %v2784, 4
  %v2786 = vsel %vm2307, %v2785, %v2387
  %v2787 = vrot.slane %v1408, 6
  %v2788 = vrot.slane %v1411, 7
  %v2789 = vor.u32 %v2787, %v2788
  %v2790 = vrot.slane %v2789, 4
  %v2791 = vsel %vm2307, %v2790, %v2405
  %v2792 = vrot.slane %v1426, 6
  %v2793 = vrot.slane %v1429, 7
  %v2794 = vor.u32 %v2792, %v2793
  %v2795 = vrot.slane %v2794, 4
  %v2796 = vsel %vm2307, %v2795, %v2423
  %v2797 = vrot.slane %v1444, 6
  %v2798 = vrot.slane %v1447, 7
  %v2799 = vor.u32 %v2797, %v2798
  %v2800 = vrot.slane %v2799, 4
  %v2801 = vsel %vm2307, %v2800, %v2441
  %v2802 = vrot.slane %v1462, 6
  %v2803 = vrot.slane %v1465, 7
  %v2804 = vor.u32 %v2802, %v2803
  %v2805 = vrot.slane %v2804, 4
  %v2806 = vsel %vm2307, %v2805, %v2459
  %v2807 = vrot.slane %v1480, 6
  %v2808 = vrot.slane %v1483, 7
  %v2809 = vor.u32 %v2807, %v2808
  %v2810 = vrot.slane %v2809, 4
  %v2811 = vsel %vm2307, %v2810, %v2477
  %v2812 = vrot.slane %v1498, 6
  %v2813 = vrot.slane %v1501, 7
  %v2814 = vor.u32 %v2812, %v2813
  %v2815 = vrot.slane %v2814, 4
  %v2816 = vsel %vm2307, %v2815, %v2495
  %v2817 = vrot.slane %v1516, 6
  %v2818 = vrot.slane %v1519, 7
  %v2819 = vor.u32 %v2817, %v2818
  %v2820 = vrot.slane %v2819, 4
  %v2821 = vsel %vm2307, %v2820, %v2513
  %v2822 = vrot.slane %v1534, 6
  %v2823 = vrot.slane %v1537, 7
  %v2824 = vor.u32 %v2822, %v2823
  %v2825 = vrot.slane %v2824, 4
  %v2826 = vsel %vm2307, %v2825, %v2531
  %v2827 = vrot.slane %v1552, 6
  %v2828 = vrot.slane %v1555, 7
  %v2829 = vor.u32 %v2827, %v2828
  %v2830 = vrot.slane %v2829, 4
  %v2831 = vsel %vm2307, %v2830, %v2549
  %v2832 = vrot.slane %v1570, 6
  %v2833 = vrot.slane %v1573, 7
  %v2834 = vor.u32 %v2832, %v2833
  %v2835 = vrot.slane %v2834, 4
  %v2836 = vsel %vm2307, %v2835, %v2567
  %v2837 = vrot.slane %v1588, 6
  %v2838 = vrot.slane %v1591, 7
  %v2839 = vor.u32 %v2837, %v2838
  %v2840 = vrot.slane %v2839, 4
  %v2841 = vsel %vm2307, %v2840, %v2585
  %s2842 = scalar_lea.vmem %s1, 16
  %v2843 = vld [vmem:[%s2842] sm:$0x3]
  %v2844 = vunpack.c.l.b16 %v2766
  %v2845 = vunpack.c.l.b16 %v2771
  %v2846 = vunpack.c.l.b16 %v2776
  %v2847 = vunpack.c.l.b16 %v2781
  %v2848 = vunpack.c.l.b16 %v2786
  %v2849 = vunpack.c.l.b16 %v2791
  %v2850 = vunpack.c.l.b16 %v2796
  %v2851 = vunpack.c.l.b16 %v2801
  %v2852 = vunpack.c.l.b16 %v2806
  %v2853 = vunpack.c.l.b16 %v2811
  %v2854 = vunpack.c.l.b16 %v2816
  %v2855 = vunpack.c.l.b16 %v2821
  %v2856 = vunpack.c.l.b16 %v2826
  %v2857 = vunpack.c.l.b16 %v2831
  %v2858 = vunpack.c.l.b16 %v2836
  %v2859 = vunpack.c.l.b16 %v2841
  %v2860 = vpack.c.b16 %v2845, %v2844
  %v2861 = vpack.c.b16 %v2847, %v2846
  %v2862 = vpack.c.b16 %v2849, %v2848
  %v2863 = vpack.c.b16 %v2851, %v2850
  %v2864 = vpack.c.b16 %v2853, %v2852
  %v2865 = vpack.c.b16 %v2855, %v2854
  %v2866 = vpack.c.b16 %v2857, %v2856
  %v2867 = vpack.c.b16 %v2859, %v2858
  %v2869 = vsel %vm424, %v2860, 0
  %v2872 = vsel %vm424, %v2861, 0
  %v2875 = vsel %vm424, %v2862, 0
  %v2878 = vsel %vm424, %v2863, 0
  %v2881 = vsel %vm424, %v2864, 0
  %v2884 = vsel %vm424, %v2865, 0
  %v2887 = vsel %vm424, %v2866, 0
  %v2890 = vsel %vm424, %v2867, 0
  %v2893 = vsel %vm449, %v2843, 0
  %2895 = vmatprep.subr.bf16.mxu0 0
  %2896 = vmatpush1.bf16.msra.mxu0 %v2893
  %2897 = vmatprep.subr.bf16.mxu0 0
  %2898 = vmatpush1.bf16.msra.mxu0 0
  %2899 = vmatprep.subr.bf16.mxu0 0
  %2900 = vmatpush1.bf16.msra.mxu0 0
  %2901 = vmatprep.subr.bf16.mxu0 0
  %2902 = vmatpush1.bf16.msra.mxu0 0
  %2903 = vmatprep.subr.bf16.mxu0 0
  %2904 = vmatpush1.bf16.msra.mxu0 0
  %2905 = vmatprep.subr.bf16.mxu0 0
  %2906 = vmatpush1.bf16.msra.mxu0 0
  %2907 = vmatprep.subr.bf16.mxu0 0
  %2908 = vmatpush1.bf16.msra.mxu0 0
  %2909 = vmatprep.subr.bf16.mxu0 0
  %2910 = vmatpush1.bf16.msra.mxu0 0
  %2911 = vmatprep.subr.bf16.mxu0 0
  %2912 = vmatpush1.bf16.msra.mxu0 0
  %2913 = vmatprep.subr.bf16.mxu0 0
  %2914 = vmatpush1.bf16.msra.mxu0 0
  %2915 = vmatprep.subr.bf16.mxu0 0
  %2916 = vmatpush1.bf16.msra.mxu0 0
  %2917 = vmatprep.subr.bf16.mxu0 0
  %2918 = vmatpush1.bf16.msra.mxu0 0
  %2919 = vmatprep.subr.bf16.mxu0 0
  %2920 = vmatpush1.bf16.msra.mxu0 0
  %2921 = vmatprep.subr.bf16.mxu0 0
  %2922 = vmatpush1.bf16.msra.mxu0 0
  %2923 = vmatprep.subr.bf16.mxu0 0
  %2924 = vmatpush1.bf16.msra.mxu0 0
  %2925 = vmatprep.subr.bf16.mxu0 0
  %2926 = vmatpush1.bf16.msra.mxu0 0
  %2927 = vmatprep.mubr.bf16.mxu0 0
  %2928 = vmatmul.mubr.bf16.gmra.mrb[0].mxu0 %v2869
  %v2929 = vpop.f32.mrb[0].mxu0
  %v2930 = vadd.f32 0.0, %v2929
  %v2931 = vpop.f32.mrb[0].mxu0
  %v2932 = vpop.f32.mrb[0].mxu0
  %v2933 = vadd.f32 0.0, %v2932
  %v2934 = vpop.f32.mrb[0].mxu0
  %2935 = vmatprep.mubr.bf16.mxu0 0
  %2936 = vmatmul.mubr.bf16.gmra.mrb[0].mxu0 %v2872
  %v2937 = vpop.f32.mrb[0].mxu0
  %v2938 = vadd.f32 0.0, %v2937
  %v2939 = vpop.f32.mrb[0].mxu0
  %v2940 = vpop.f32.mrb[0].mxu0
  %v2941 = vadd.f32 0.0, %v2940
  %v2942 = vpop.f32.mrb[0].mxu0
  %2943 = vmatprep.mubr.bf16.mxu0 0
  %2944 = vmatmul.mubr.bf16.gmra.mrb[0].mxu0 %v2875
  %v2945 = vpop.f32.mrb[0].mxu0
  %v2946 = vadd.f32 0.0, %v2945
  %v2947 = vpop.f32.mrb[0].mxu0
  %v2948 = vpop.f32.mrb[0].mxu0
  %v2949 = vadd.f32 0.0, %v2948
  %v2950 = vpop.f32.mrb[0].mxu0
  %2951 = vmatprep.mubr.bf16.mxu0 0
  %2952 = vmatmul.mubr.bf16.gmra.mrb[0].mxu0 %v2878
  %v2953 = vpop.f32.mrb[0].mxu0
  %v2954 = vadd.f32 0.0, %v2953
  %v2955 = vpop.f32.mrb[0].mxu0
  %v2956 = vpop.f32.mrb[0].mxu0
  %v2957 = vadd.f32 0.0, %v2956
  %v2958 = vpop.f32.mrb[0].mxu0
  %2959 = vmatprep.mubr.bf16.mxu0 0
  %2960 = vmatmul.mubr.bf16.gmra.mrb[0].mxu0 %v2881
  %v2961 = vpop.f32.mrb[0].mxu0
  %v2962 = vadd.f32 0.0, %v2961
  %v2963 = vpop.f32.mrb[0].mxu0
  %v2964 = vpop.f32.mrb[0].mxu0
  %v2965 = vadd.f32 0.0, %v2964
  %v2966 = vpop.f32.mrb[0].mxu0
  %2967 = vmatprep.mubr.bf16.mxu0 0
  %2968 = vmatmul.mubr.bf16.gmra.mrb[0].mxu0 %v2884
  %v2969 = vpop.f32.mrb[0].mxu0
  %v2970 = vadd.f32 0.0, %v2969
  %v2971 = vpop.f32.mrb[0].mxu0
  %v2972 = vpop.f32.mrb[0].mxu0
  %v2973 = vadd.f32 0.0, %v2972
  %v2974 = vpop.f32.mrb[0].mxu0
  %2975 = vmatprep.mubr.bf16.mxu0 0
  %2976 = vmatmul.mubr.bf16.gmra.mrb[0].mxu0 %v2887
  %v2977 = vpop.f32.mrb[0].mxu0
  %v2978 = vadd.f32 0.0, %v2977
  %v2979 = vpop.f32.mrb[0].mxu0
  %v2980 = vpop.f32.mrb[0].mxu0
  %v2981 = vadd.f32 0.0, %v2980
  %v2982 = vpop.f32.mrb[0].mxu0
  %2983 = vmatprep.mubr.bf16.mxu0 0
  %2984 = vmatmul.mubr.bf16.gmra.mrb[0].mxu0 %v2890
  %v2985 = vpop.f32.mrb[0].mxu0
  %v2986 = vadd.f32 0.0, %v2985
  %v2987 = vpop.f32.mrb[0].mxu0
  %v2988 = vpop.f32.mrb[0].mxu0
  %v2989 = vadd.f32 0.0, %v2988
  %v2990 = vpop.f32.mrb[0].mxu0
  %2991 = vdwg.mxu0
  %v2992 = vadd.f32 %v2746, %v2930
  %v2993 = vadd.f32 %v2747, %v2933
  %v2994 = vadd.f32 %v2748, %v2938
  %v2995 = vadd.f32 %v2749, %v2941
  %v2996 = vadd.f32 %v2750, %v2946
  %v2997 = vadd.f32 %v2751, %v2949
  %v2998 = vadd.f32 %v2752, %v2954
  %v2999 = vadd.f32 %v2753, %v2957
  %v3000 = vadd.f32 %v2754, %v2962
  %v3001 = vadd.f32 %v2755, %v2965
  %v3002 = vadd.f32 %v2756, %v2970
  %v3003 = vadd.f32 %v2757, %v2973
  %v3004 = vadd.f32 %v2758, %v2978
  %v3005 = vadd.f32 %v2759, %v2981
  %v3006 = vadd.f32 %v2760, %v2986
  %v3007 = vadd.f32 %v2761, %v2989
  %v3008 = vpack.c.bf16 %v2993, %v2992
  %v3009 = vpack.c.bf16 %v2995, %v2994
  %v3010 = vpack.c.bf16 %v2997, %v2996
  %v3011 = vpack.c.bf16 %v2999, %v2998
  %v3012 = vpack.c.bf16 %v3001, %v3000
  %v3013 = vpack.c.bf16 %v3003, %v3002
  %v3014 = vpack.c.bf16 %v3005, %v3004
  %v3015 = vpack.c.bf16 %v3007, %v3006
  %v3024 = vunpack.c.l.b16 %v3008
  %v3025 = vunpack.c.h.b16 %v3008
  %v3026 = vunpack.c.l.b16 %v3009
  %v3027 = vunpack.c.h.b16 %v3009
  %v3028 = vunpack.c.l.b16 %v3010
  %v3029 = vunpack.c.h.b16 %v3010
  %v3030 = vunpack.c.l.b16 %v3011
  %v3031 = vunpack.c.h.b16 %v3011
  %v3032 = vunpack.c.l.b16 %v3012
  %v3033 = vunpack.c.h.b16 %v3012
  %v3034 = vunpack.c.l.b16 %v3013
  %v3035 = vunpack.c.h.b16 %v3013
  %v3036 = vunpack.c.l.b16 %v3014
  %v3037 = vunpack.c.h.b16 %v3014
  %v3038 = vunpack.c.l.b16 %v3015
  %v3039 = vunpack.c.h.b16 %v3015
  %v3040 = vpack.c.b16 %v3024, %v3024
  %v3041 = vpack.c.b16 %v3025, %v3025
  %v3042 = vpack.c.b16 %v3026, %v3026
  %v3043 = vpack.c.b16 %v3027, %v3027
  %v3044 = vpack.c.b16 %v3028, %v3028
  %v3045 = vpack.c.b16 %v3029, %v3029
  %v3046 = vpack.c.b16 %v3030, %v3030
  %v3047 = vpack.c.b16 %v3031, %v3031
  %v3048 = vpack.c.b16 %v3032, %v3032
  %v3049 = vpack.c.b16 %v3033, %v3033
  %v3050 = vpack.c.b16 %v3034, %v3034
  %v3051 = vpack.c.b16 %v3035, %v3035
  %v3052 = vpack.c.b16 %v3036, %v3036
  %v3053 = vpack.c.b16 %v3037, %v3037
  %v3054 = vpack.c.b16 %v3038, %v3038
  %v3055 = vpack.c.b16 %v3039, %v3039
  %3072 = vst [vmem:[%s49] sm:$0xf] %v3040
  %3073 = vst [vmem:[%s49 + $0x4] sm:$0xf] %v3041
  %3074 = vst [vmem:[%s49 + $0x8] sm:$0xf] %v3042
  %3075 = vst [vmem:[%s49 + $0xc] sm:$0xf] %v3043
  %3076 = vst [vmem:[%s49 + $0x10] sm:$0xf] %v3044
  %3077 = vst [vmem:[%s49 + $0x14] sm:$0xf] %v3045
  %3078 = vst [vmem:[%s49 + $0x18] sm:$0xf] %v3046
  %3079 = vst [vmem:[%s49 + $0x1c] sm:$0xf] %v3047
  %3080 = vst [vmem:[%s49 + $0x20] sm:$0xf] %v3048
  %3081 = vst [vmem:[%s49 + $0x24] sm:$0xf] %v3049
  %3082 = vst [vmem:[%s49 + $0x28] sm:$0xf] %v3050
  %3083 = vst [vmem:[%s49 + $0x2c] sm:$0xf] %v3051
  %3084 = vst [vmem:[%s49 + $0x30] sm:$0xf] %v3052
  %3085 = vst [vmem:[%s49 + $0x34] sm:$0xf] %v3053
  %3086 = vst [vmem:[%s49 + $0x38] sm:$0xf] %v3054
  %3087 = vst [vmem:[%s49 + $0x3c] sm:$0xf] %v3055
  %v3088 = vld [vmem:[%s3] sm:$0x1]
  %v3089 = vadd.f32 %v2992, %v2993
  %v3090 = vadd.f32 %v3089, %v2994
  %v3091 = vadd.f32 %v3090, %v2995
  %v3092 = vadd.f32 %v3091, %v2996
  %v3093 = vadd.f32 %v3092, %v2997
  %v3094 = vadd.f32 %v3093, %v2998
  %v3095 = vadd.f32 %v3094, %v2999
  %v3096 = vadd.f32 %v3095, %v3000
  %v3097 = vadd.f32 %v3096, %v3001
  %v3098 = vadd.f32 %v3097, %v3002
  %v3099 = vadd.f32 %v3098, %v3003
  %v3100 = vadd.f32 %v3099, %v3004
  %v3101 = vadd.f32 %v3100, %v3005
  %v3102 = vadd.f32 %v3101, %v3006
  %v3103 = vadd.f32 %v3102, %v3007
  %v3104 = vrot.slane %v3103, 4
  %v3105 = vadd.f32 %v3103, %v3104
  %v3106 = vrot.slane %v3105, 2
  %v3107 = vadd.f32 %v3105, %v3106
  %v3108 = vrot.slane %v3107, 1
  %v3109 = vadd.f32 %v3107, %v3108
  %v3110 = vadd.f32 %v3088, %v3109
  %3111 = vst [vmem:[%s3] sm:$0x1] %v3110
  %v3112 = vld [vmem:[%s3 + $0x1] sm:$0x1]
  %v3113 = vmul.f32 %v2992, %v2992
  %v3114 = vmul.f32 %v2993, %v2993
  %v3115 = vmul.f32 %v2994, %v2994
  %v3116 = vmul.f32 %v2995, %v2995
  %v3117 = vmul.f32 %v2996, %v2996
  %v3118 = vmul.f32 %v2997, %v2997
  %v3119 = vmul.f32 %v2998, %v2998
  %v3120 = vmul.f32 %v2999, %v2999
  %v3121 = vmul.f32 %v3000, %v3000
  %v3122 = vmul.f32 %v3001, %v3001
  %v3123 = vmul.f32 %v3002, %v3002
  %v3124 = vmul.f32 %v3003, %v3003
  %v3125 = vmul.f32 %v3004, %v3004
  %v3126 = vmul.f32 %v3005, %v3005
  %v3127 = vmul.f32 %v3006, %v3006
  %v3128 = vmul.f32 %v3007, %v3007
  %v3129 = vadd.f32 %v3113, %v3114
  %v3130 = vadd.f32 %v3129, %v3115
  %v3131 = vadd.f32 %v3130, %v3116
  %v3132 = vadd.f32 %v3131, %v3117
  %v3133 = vadd.f32 %v3132, %v3118
  %v3134 = vadd.f32 %v3133, %v3119
  %v3135 = vadd.f32 %v3134, %v3120
  %v3136 = vadd.f32 %v3135, %v3121
  %v3137 = vadd.f32 %v3136, %v3122
  %v3138 = vadd.f32 %v3137, %v3123
  %v3139 = vadd.f32 %v3138, %v3124
  %v3140 = vadd.f32 %v3139, %v3125
  %v3141 = vadd.f32 %v3140, %v3126
  %v3142 = vadd.f32 %v3141, %v3127
  %v3143 = vadd.f32 %v3142, %v3128
  %v3144 = vrot.slane %v3143, 4
  %v3145 = vadd.f32 %v3143, %v3144
  %v3146 = vrot.slane %v3145, 2
  %v3147 = vadd.f32 %v3145, %v3146
  %v3148 = vrot.slane %v3147, 1
  %v3149 = vadd.f32 %v3147, %v3148
  %v3150 = vadd.f32 %v3112, %v3149
  %3151 = vst [vmem:[%s3 + $0x1] sm:$0x1] %v3150
  %s3152 = sadd.s32 0, 0
  %s3153 = smul.u32 16, %s3152
  %p3154 = scmp.lt.s32.totalorder %s3153, 15
  %s3155 = scalar_select %p3154, %s3153, 15
  %s3156 = smul.addr %s3155, 4
  %s3157 = scalar_lea.vmem %s2, %s3156
  // Predicated region
  $region14: #{downsample.2} parent=0 // pred_check
    _
  $region15: #{downsample.2} parent=0 // pred_check_branch
    %3159 = sbr.rel (0) target = $region17
  $region16: #{downsample.2} parent=0 // pred_region
    %s3160 = sadd.s32 0, 0
    %s3161 = smul.u32 16, %s3160
  $region17: #{downsample.2} parent=0 // pred_fallthru
    _
  // Predicated region
  $region18: #{downsample.2} parent=0 // pred_check
    _
  $region19: #{downsample.2} parent=0 // pred_check_branch
    %3163 = sbr.rel (0) target = $region21
  $region20: #{downsample.2} parent=0 // pred_region
    _
  $region21: #{downsample.2} parent=0 // pred_fallthru
    _
  // Predicated region
  $region22: #{downsample.2} parent=0 // pred_check
    _
  $region23: #{downsample.2} parent=0 // pred_check_branch
    %3165 = sbr.rel (0) target = $region25
  $region24: #{downsample.2} parent=0 // pred_region
    %s3166 = sadd.s32 0, 0
    %s3167 = smul.u32 16, %s3166
    %p3168 = scmp.lt.s32.totalorder %s3167, 15
    %s3169 = scalar_select %p3168, %s3167, 15
    %s3170 = smul.addr %s3169, 4
    %s3171 = scalar_lea.vmem %s2, %s3170
  $region25: #{downsample.2} parent=0 // pred_fallthru
    _
  // Predicated region
  $region26: #{downsample.2} parent=0 // pred_check
    _
  $region27: #{downsample.2} parent=0 // pred_check_branch
    %3173 = sbr.rel (0) target = $region29
  $region28: #{downsample.2} parent=0 // pred_region
    _
  $region29: #{downsample.2} parent=0 // pred_fallthru
    _

</llo_original>
